<compile_context>
chip_gen: v7x
topology: tpu7x:2x2x1
jax: 0.10.0
libtpu: 0.0.40
codegen_flags: <defaults>
</compile_context>

<pallas_src>
import jax
import jax.numpy as jnp
from jax.experimental import pallas as pl
from jax.experimental.pallas import tpu as pltpu

EPS = 1e-5
MATMUL_DTYPE = jnp.bfloat16      # MXU operand dtype (accumulation stays f32)


# ----------------------------------------------------------------------------
# Kernel 1: grid-tiled per-channel partial sums for BatchNorm (finished in JAX)
# ----------------------------------------------------------------------------
def _stats_kernel(x_ref, sum_ref, sq_ref):
    x = x_ref[0]                                       # (H, W*C) f32
    sum_ref[0] = jnp.sum(x, axis=0, keepdims=True)     # lane-dense (1, W*C)
    sq_ref[0] = jnp.sum(x * x, axis=0, keepdims=True)


def _finish_stats(psum, psq, c, cnt):
    s = psum.reshape(-1, c).sum(axis=0)
    sq = psq.reshape(-1, c).sum(axis=0)
    mean = s / cnt
    # Single-pass E[x^2]-E[x]^2, biased (PyTorch training-mode BN). Fine at these
    # sizes; use block-wise two-pass for very large N*H*W.
    var = sq / cnt - mean * mean
    return mean, jax.lax.rsqrt(var + EPS)


def _batch_stats(xf, c):
    """xf: (N, H, W*C) f32 -> per-channel (mean, invstd), each (C,)."""
    n, h, wc = xf.shape
    psum, psq = pl.pallas_call(
        _stats_kernel,
        grid=(n,),
        in_specs=[pl.BlockSpec((1, h, wc), lambda i: (i, 0, 0))],
        out_specs=(pl.BlockSpec((1, 1, wc), lambda i: (i, 0, 0)),
                   pl.BlockSpec((1, 1, wc), lambda i: (i, 0, 0))),
        out_shape=(jax.ShapeDtypeStruct((n, 1, wc), jnp.float32),
                   jax.ShapeDtypeStruct((n, 1, wc), jnp.float32)),
        compiler_params=pltpu.CompilerParams(dimension_semantics=("parallel",)),
    )(xf)
    return _finish_stats(psum, psq, c, n * h * (wc // c))


# ----------------------------------------------------------------------------
# Weight / BN-parameter prepacking (host-side JAX, done once per forward)
# ----------------------------------------------------------------------------
def _banded_conv_weight(k, w_dim):
    """k: (3, 3, Cin, Cout) f32 -> (3, W*Cin, W*Cout) banded bf16 weights.

    band[dy][(w+dx-1)*Cin + ci, w*Cout + co] = k[dy, dx, ci, co]; rows outside
    [0, W*Cin) are dropped, which implements SAME zero padding along W."""
    bands = []
    for dy in range(3):
        b = 0.0
        for dx in range(3):
            eye = jnp.eye(w_dim, w_dim, k=-(dx - 1), dtype=jnp.float32)
            b = b + jnp.kron(eye, k[dy, dx])
        bands.append(b)
    return jnp.stack(bands).astype(MATMUL_DTYPE)


def _fold_bn_tiled(gamma, beta, mean, invstd, w_dim):
    """Fold BN into scale/shift and tile to the lane-flattened (1, W*C) layout."""
    scale = gamma * invstd
    shift = beta - mean * scale
    return jnp.tile(scale, w_dim)[None, :], jnp.tile(shift, w_dim)[None, :]


# ----------------------------------------------------------------------------
# Kernel 2: fused BN -> ReLU -> Conv3x3 (SAME) [+ residual] + BN-stat epilogue
# ----------------------------------------------------------------------------
def _make_bn_relu_conv_kernel(h_dim, wcin, wcout, add_residual):
    def kernel(*refs):
        if add_residual:
            (x_ref, scale_ref, shift_ref, w_ref, b_ref, res_ref,
             o_ref, sum_ref, sq_ref, pad_ref) = refs
        else:
            (x_ref, scale_ref, shift_ref, w_ref, b_ref,
             o_ref, sum_ref, sq_ref, pad_ref) = refs
            res_ref = None

        # BatchNorm (pre-folded scale/shift) + ReLU on the unpadded block, f32.
        y = jnp.maximum(x_ref[0] * scale_ref[...] + shift_ref[...], 0.0)

        # Row-padded activation scratch. Halo rows are re-zeroed every step
        # (2 tiny stores) instead of pl.when(pid == 0) so there is no carried
        # scratch state and megacore ("parallel") grid sharding stays correct.
        zrow = jnp.zeros((1, wcin), jnp.float32)
        pad_ref[0:1, :] = zrow
        pad_ref[h_dim + 1:h_dim + 2, :] = zrow
        pad_ref[1:h_dim + 1, :] = y

        # 3x3 conv = 3 row-shifted matmuls against banded (W*Cin, W*Cout) weights:
        # bf16 operands, f32 accumulation, result already in the lane-dense
        # (H, W*Cout) output layout (no im2col, no masked stores).
        acc = jnp.zeros((h_dim, wcout), jnp.float32)
        for dy in range(3):
            acc = acc + jnp.dot(
                pad_ref[dy:dy + h_dim, :].astype(MATMUL_DTYPE),
                w_ref[dy],
                preferred_element_type=jnp.float32)

        out = acc + b_ref[...]                 # bias once, at the end
        if add_residual:
            out = out + res_ref[0]
        o_ref[0] = out.astype(o_ref.dtype)

        # Per-image partial sums for the *next* BatchNorm (finished in JAX), so
        # this activation never needs a second HBM pass for its statistics.
        sum_ref[0] = jnp.sum(out, axis=0, keepdims=True)
        sq_ref[0] = jnp.sum(out * out, axis=0, keepdims=True)

    return kernel


def _bn_relu_conv(xf, scale_t, shift_t, w_banded, bias_t, residual=None):
    """xf: (N, H, W*Cin) f32; scale/shift: (1, W*Cin); w_banded: (3, W*Cin, W*Cout)
    bf16; bias_t: (1, W*Cout); residual: (N, H, W*Cout) or None.
    Returns (out (N,H,W*Cout), per-image sums (N,1,W*Cout), sums-of-squares)."""
    n, h, wcin = xf.shape
    wcout = w_banded.shape[-1]
    add_res = residual is not None

    in_specs = [
        pl.BlockSpec((1, h, wcin), lambda i: (i, 0, 0)),
        pl.BlockSpec((1, wcin), lambda i: (0, 0)),
        pl.BlockSpec((1, wcin), lambda i: (0, 0)),
        pl.BlockSpec((3, wcin, wcout), lambda i: (0, 0, 0)),
        pl.BlockSpec((1, wcout), lambda i: (0, 0)),
    ]
    args = [xf, scale_t, shift_t, w_banded, bias_t]
    if add_res:
        in_specs.append(pl.BlockSpec((1, h, wcout), lambda i: (i, 0, 0)))
        args.append(residual)

    return pl.pallas_call(
        _make_bn_relu_conv_kernel(h, wcin, wcout, add_res),
        grid=(n,),
        in_specs=in_specs,
        out_specs=(pl.BlockSpec((1, h, wcout), lambda i: (i, 0, 0)),
                   pl.BlockSpec((1, 1, wcout), lambda i: (i, 0, 0)),
                   pl.BlockSpec((1, 1, wcout), lambda i: (i, 0, 0))),
        out_shape=(jax.ShapeDtypeStruct((n, h, wcout), jnp.float32),
                   jax.ShapeDtypeStruct((n, 1, wcout), jnp.float32),
                   jax.ShapeDtypeStruct((n, 1, wcout), jnp.float32)),
        scratch_shapes=[pltpu.VMEM((h + 2, wcin), jnp.float32)],
        compiler_params=pltpu.CompilerParams(dimension_semantics=("parallel",)),
    )(*args)


# ----------------------------------------------------------------------------
# Kernel 3: ConvTranspose2d(kernel=2, stride=2) as one block-diagonal matmul
# ----------------------------------------------------------------------------
def _upconv_kernel(x_ref, w_ref, b_ref, o_ref):
    x = x_ref[0].astype(MATMUL_DTYPE)              # (H1, W1*Cin)
    o_ref[0] = jnp.dot(x, w_ref[...], preferred_element_type=jnp.float32) + b_ref[...]


def _conv_transpose_2x2(x1, w_up, b_up):
    """x1: (N, H1, W1, Cin) NHWC; w_up: (Cin, Cout, 2, 2) (PyTorch layout).
    Returns (N, 2*H1, 2*W1, Cout)."""
    n, h1, w1, cin = x1.shape
    cout = w_up.shape[1]
    x1f = x1.reshape(n, h1, w1 * cin)
    # Per-pixel matrix m[ci, (ky*2+kx)*Cout + co] = w_up[ci, co, ky, kx],
    # block-diagonal over W1 so one lane-dense matmul handles a whole image row.
    m = jnp.transpose(w_up, (0, 2, 3, 1)).reshape(cin, 4 * cout)
    big = jnp.kron(jnp.eye(w1, dtype=jnp.float32), m).astype(MATMUL_DTYPE)
    bias_t = jnp.tile(b_up, w1 * 4)[None, :]
    wcout = w1 * 4 * cout

    outf = pl.pallas_call(
        _upconv_kernel,
        grid=(n,),
        in_specs=[pl.BlockSpec((1, h1, w1 * cin), lambda i: (i, 0, 0)),
                  pl.BlockSpec((w1 * cin, wcout), lambda i: (0, 0)),
                  pl.BlockSpec((1, wcout), lambda i: (0, 0))],
        out_specs=pl.BlockSpec((1, h1, wcout), lambda i: (i, 0, 0)),
        out_shape=jax.ShapeDtypeStruct((n, h1, wcout), jnp.float32),
        compiler_params=pltpu.CompilerParams(dimension_semantics=("parallel",)),
    )(x1f, big, bias_t)
    # (N, H1, W1, ky, kx, Cout) -> (N, 2*H1, 2*W1, Cout)
    out = outf.reshape(n, h1, w1, 2, 2, cout).transpose(0, 1, 3, 2, 4, 5)
    return out.reshape(n, 2 * h1, 2 * w1, cout)


# ----------------------------------------------------------------------------
# Forward pass
# ----------------------------------------------------------------------------
def _conv_residual(x, p):
    """x: (N, H, W, Cin) NHWC -> (N, H, W, Cout)."""
    n, h, w, cin = x.shape
    cout = p['w1'].shape[-1]
    xf = x.reshape(n, h, w * cin)

    bw1 = _banded_conv_weight(p['w1'], w)
    bw2 = _banded_conv_weight(p['w2'], w)
    bws = _banded_conv_weight(p['ws'], w)
    b1 = jnp.tile(p['b1'], w)[None, :]
    b2 = jnp.tile(p['b2'], w)[None, :]
    bs = jnp.tile(p['bs'], w)[None, :]

    mean_x, invstd_x = _batch_stats(xf, cin)
    sc1, sh1 = _fold_bn_tiled(p['g_bn1'], p['b_bn1'], mean_x, invstd_x, w)
    scs, shs = _fold_bn_tiled(p['g_bns'], p['b_bns'], mean_x, invstd_x, w)

    hmid, hsum, hsq = _bn_relu_conv(xf, sc1, sh1, bw1, b1)       # double_conv conv #1
    res, _, _ = _bn_relu_conv(xf, scs, shs, bws, bs)             # shortcut
    mean_h, invstd_h = _finish_stats(hsum, hsq, cout, n * h * w) # fused stats of h
    sc2, sh2 = _fold_bn_tiled(p['g_bn2'], p['b_bn2'], mean_h, invstd_h, w)
    out, _, _ = _bn_relu_conv(hmid, sc2, sh2, bw2, b2, residual=res)
    return out.reshape(n, h, w, cout)


def de_conv_forward(x1_nchw, x2_nchw, p):
    """de_conv.forward(x1, x2): up(x1); cat([x2, up], C); Conv_residual."""
    x1 = jnp.transpose(x1_nchw, (0, 2, 3, 1)).astype(jnp.float32)   # NCHW -> NHWC
    x2 = jnp.transpose(x2_nchw, (0, 2, 3, 1)).astype(jnp.float32)
    up = _conv_transpose_2x2(x1, p['w_up'], p['b_up'])
    xcat = jnp.concatenate([x2, up], axis=-1)        # torch.cat([x2, x1], dim=1)
    out = _conv_residual(xcat, p)
    return jnp.transpose(out, (0, 3, 1, 2))          # NHWC -> NCHW


def init_params(key, in_channels, out_channels, up_in_channels):
    ks = jax.random.split(key, 14)
    r = lambda k, shape: 0.1 * jax.random.normal(k, shape, jnp.float32)
    return dict(
        # ConvTranspose2d(in, out, k=2, s=2): weight (Cin, Cout, kH, kW)
        w_up=r(ks[0], (in_channels, out_channels, 2, 2)),
        b_up=r(ks[1], (out_channels,)),
        # Conv_residual convs, HWIO layout (3, 3, Cin, Cout)
        w1=r(ks[2], (3, 3, up_in_channels, out_channels)), b1=r(ks[3], (out_channels,)),
        w2=r(ks[4], (3, 3, out_channels, out_channels)),   b2=r(ks[5], (out_channels,)),
        ws=r(ks[6], (3, 3, up_in_channels, out_channels)), bs=r(ks[7], (out_channels,)),
        g_bn1=1.0 + r(ks[8], (up_in_channels,)),  b_bn1=r(ks[9], (up_in_channels,)),
        g_bn2=1.0 + r(ks[10], (out_channels,)),   b_bn2=r(ks[11], (out_channels,)),
        g_bns=1.0 + r(ks[12], (up_in_channels,)), b_bns=r(ks[13], (up_in_channels,)),
    )


# ----------------------------------------------------------------------------
# Pure-JAX reference for verification
# ----------------------------------------------------------------------------
def _reference(x1_nchw, x2_nchw, p, matmul_dtype=jnp.float32):
    """matmul_dtype rounds matmul operands; set to MATMUL_DTYPE to mirror the
    kernel's bf16 MXU operands (f32 accumulation) exactly."""
    f32 = jnp.float32
    hi = jax.lax.Precision.HIGHEST
    rnd = lambda a: a.astype(matmul_dtype).astype(f32)

    x1 = jnp.transpose(x1_nchw, (0, 2, 3, 1)).astype(f32)
    x2 = jnp.transpose(x2_nchw, (0, 2, 3, 1)).astype(f32)
    up = jnp.einsum('nhwc,cokl->nhkwlo', rnd(x1), rnd(p['w_up']), precision=hi)
    n, h1, _, w1, _, cup = up.shape
    up = up.reshape(n, 2 * h1, 2 * w1, cup) + p['b_up']
    x = jnp.concatenate([x2, up], axis=-1)

    def bn_relu(t, g, b):
        m = jnp.mean(t, axis=(0, 1, 2))
        v = jnp.mean((t - m) ** 2, axis=(0, 1, 2))
        return jnp.maximum((t - m) / jnp.sqrt(v + EPS) * g + b, 0.0)

    def conv(t, wgt, b):
        return jax.lax.conv_general_dilated(
            rnd(t), rnd(wgt), (1, 1), 'SAME',
            dimension_numbers=('NHWC', 'HWIO', 'NHWC'), precision=hi) + b

    h = conv(bn_relu(x, p['g_bn1'], p['b_bn1']), p['w1'], p['b1'])
    dc = conv(bn_relu(h, p['g_bn2'], p['b_bn2']), p['w2'], p['b2'])
    sc = conv(bn_relu(x, p['g_bns'], p['b_bns']), p['ws'], p['bs'])
    return jnp.transpose(dc + sc, (0, 3, 1, 2))


if __name__ == "__main__":
    key = jax.random.PRNGKey(0)
    k1, k2, kp = jax.random.split(key, 3)

    # de_conv(in_channels=4, out_channels=8, up_in_channels=16):
    #   x1 (N,4,8,8) --up--> (N,8,16,16); cat with x2 (N,8,16,16) -> 16 channels.
    N, IN_CH, OUT_CH, UP_IN_CH, H1, W1 = 2, 4, 8, 16, 8, 8
    x1 = jax.random.normal(k1, (N, IN_CH, H1, W1), jnp.float32)
    x2 = jax.random.normal(k2, (N, UP_IN_CH - OUT_CH, 2 * H1, 2 * W1), jnp.float32)
    params = init_params(kp, IN_CH, OUT_CH, UP_IN_CH)

    fwd = jax.jit(de_conv_forward)
    out = jax.block_until_ready(fwd(x1, x2, params))
    assert out.shape == (N, OUT_CH, 2 * H1, 2 * W1), out.shape

    # Tight check vs. a reference whose matmul operands are rounded exactly the
    # way the kernel feeds the MXU (bf16 operands, f32 accumulation).
    ref_matched = _reference(x1, x2, params, matmul_dtype=MATMUL_DTYPE)
    err_matched = float(jnp.max(jnp.abs(out - ref_matched)))
    assert err_matched < 5e-3, f"matched-precision max abs error {err_matched}"

    # Loose sanity check vs. a pure-f32 reference; the gap is just bf16 operand
    # rounding accumulated through the three stacked 3x3 convs.
    ref_f32 = _reference(x1, x2, params, matmul_dtype=jnp.float32)
    err_f32 = float(jnp.max(jnp.abs(out - ref_f32)))
    assert err_f32 < 5e-2 * (1.0 + float(jnp.max(jnp.abs(ref_f32)))), \
        f"f32 max abs error {err_f32}"

    print("KERNEL_OK")
</pallas_src>

<mosaic_0001>
module attributes {stable_mosaic.version = 11 : i64} {
  func.func @_upconv_kernel(%arg0: i32, %arg1: memref<1x8x32xf32, #tpu.memory_space<vmem>>, %arg2: memref<32x256xbf16, #tpu.memory_space<vmem>>, %arg3: memref<1x256xf32, #tpu.memory_space<vmem>>, %arg4: memref<1x8x256xf32, #tpu.memory_space<vmem>>) attributes {dimension_semantics = [#tpu.dimension_semantics<parallel>], iteration_bounds = array<i64: 2>, scalar_prefetch = 0 : i64, scratch_operands = 0 : i64, tpu.core_type = #tpu.core_type<tc>, window_params = [{transform_indices = @transform_0, window_bounds = array<i64: 1, 8, 32>}, {pipeline_mode = #tpu.pipeline_mode<synchronous>, transform_indices = @transform_1, window_bounds = array<i64: 32, 256>}, {pipeline_mode = #tpu.pipeline_mode<synchronous>, transform_indices = @transform_2, window_bounds = array<i64: 1, 256>}, {transform_indices = @transform_3, window_bounds = array<i64: 1, 8, 256>}]} {
    %c0 = arith.constant 0 : index
    %c0_0 = arith.constant 0 : index
    %c0_1 = arith.constant 0 : index
    %0 = vector.load %arg1[%c0, %c0_0, %c0_1] : memref<1x8x32xf32, #tpu.memory_space<vmem>>, vector<1x8x32xf32>
    %1 = vector.shape_cast %0 : vector<1x8x32xf32> to vector<8x32xf32>
    %2 = arith.truncf %1 : vector<8x32xf32> to vector<8x32xbf16>
    %c0_2 = arith.constant 0 : index
    %c0_3 = arith.constant 0 : index
    %3 = vector.load %arg2[%c0_2, %c0_3] : memref<32x256xbf16, #tpu.memory_space<vmem>>, vector<32x256xbf16>
    %cst = arith.constant dense<0.000000e+00> : vector<8x256xf32>
    %4 = tpu.matmul %2, %3, %cst {dimension_numbers = #tpu.dot_dimension_numbers<[1], [0], [0], [1], [0, 0, 1, 1], [], []>} : vector<8x32xbf16>, vector<32x256xbf16>, vector<8x256xf32> -> vector<8x256xf32>
    %c0_4 = arith.constant 0 : index
    %c0_5 = arith.constant 0 : index
    %5 = vector.load %arg3[%c0_4, %c0_5] : memref<1x256xf32, #tpu.memory_space<vmem>>, vector<1x256xf32>
    %6 = vector.broadcast %5 : vector<1x256xf32> to vector<8x256xf32>
    %7 = arith.addf %4, %6 : vector<8x256xf32>
    %c0_6 = arith.constant 0 : index
    %c0_7 = arith.constant 0 : index
    %c0_8 = arith.constant 0 : index
    %8 = vector.load %arg4[%c0_6, %c0_7, %c0_8] : memref<1x8x256xf32, #tpu.memory_space<vmem>>, vector<1x8x256xf32>
    %9 = vector.shape_cast %8 : vector<1x8x256xf32> to vector<8x256xf32>
    %10 = vector.shape_cast %7 : vector<8x256xf32> to vector<1x8x256xf32>
    tpu.vector_store %arg4[%c0_6, %c0_7, %c0_8], %10 {strides = array<i32>} : memref<1x8x256xf32, #tpu.memory_space<vmem>>, vector<1x8x256xf32>,
    return
  }
  func.func @transform_0(%arg0: i32) -> (i32, i32, i32) {
    %c0_i32 = arith.constant 0 : i32
    %c0_i32_0 = arith.constant 0 : i32
    %c0_i32_1 = arith.constant 0 : i32
    return %arg0, %c0_i32, %c0_i32_0 : i32, i32, i32
  }
  func.func @transform_1(%arg0: i32) -> (i32, i32) {
    %c0_i32 = arith.constant 0 : i32
    %c0_i32_0 = arith.constant 0 : i32
    %c0_i32_1 = arith.constant 0 : i32
    return %c0_i32, %c0_i32_0 : i32, i32
  }
  func.func @transform_2(%arg0: i32) -> (i32, i32) {
    %c0_i32 = arith.constant 0 : i32
    %c0_i32_0 = arith.constant 0 : i32
    %c0_i32_1 = arith.constant 0 : i32
    return %c0_i32, %c0_i32_0 : i32, i32
  }
  func.func @transform_3(%arg0: i32) -> (i32, i32, i32) {
    %c0_i32 = arith.constant 0 : i32
    %c0_i32_0 = arith.constant 0 : i32
    %c0_i32_1 = arith.constant 0 : i32
    return %arg0, %c0_i32, %c0_i32_0 : i32, i32, i32
  }
}

module attributes {stable_mosaic.version = 11 : i64} {
  func.func @_stats_kernel(%arg0: i32, %arg1: memref<1x16x256xf32, #tpu.memory_space<vmem>>, %arg2: memref<1x1x256xf32, #tpu.memory_space<vmem>>, %arg3: memref<1x1x256xf32, #tpu.memory_space<vmem>>) attributes {dimension_semantics = [#tpu.dimension_semantics<parallel>], iteration_bounds = array<i64: 2>, scalar_prefetch = 0 : i64, scratch_operands = 0 : i64, tpu.core_type = #tpu.core_type<tc>, window_params = [{transform_indices = @transform_0, window_bounds = array<i64: 1, 16, 256>}, {transform_indices = @transform_1, window_bounds = array<i64: 1, 1, 256>}, {transform_indices = @transform_2, window_bounds = array<i64: 1, 1, 256>}]} {
    %c0 = arith.constant 0 : index
    %c0_0 = arith.constant 0 : index
    %c0_1 = arith.constant 0 : index
    %0 = vector.load %arg1[%c0, %c0_0, %c0_1] : memref<1x16x256xf32, #tpu.memory_space<vmem>>, vector<1x16x256xf32>
    %1 = vector.shape_cast %0 : vector<1x16x256xf32> to vector<16x256xf32>
    %cst = arith.constant dense<0.000000e+00> : vector<256xf32>
    %2 = vector.multi_reduction <add>, %1, %cst [0] : vector<16x256xf32> to vector<256xf32>
    %3 = vector.shape_cast %2 : vector<256xf32> to vector<1x256xf32>
    %c0_2 = arith.constant 0 : index
    %c0_3 = arith.constant 0 : index
    %c0_4 = arith.constant 0 : index
    %4 = vector.load %arg2[%c0_2, %c0_3, %c0_4] : memref<1x1x256xf32, #tpu.memory_space<vmem>>, vector<1x1x256xf32>
    %5 = vector.shape_cast %4 : vector<1x1x256xf32> to vector<1x256xf32>
    %6 = vector.shape_cast %3 : vector<1x256xf32> to vector<1x1x256xf32>
    tpu.vector_store %arg2[%c0_2, %c0_3, %c0_4], %6 {strides = array<i32>} : memref<1x1x256xf32, #tpu.memory_space<vmem>>, vector<1x1x256xf32>,
    %7 = arith.mulf %1, %1 : vector<16x256xf32>
    %cst_5 = arith.constant dense<0.000000e+00> : vector<256xf32>
    %8 = vector.multi_reduction <add>, %7, %cst_5 [0] : vector<16x256xf32> to vector<256xf32>
    %9 = vector.shape_cast %8 : vector<256xf32> to vector<1x256xf32>
    %c0_6 = arith.constant 0 : index
    %c0_7 = arith.constant 0 : index
    %c0_8 = arith.constant 0 : index
    %10 = vector.load %arg3[%c0_6, %c0_7, %c0_8] : memref<1x1x256xf32, #tpu.memory_space<vmem>>, vector<1x1x256xf32>
    %11 = vector.shape_cast %10 : vector<1x1x256xf32> to vector<1x256xf32>
    %12 = vector.shape_cast %9 : vector<1x256xf32> to vector<1x1x256xf32>
    tpu.vector_store %arg3[%c0_6, %c0_7, %c0_8], %12 {strides = array<i32>} : memref<1x1x256xf32, #tpu.memory_space<vmem>>, vector<1x1x256xf32>,
    return
  }
  func.func @transform_0(%arg0: i32) -> (i32, i32, i32) {
    %c0_i32 = arith.constant 0 : i32
    %c0_i32_0 = arith.constant 0 : i32
    %c0_i32_1 = arith.constant 0 : i32
    return %arg0, %c0_i32, %c0_i32_0 : i32, i32, i32
  }
  func.func @transform_1(%arg0: i32) -> (i32, i32, i32) {
    %c0_i32 = arith.constant 0 : i32
    %c0_i32_0 = arith.constant 0 : i32
    %c0_i32_1 = arith.constant 0 : i32
    return %arg0, %c0_i32, %c0_i32_0 : i32, i32, i32
  }
  func.func @transform_2(%arg0: i32) -> (i32, i32, i32) {
    %c0_i32 = arith.constant 0 : i32
    %c0_i32_0 = arith.constant 0 : i32
    %c0_i32_1 = arith.constant 0 : i32
    return %arg0, %c0_i32, %c0_i32_0 : i32, i32, i32
  }
}

module attributes {stable_mosaic.version = 11 : i64} {
  func.func @kernel(%arg0: i32, %arg1: memref<1x16x256xf32, #tpu.memory_space<vmem>>, %arg2: memref<1x256xf32, #tpu.memory_space<vmem>>, %arg3: memref<1x256xf32, #tpu.memory_space<vmem>>, %arg4: memref<3x256x128xbf16, #tpu.memory_space<vmem>>, %arg5: memref<1x128xf32, #tpu.memory_space<vmem>>, %arg6: memref<1x16x128xf32, #tpu.memory_space<vmem>>, %arg7: memref<1x1x128xf32, #tpu.memory_space<vmem>>, %arg8: memref<1x1x128xf32, #tpu.memory_space<vmem>>, %arg9: memref<18x256xf32, #tpu.memory_space<vmem>>) attributes {dimension_semantics = [#tpu.dimension_semantics<parallel>], iteration_bounds = array<i64: 2>, scalar_prefetch = 0 : i64, scratch_operands = 1 : i64, tpu.core_type = #tpu.core_type<tc>, window_params = [{transform_indices = @transform_0, window_bounds = array<i64: 1, 16, 256>}, {pipeline_mode = #tpu.pipeline_mode<synchronous>, transform_indices = @transform_1, window_bounds = array<i64: 1, 256>}, {pipeline_mode = #tpu.pipeline_mode<synchronous>, transform_indices = @transform_2, window_bounds = array<i64: 1, 256>}, {pipeline_mode = #tpu.pipeline_mode<synchronous>, transform_indices = @transform_3, window_bounds = array<i64: 3, 256, 128>}, {pipeline_mode = #tpu.pipeline_mode<synchronous>, transform_indices = @transform_4, window_bounds = array<i64: 1, 128>}, {transform_indices = @transform_5, window_bounds = array<i64: 1, 16, 128>}, {transform_indices = @transform_6, window_bounds = array<i64: 1, 1, 128>}, {transform_indices = @transform_7, window_bounds = array<i64: 1, 1, 128>}]} {
    %c0 = arith.constant 0 : index
    %c0_0 = arith.constant 0 : index
    %c0_1 = arith.constant 0 : index
    %0 = vector.load %arg1[%c0, %c0_0, %c0_1] : memref<1x16x256xf32, #tpu.memory_space<vmem>>, vector<1x16x256xf32>
    %1 = vector.shape_cast %0 : vector<1x16x256xf32> to vector<16x256xf32>
    %c0_2 = arith.constant 0 : index
    %c0_3 = arith.constant 0 : index
    %2 = vector.load %arg2[%c0_2, %c0_3] : memref<1x256xf32, #tpu.memory_space<vmem>>, vector<1x256xf32>
    %3 = vector.broadcast %2 : vector<1x256xf32> to vector<16x256xf32>
    %4 = arith.mulf %1, %3 : vector<16x256xf32>
    %c0_4 = arith.constant 0 : index
    %c0_5 = arith.constant 0 : index
    %5 = vector.load %arg3[%c0_4, %c0_5] : memref<1x256xf32, #tpu.memory_space<vmem>>, vector<1x256xf32>
    %6 = vector.broadcast %5 : vector<1x256xf32> to vector<16x256xf32>
    %7 = arith.addf %4, %6 : vector<16x256xf32>
    %cst = arith.constant 0.000000e+00 : f32
    %8 = vector.broadcast %cst : f32 to vector<16x256xf32>
    %9 = arith.maximumf %7, %8 : vector<16x256xf32>
    %cst_6 = arith.constant 0.000000e+00 : f32
    %10 = vector.broadcast %cst_6 : f32 to vector<1x256xf32>
    %c0_7 = arith.constant 0 : index
    %c0_8 = arith.constant 0 : index
    %11 = vector.load %arg9[%c0_7, %c0_8] : memref<18x256xf32, #tpu.memory_space<vmem>>, vector<1x256xf32>
    tpu.vector_store %arg9[%c0_7, %c0_8], %10 {strides = array<i32>} : memref<18x256xf32, #tpu.memory_space<vmem>>, vector<1x256xf32>,
    %c17 = arith.constant 17 : index
    %c0_9 = arith.constant 0 : index
    %12 = vector.load %arg9[%c17, %c0_9] : memref<18x256xf32, #tpu.memory_space<vmem>>, vector<1x256xf32>
    tpu.vector_store %arg9[%c17, %c0_9], %10 {strides = array<i32>} : memref<18x256xf32, #tpu.memory_space<vmem>>, vector<1x256xf32>,
    %c1 = arith.constant 1 : index
    %c0_10 = arith.constant 0 : index
    %13 = vector.load %arg9[%c1, %c0_10] : memref<18x256xf32, #tpu.memory_space<vmem>>, vector<16x256xf32>
    tpu.vector_store %arg9[%c1, %c0_10], %9 {strides = array<i32>} : memref<18x256xf32, #tpu.memory_space<vmem>>, vector<16x256xf32>,
    %cst_11 = arith.constant 0.000000e+00 : f32
    %14 = vector.broadcast %cst_11 : f32 to vector<16x128xf32>
    %c0_12 = arith.constant 0 : index
    %c0_13 = arith.constant 0 : index
    %15 = vector.load %arg9[%c0_12, %c0_13] : memref<18x256xf32, #tpu.memory_space<vmem>>, vector<16x256xf32>
    %16 = arith.truncf %15 : vector<16x256xf32> to vector<16x256xbf16>
    %c0_14 = arith.constant 0 : index
    %c0_15 = arith.constant 0 : index
    %c0_16 = arith.constant 0 : index
    %17 = vector.load %arg4[%c0_14, %c0_15, %c0_16] : memref<3x256x128xbf16, #tpu.memory_space<vmem>>, vector<1x256x128xbf16>
    %18 = vector.shape_cast %17 : vector<1x256x128xbf16> to vector<256x128xbf16>
    %cst_17 = arith.constant dense<0.000000e+00> : vector<16x128xf32>
    %19 = tpu.matmul %16, %18, %cst_17 {dimension_numbers = #tpu.dot_dimension_numbers<[1], [0], [0], [1], [0, 0, 1, 1], [], []>} : vector<16x256xbf16>, vector<256x128xbf16>, vector<16x128xf32> -> vector<16x128xf32>
    %20 = arith.addf %14, %19 : vector<16x128xf32>
    %c1_18 = arith.constant 1 : index
    %c0_19 = arith.constant 0 : index
    %21 = vector.load %arg9[%c1_18, %c0_19] : memref<18x256xf32, #tpu.memory_space<vmem>>, vector<16x256xf32>
    %22 = arith.truncf %21 : vector<16x256xf32> to vector<16x256xbf16>
    %c1_20 = arith.constant 1 : index
    %c0_21 = arith.constant 0 : index
    %c0_22 = arith.constant 0 : index
    %23 = vector.load %arg4[%c1_20, %c0_21, %c0_22] : memref<3x256x128xbf16, #tpu.memory_space<vmem>>, vector<1x256x128xbf16>
    %24 = vector.shape_cast %23 : vector<1x256x128xbf16> to vector<256x128xbf16>
    %cst_23 = arith.constant dense<0.000000e+00> : vector<16x128xf32>
    %25 = tpu.matmul %22, %24, %cst_23 {dimension_numbers = #tpu.dot_dimension_numbers<[1], [0], [0], [1], [0, 0, 1, 1], [], []>} : vector<16x256xbf16>, vector<256x128xbf16>, vector<16x128xf32> -> vector<16x128xf32>
    %26 = arith.addf %20, %25 : vector<16x128xf32>
    %c2 = arith.constant 2 : index
    %c0_24 = arith.constant 0 : index
    %27 = vector.load %arg9[%c2, %c0_24] : memref<18x256xf32, #tpu.memory_space<vmem>>, vector<16x256xf32>
    %28 = arith.truncf %27 : vector<16x256xf32> to vector<16x256xbf16>
    %c2_25 = arith.constant 2 : index
    %c0_26 = arith.constant 0 : index
    %c0_27 = arith.constant 0 : index
    %29 = vector.load %arg4[%c2_25, %c0_26, %c0_27] : memref<3x256x128xbf16, #tpu.memory_space<vmem>>, vector<1x256x128xbf16>
    %30 = vector.shape_cast %29 : vector<1x256x128xbf16> to vector<256x128xbf16>
    %cst_28 = arith.constant dense<0.000000e+00> : vector<16x128xf32>
    %31 = tpu.matmul %28, %30, %cst_28 {dimension_numbers = #tpu.dot_dimension_numbers<[1], [0], [0], [1], [0, 0, 1, 1], [], []>} : vector<16x256xbf16>, vector<256x128xbf16>, vector<16x128xf32> -> vector<16x128xf32>
    %32 = arith.addf %26, %31 : vector<16x128xf32>
    %c0_29 = arith.constant 0 : index
    %c0_30 = arith.constant 0 : index
    %33 = vector.load %arg5[%c0_29, %c0_30] : memref<1x128xf32, #tpu.memory_space<vmem>>, vector<1x128xf32>
    %34 = vector.broadcast %33 : vector<1x128xf32> to vector<16x128xf32>
    %35 = arith.addf %32, %34 : vector<16x128xf32>
    %c0_31 = arith.constant 0 : index
    %c0_32 = arith.constant 0 : index
    %c0_33 = arith.constant 0 : index
    %36 = vector.load %arg6[%c0_31, %c0_32, %c0_33] : memref<1x16x128xf32, #tpu.memory_space<vmem>>, vector<1x16x128xf32>
    %37 = vector.shape_cast %36 : vector<1x16x128xf32> to vector<16x128xf32>
    %38 = vector.shape_cast %35 : vector<16x128xf32> to vector<1x16x128xf32>
    tpu.vector_store %arg6[%c0_31, %c0_32, %c0_33], %38 {strides = array<i32>} : memref<1x16x128xf32, #tpu.memory_space<vmem>>, vector<1x16x128xf32>,
    %cst_34 = arith.constant dense<0.000000e+00> : vector<128xf32>
    %39 = vector.multi_reduction <add>, %35, %cst_34 [0] : vector<16x128xf32> to vector<128xf32>
    %40 = vector.shape_cast %39 : vector<128xf32> to vector<1x128xf32>
    %c0_35 = arith.constant 0 : index
    %c0_36 = arith.constant 0 : index
    %c0_37 = arith.constant 0 : index
    %41 = vector.load %arg7[%c0_35, %c0_36, %c0_37] : memref<1x1x128xf32, #tpu.memory_space<vmem>>, vector<1x1x128xf32>
    %42 = vector.shape_cast %41 : vector<1x1x128xf32> to vector<1x128xf32>
    %43 = vector.shape_cast %40 : vector<1x128xf32> to vector<1x1x128xf32>
    tpu.vector_store %arg7[%c0_35, %c0_36, %c0_37], %43 {strides = array<i32>} : memref<1x1x128xf32, #tpu.memory_space<vmem>>, vector<1x1x128xf32>,
    %44 = arith.mulf %35, %35 : vector<16x128xf32>
    %cst_38 = arith.constant dense<0.000000e+00> : vector<128xf32>
    %45 = vector.multi_reduction <add>, %44, %cst_38 [0] : vector<16x128xf32> to vector<128xf32>
    %46 = vector.shape_cast %45 : vector<128xf32> to vector<1x128xf32>
    %c0_39 = arith.constant 0 : index
    %c0_40 = arith.constant 0 : index
    %c0_41 = arith.constant 0 : index
    %47 = vector.load %arg8[%c0_39, %c0_40, %c0_41] : memref<1x1x128xf32, #tpu.memory_space<vmem>>, vector<1x1x128xf32>
    %48 = vector.shape_cast %47 : vector<1x1x128xf32> to vector<1x128xf32>
    %49 = vector.shape_cast %46 : vector<1x128xf32> to vector<1x1x128xf32>
    tpu.vector_store %arg8[%c0_39, %c0_40, %c0_41], %49 {strides = array<i32>} : memref<1x1x128xf32, #tpu.memory_space<vmem>>, vector<1x1x128xf32>,
    return
  }
  func.func @transform_0(%arg0: i32) -> (i32, i32, i32) {
    %c0_i32 = arith.constant 0 : i32
    %c0_i32_0 = arith.constant 0 : i32
    %c0_i32_1 = arith.constant 0 : i32
    return %arg0, %c0_i32, %c0_i32_0 : i32, i32, i32
  }
  func.func @transform_1(%arg0: i32) -> (i32, i32) {
    %c0_i32 = arith.constant 0 : i32
    %c0_i32_0 = arith.constant 0 : i32
    %c0_i32_1 = arith.constant 0 : i32
    return %c0_i32, %c0_i32_0 : i32, i32
  }
  func.func @transform_2(%arg0: i32) -> (i32, i32) {
    %c0_i32 = arith.constant 0 : i32
    %c0_i32_0 = arith.constant 0 : i32
    %c0_i32_1 = arith.constant 0 : i32
    return %c0_i32, %c0_i32_0 : i32, i32
  }
  func.func @transform_3(%arg0: i32) -> (i32, i32, i32) {
    %c0_i32 = arith.constant 0 : i32
    %c0_i32_0 = arith.constant 0 : i32
    %c0_i32_1 = arith.constant 0 : i32
    %c0_i32_2 = arith.constant 0 : i32
    return %c0_i32, %c0_i32_0, %c0_i32_1 : i32, i32, i32
  }
  func.func @transform_4(%arg0: i32) -> (i32, i32) {
    %c0_i32 = arith.constant 0 : i32
    %c0_i32_0 = arith.constant 0 : i32
    %c0_i32_1 = arith.constant 0 : i32
    return %c0_i32, %c0_i32_0 : i32, i32
  }
  func.func @transform_5(%arg0: i32) -> (i32, i32, i32) {
    %c0_i32 = arith.constant 0 : i32
    %c0_i32_0 = arith.constant 0 : i32
    %c0_i32_1 = arith.constant 0 : i32
    return %arg0, %c0_i32, %c0_i32_0 : i32, i32, i32
  }
  func.func @transform_6(%arg0: i32) -> (i32, i32, i32) {
    %c0_i32 = arith.constant 0 : i32
    %c0_i32_0 = arith.constant 0 : i32
    %c0_i32_1 = arith.constant 0 : i32
    return %arg0, %c0_i32, %c0_i32_0 : i32, i32, i32
  }
  func.func @transform_7(%arg0: i32) -> (i32, i32, i32) {
    %c0_i32 = arith.constant 0 : i32
    %c0_i32_0 = arith.constant 0 : i32
    %c0_i32_1 = arith.constant 0 : i32
    return %arg0, %c0_i32, %c0_i32_0 : i32, i32, i32
  }
}

module attributes {stable_mosaic.version = 11 : i64} {
  func.func @kernel(%arg0: i32, %arg1: memref<1x16x256xf32, #tpu.memory_space<vmem>>, %arg2: memref<1x256xf32, #tpu.memory_space<vmem>>, %arg3: memref<1x256xf32, #tpu.memory_space<vmem>>, %arg4: memref<3x256x128xbf16, #tpu.memory_space<vmem>>, %arg5: memref<1x128xf32, #tpu.memory_space<vmem>>, %arg6: memref<1x16x128xf32, #tpu.memory_space<vmem>>, %arg7: memref<1x1x128xf32, #tpu.memory_space<vmem>>, %arg8: memref<1x1x128xf32, #tpu.memory_space<vmem>>, %arg9: memref<18x256xf32, #tpu.memory_space<vmem>>) attributes {dimension_semantics = [#tpu.dimension_semantics<parallel>], iteration_bounds = array<i64: 2>, scalar_prefetch = 0 : i64, scratch_operands = 1 : i64, tpu.core_type = #tpu.core_type<tc>, window_params = [{transform_indices = @transform_0, window_bounds = array<i64: 1, 16, 256>}, {pipeline_mode = #tpu.pipeline_mode<synchronous>, transform_indices = @transform_1, window_bounds = array<i64: 1, 256>}, {pipeline_mode = #tpu.pipeline_mode<synchronous>, transform_indices = @transform_2, window_bounds = array<i64: 1, 256>}, {pipeline_mode = #tpu.pipeline_mode<synchronous>, transform_indices = @transform_3, window_bounds = array<i64: 3, 256, 128>}, {pipeline_mode = #tpu.pipeline_mode<synchronous>, transform_indices = @transform_4, window_bounds = array<i64: 1, 128>}, {transform_indices = @transform_5, window_bounds = array<i64: 1, 16, 128>}, {transform_indices = @transform_6, window_bounds = array<i64: 1, 1, 128>}, {transform_indices = @transform_7, window_bounds = array<i64: 1, 1, 128>}]} {
    %c0 = arith.constant 0 : index
    %c0_0 = arith.constant 0 : index
    %c0_1 = arith.constant 0 : index
    %0 = vector.load %arg1[%c0, %c0_0, %c0_1] : memref<1x16x256xf32, #tpu.memory_space<vmem>>, vector<1x16x256xf32>
    %1 = vector.shape_cast %0 : vector<1x16x256xf32> to vector<16x256xf32>
    %c0_2 = arith.constant 0 : index
    %c0_3 = arith.constant 0 : index
    %2 = vector.load %arg2[%c0_2, %c0_3] : memref<1x256xf32, #tpu.memory_space<vmem>>, vector<1x256xf32>
    %3 = vector.broadcast %2 : vector<1x256xf32> to vector<16x256xf32>
    %4 = arith.mulf %1, %3 : vector<16x256xf32>
    %c0_4 = arith.constant 0 : index
    %c0_5 = arith.constant 0 : index
    %5 = vector.load %arg3[%c0_4, %c0_5] : memref<1x256xf32, #tpu.memory_space<vmem>>, vector<1x256xf32>
    %6 = vector.broadcast %5 : vector<1x256xf32> to vector<16x256xf32>
    %7 = arith.addf %4, %6 : vector<16x256xf32>
    %cst = arith.constant 0.000000e+00 : f32
    %8 = vector.broadcast %cst : f32 to vector<16x256xf32>
    %9 = arith.maximumf %7, %8 : vector<16x256xf32>
    %cst_6 = arith.constant 0.000000e+00 : f32
    %10 = vector.broadcast %cst_6 : f32 to vector<1x256xf32>
    %c0_7 = arith.constant 0 : index
    %c0_8 = arith.constant 0 : index
    %11 = vector.load %arg9[%c0_7, %c0_8] : memref<18x256xf32, #tpu.memory_space<vmem>>, vector<1x256xf32>
    tpu.vector_store %arg9[%c0_7, %c0_8], %10 {strides = array<i32>} : memref<18x256xf32, #tpu.memory_space<vmem>>, vector<1x256xf32>,
    %c17 = arith.constant 17 : index
    %c0_9 = arith.constant 0 : index
    %12 = vector.load %arg9[%c17, %c0_9] : memref<18x256xf32, #tpu.memory_space<vmem>>, vector<1x256xf32>
    tpu.vector_store %arg9[%c17, %c0_9], %10 {strides = array<i32>} : memref<18x256xf32, #tpu.memory_space<vmem>>, vector<1x256xf32>,
    %c1 = arith.constant 1 : index
    %c0_10 = arith.constant 0 : index
    %13 = vector.load %arg9[%c1, %c0_10] : memref<18x256xf32, #tpu.memory_space<vmem>>, vector<16x256xf32>
    tpu.vector_store %arg9[%c1, %c0_10], %9 {strides = array<i32>} : memref<18x256xf32, #tpu.memory_space<vmem>>, vector<16x256xf32>,
    %cst_11 = arith.constant 0.000000e+00 : f32
    %14 = vector.broadcast %cst_11 : f32 to vector<16x128xf32>
    %c0_12 = arith.constant 0 : index
    %c0_13 = arith.constant 0 : index
    %15 = vector.load %arg9[%c0_12, %c0_13] : memref<18x256xf32, #tpu.memory_space<vmem>>, vector<16x256xf32>
    %16 = arith.truncf %15 : vector<16x256xf32> to vector<16x256xbf16>
    %c0_14 = arith.constant 0 : index
    %c0_15 = arith.constant 0 : index
    %c0_16 = arith.constant 0 : index
    %17 = vector.load %arg4[%c0_14, %c0_15, %c0_16] : memref<3x256x128xbf16, #tpu.memory_space<vmem>>, vector<1x256x128xbf16>
    %18 = vector.shape_cast %17 : vector<1x256x128xbf16> to vector<256x128xbf16>
    %cst_17 = arith.constant dense<0.000000e+00> : vector<16x128xf32>
    %19 = tpu.matmul %16, %18, %cst_17 {dimension_numbers = #tpu.dot_dimension_numbers<[1], [0], [0], [1], [0, 0, 1, 1], [], []>} : vector<16x256xbf16>, vector<256x128xbf16>, vector<16x128xf32> -> vector<16x128xf32>
    %20 = arith.addf %14, %19 : vector<16x128xf32>
    %c1_18 = arith.constant 1 : index
    %c0_19 = arith.constant 0 : index
    %21 = vector.load %arg9[%c1_18, %c0_19] : memref<18x256xf32, #tpu.memory_space<vmem>>, vector<16x256xf32>
    %22 = arith.truncf %21 : vector<16x256xf32> to vector<16x256xbf16>
    %c1_20 = arith.constant 1 : index
    %c0_21 = arith.constant 0 : index
    %c0_22 = arith.constant 0 : index
    %23 = vector.load %arg4[%c1_20, %c0_21, %c0_22] : memref<3x256x128xbf16, #tpu.memory_space<vmem>>, vector<1x256x128xbf16>
    %24 = vector.shape_cast %23 : vector<1x256x128xbf16> to vector<256x128xbf16>
    %cst_23 = arith.constant dense<0.000000e+00> : vector<16x128xf32>
    %25 = tpu.matmul %22, %24, %cst_23 {dimension_numbers = #tpu.dot_dimension_numbers<[1], [0], [0], [1], [0, 0, 1, 1], [], []>} : vector<16x256xbf16>, vector<256x128xbf16>, vector<16x128xf32> -> vector<16x128xf32>
    %26 = arith.addf %20, %25 : vector<16x128xf32>
    %c2 = arith.constant 2 : index
    %c0_24 = arith.constant 0 : index
    %27 = vector.load %arg9[%c2, %c0_24] : memref<18x256xf32, #tpu.memory_space<vmem>>, vector<16x256xf32>
    %28 = arith.truncf %27 : vector<16x256xf32> to vector<16x256xbf16>
    %c2_25 = arith.constant 2 : index
    %c0_26 = arith.constant 0 : index
    %c0_27 = arith.constant 0 : index
    %29 = vector.load %arg4[%c2_25, %c0_26, %c0_27] : memref<3x256x128xbf16, #tpu.memory_space<vmem>>, vector<1x256x128xbf16>
    %30 = vector.shape_cast %29 : vector<1x256x128xbf16> to vector<256x128xbf16>
    %cst_28 = arith.constant dense<0.000000e+00> : vector<16x128xf32>
    %31 = tpu.matmul %28, %30, %cst_28 {dimension_numbers = #tpu.dot_dimension_numbers<[1], [0], [0], [1], [0, 0, 1, 1], [], []>} : vector<16x256xbf16>, vector<256x128xbf16>, vector<16x128xf32> -> vector<16x128xf32>
    %32 = arith.addf %26, %31 : vector<16x128xf32>
    %c0_29 = arith.constant 0 : index
    %c0_30 = arith.constant 0 : index
    %33 = vector.load %arg5[%c0_29, %c0_30] : memref<1x128xf32, #tpu.memory_space<vmem>>, vector<1x128xf32>
    %34 = vector.broadcast %33 : vector<1x128xf32> to vector<16x128xf32>
    %35 = arith.addf %32, %34 : vector<16x128xf32>
    %c0_31 = arith.constant 0 : index
    %c0_32 = arith.constant 0 : index
    %c0_33 = arith.constant 0 : index
    %36 = vector.load %arg6[%c0_31, %c0_32, %c0_33] : memref<1x16x128xf32, #tpu.memory_space<vmem>>, vector<1x16x128xf32>
    %37 = vector.shape_cast %36 : vector<1x16x128xf32> to vector<16x128xf32>
    %38 = vector.shape_cast %35 : vector<16x128xf32> to vector<1x16x128xf32>
    tpu.vector_store %arg6[%c0_31, %c0_32, %c0_33], %38 {strides = array<i32>} : memref<1x16x128xf32, #tpu.memory_space<vmem>>, vector<1x16x128xf32>,
    %cst_34 = arith.constant dense<0.000000e+00> : vector<128xf32>
    %39 = vector.multi_reduction <add>, %35, %cst_34 [0] : vector<16x128xf32> to vector<128xf32>
    %40 = vector.shape_cast %39 : vector<128xf32> to vector<1x128xf32>
    %c0_35 = arith.constant 0 : index
    %c0_36 = arith.constant 0 : index
    %c0_37 = arith.constant 0 : index
    %41 = vector.load %arg7[%c0_35, %c0_36, %c0_37] : memref<1x1x128xf32, #tpu.memory_space<vmem>>, vector<1x1x128xf32>
    %42 = vector.shape_cast %41 : vector<1x1x128xf32> to vector<1x128xf32>
    %43 = vector.shape_cast %40 : vector<1x128xf32> to vector<1x1x128xf32>
    tpu.vector_store %arg7[%c0_35, %c0_36, %c0_37], %43 {strides = array<i32>} : memref<1x1x128xf32, #tpu.memory_space<vmem>>, vector<1x1x128xf32>,
    %44 = arith.mulf %35, %35 : vector<16x128xf32>
    %cst_38 = arith.constant dense<0.000000e+00> : vector<128xf32>
    %45 = vector.multi_reduction <add>, %44, %cst_38 [0] : vector<16x128xf32> to vector<128xf32>
    %46 = vector.shape_cast %45 : vector<128xf32> to vector<1x128xf32>
    %c0_39 = arith.constant 0 : index
    %c0_40 = arith.constant 0 : index
    %c0_41 = arith.constant 0 : index
    %47 = vector.load %arg8[%c0_39, %c0_40, %c0_41] : memref<1x1x128xf32, #tpu.memory_space<vmem>>, vector<1x1x128xf32>
    %48 = vector.shape_cast %47 : vector<1x1x128xf32> to vector<1x128xf32>
    %49 = vector.shape_cast %46 : vector<1x128xf32> to vector<1x1x128xf32>
    tpu.vector_store %arg8[%c0_39, %c0_40, %c0_41], %49 {strides = array<i32>} : memref<1x1x128xf32, #tpu.memory_space<vmem>>, vector<1x1x128xf32>,
    return
  }
  func.func @transform_0(%arg0: i32) -> (i32, i32, i32) {
    %c0_i32 = arith.constant 0 : i32
    %c0_i32_0 = arith.constant 0 : i32
    %c0_i32_1 = arith.constant 0 : i32
    return %arg0, %c0_i32, %c0_i32_0 : i32, i32, i32
  }
  func.func @transform_1(%arg0: i32) -> (i32, i32) {
    %c0_i32 = arith.constant 0 : i32
    %c0_i32_0 = arith.constant 0 : i32
    %c0_i32_1 = arith.constant 0 : i32
    return %c0_i32, %c0_i32_0 : i32, i32
  }
  func.func @transform_2(%arg0: i32) -> (i32, i32) {
    %c0_i32 = arith.constant 0 : i32
    %c0_i32_0 = arith.constant 0 : i32
    %c0_i32_1 = arith.constant 0 : i32
    return %c0_i32, %c0_i32_0 : i32, i32
  }
  func.func @transform_3(%arg0: i32) -> (i32, i32, i32) {
    %c0_i32 = arith.constant 0 : i32
    %c0_i32_0 = arith.constant 0 : i32
    %c0_i32_1 = arith.constant 0 : i32
    %c0_i32_2 = arith.constant 0 : i32
    return %c0_i32, %c0_i32_0, %c0_i32_1 : i32, i32, i32
  }
  func.func @transform_4(%arg0: i32) -> (i32, i32) {
    %c0_i32 = arith.constant 0 : i32
    %c0_i32_0 = arith.constant 0 : i32
    %c0_i32_1 = arith.constant 0 : i32
    return %c0_i32, %c0_i32_0 : i32, i32
  }
  func.func @transform_5(%arg0: i32) -> (i32, i32, i32) {
    %c0_i32 = arith.constant 0 : i32
    %c0_i32_0 = arith.constant 0 : i32
    %c0_i32_1 = arith.constant 0 : i32
    return %arg0, %c0_i32, %c0_i32_0 : i32, i32, i32
  }
  func.func @transform_6(%arg0: i32) -> (i32, i32, i32) {
    %c0_i32 = arith.constant 0 : i32
    %c0_i32_0 = arith.constant 0 : i32
    %c0_i32_1 = arith.constant 0 : i32
    return %arg0, %c0_i32, %c0_i32_0 : i32, i32, i32
  }
  func.func @transform_7(%arg0: i32) -> (i32, i32, i32) {
    %c0_i32 = arith.constant 0 : i32
    %c0_i32_0 = arith.constant 0 : i32
    %c0_i32_1 = arith.constant 0 : i32
    return %arg0, %c0_i32, %c0_i32_0 : i32, i32, i32
  }
}

module attributes {stable_mosaic.version = 11 : i64} {
  func.func @kernel(%arg0: i32, %arg1: memref<1x16x128xf32, #tpu.memory_space<vmem>>, %arg2: memref<1x128xf32, #tpu.memory_space<vmem>>, %arg3: memref<1x128xf32, #tpu.memory_space<vmem>>, %arg4: memref<3x128x128xbf16, #tpu.memory_space<vmem>>, %arg5: memref<1x128xf32, #tpu.memory_space<vmem>>, %arg6: memref<1x16x128xf32, #tpu.memory_space<vmem>>, %arg7: memref<1x16x128xf32, #tpu.memory_space<vmem>>, %arg8: memref<1x1x128xf32, #tpu.memory_space<vmem>>, %arg9: memref<1x1x128xf32, #tpu.memory_space<vmem>>, %arg10: memref<18x128xf32, #tpu.memory_space<vmem>>) attributes {dimension_semantics = [#tpu.dimension_semantics<parallel>], iteration_bounds = array<i64: 2>, scalar_prefetch = 0 : i64, scratch_operands = 1 : i64, tpu.core_type = #tpu.core_type<tc>, window_params = [{transform_indices = @transform_0, window_bounds = array<i64: 1, 16, 128>}, {pipeline_mode = #tpu.pipeline_mode<synchronous>, transform_indices = @transform_1, window_bounds = array<i64: 1, 128>}, {pipeline_mode = #tpu.pipeline_mode<synchronous>, transform_indices = @transform_2, window_bounds = array<i64: 1, 128>}, {pipeline_mode = #tpu.pipeline_mode<synchronous>, transform_indices = @transform_3, window_bounds = array<i64: 3, 128, 128>}, {pipeline_mode = #tpu.pipeline_mode<synchronous>, transform_indices = @transform_4, window_bounds = array<i64: 1, 128>}, {transform_indices = @transform_5, window_bounds = array<i64: 1, 16, 128>}, {transform_indices = @transform_6, window_bounds = array<i64: 1, 16, 128>}, {transform_indices = @transform_7, window_bounds = array<i64: 1, 1, 128>}, {transform_indices = @transform_8, window_bounds = array<i64: 1, 1, 128>}]} {
    %c0 = arith.constant 0 : index
    %c0_0 = arith.constant 0 : index
    %c0_1 = arith.constant 0 : index
    %0 = vector.load %arg1[%c0, %c0_0, %c0_1] : memref<1x16x128xf32, #tpu.memory_space<vmem>>, vector<1x16x128xf32>
    %1 = vector.shape_cast %0 : vector<1x16x128xf32> to vector<16x128xf32>
    %c0_2 = arith.constant 0 : index
    %c0_3 = arith.constant 0 : index
    %2 = vector.load %arg2[%c0_2, %c0_3] : memref<1x128xf32, #tpu.memory_space<vmem>>, vector<1x128xf32>
    %3 = vector.broadcast %2 : vector<1x128xf32> to vector<16x128xf32>
    %4 = arith.mulf %1, %3 : vector<16x128xf32>
    %c0_4 = arith.constant 0 : index
    %c0_5 = arith.constant 0 : index
    %5 = vector.load %arg3[%c0_4, %c0_5] : memref<1x128xf32, #tpu.memory_space<vmem>>, vector<1x128xf32>
    %6 = vector.broadcast %5 : vector<1x128xf32> to vector<16x128xf32>
    %7 = arith.addf %4, %6 : vector<16x128xf32>
    %cst = arith.constant 0.000000e+00 : f32
    %8 = vector.broadcast %cst : f32 to vector<16x128xf32>
    %9 = arith.maximumf %7, %8 : vector<16x128xf32>
    %cst_6 = arith.constant 0.000000e+00 : f32
    %10 = vector.broadcast %cst_6 : f32 to vector<1x128xf32>
    %c0_7 = arith.constant 0 : index
    %c0_8 = arith.constant 0 : index
    %11 = vector.load %arg10[%c0_7, %c0_8] : memref<18x128xf32, #tpu.memory_space<vmem>>, vector<1x128xf32>
    tpu.vector_store %arg10[%c0_7, %c0_8], %10 {strides = array<i32>} : memref<18x128xf32, #tpu.memory_space<vmem>>, vector<1x128xf32>,
    %c17 = arith.constant 17 : index
    %c0_9 = arith.constant 0 : index
    %12 = vector.load %arg10[%c17, %c0_9] : memref<18x128xf32, #tpu.memory_space<vmem>>, vector<1x128xf32>
    tpu.vector_store %arg10[%c17, %c0_9], %10 {strides = array<i32>} : memref<18x128xf32, #tpu.memory_space<vmem>>, vector<1x128xf32>,
    %c1 = arith.constant 1 : index
    %c0_10 = arith.constant 0 : index
    %13 = vector.load %arg10[%c1, %c0_10] : memref<18x128xf32, #tpu.memory_space<vmem>>, vector<16x128xf32>
    tpu.vector_store %arg10[%c1, %c0_10], %9 {strides = array<i32>} : memref<18x128xf32, #tpu.memory_space<vmem>>, vector<16x128xf32>,
    %cst_11 = arith.constant 0.000000e+00 : f32
    %14 = vector.broadcast %cst_11 : f32 to vector<16x128xf32>
    %c0_12 = arith.constant 0 : index
    %c0_13 = arith.constant 0 : index
    %15 = vector.load %arg10[%c0_12, %c0_13] : memref<18x128xf32, #tpu.memory_space<vmem>>, vector<16x128xf32>
    %16 = arith.truncf %15 : vector<16x128xf32> to vector<16x128xbf16>
    %c0_14 = arith.constant 0 : index
    %c0_15 = arith.constant 0 : index
    %c0_16 = arith.constant 0 : index
    %17 = vector.load %arg4[%c0_14, %c0_15, %c0_16] : memref<3x128x128xbf16, #tpu.memory_space<vmem>>, vector<1x128x128xbf16>
    %18 = vector.shape_cast %17 : vector<1x128x128xbf16> to vector<128x128xbf16>
    %cst_17 = arith.constant dense<0.000000e+00> : vector<16x128xf32>
    %19 = tpu.matmul %16, %18, %cst_17 {dimension_numbers = #tpu.dot_dimension_numbers<[1], [0], [0], [1], [0, 0, 1, 1], [], []>} : vector<16x128xbf16>, vector<128x128xbf16>, vector<16x128xf32> -> vector<16x128xf32>
    %20 = arith.addf %14, %19 : vector<16x128xf32>
    %c1_18 = arith.constant 1 : index
    %c0_19 = arith.constant 0 : index
    %21 = vector.load %arg10[%c1_18, %c0_19] : memref<18x128xf32, #tpu.memory_space<vmem>>, vector<16x128xf32>
    %22 = arith.truncf %21 : vector<16x128xf32> to vector<16x128xbf16>
    %c1_20 = arith.constant 1 : index
    %c0_21 = arith.constant 0 : index
    %c0_22 = arith.constant 0 : index
    %23 = vector.load %arg4[%c1_20, %c0_21, %c0_22] : memref<3x128x128xbf16, #tpu.memory_space<vmem>>, vector<1x128x128xbf16>
    %24 = vector.shape_cast %23 : vector<1x128x128xbf16> to vector<128x128xbf16>
    %cst_23 = arith.constant dense<0.000000e+00> : vector<16x128xf32>
    %25 = tpu.matmul %22, %24, %cst_23 {dimension_numbers = #tpu.dot_dimension_numbers<[1], [0], [0], [1], [0, 0, 1, 1], [], []>} : vector<16x128xbf16>, vector<128x128xbf16>, vector<16x128xf32> -> vector<16x128xf32>
    %26 = arith.addf %20, %25 : vector<16x128xf32>
    %c2 = arith.constant 2 : index
    %c0_24 = arith.constant 0 : index
    %27 = vector.load %arg10[%c2, %c0_24] : memref<18x128xf32, #tpu.memory_space<vmem>>, vector<16x128xf32>
    %28 = arith.truncf %27 : vector<16x128xf32> to vector<16x128xbf16>
    %c2_25 = arith.constant 2 : index
    %c0_26 = arith.constant 0 : index
    %c0_27 = arith.constant 0 : index
    %29 = vector.load %arg4[%c2_25, %c0_26, %c0_27] : memref<3x128x128xbf16, #tpu.memory_space<vmem>>, vector<1x128x128xbf16>
    %30 = vector.shape_cast %29 : vector<1x128x128xbf16> to vector<128x128xbf16>
    %cst_28 = arith.constant dense<0.000000e+00> : vector<16x128xf32>
    %31 = tpu.matmul %28, %30, %cst_28 {dimension_numbers = #tpu.dot_dimension_numbers<[1], [0], [0], [1], [0, 0, 1, 1], [], []>} : vector<16x128xbf16>, vector<128x128xbf16>, vector<16x128xf32> -> vector<16x128xf32>
    %32 = arith.addf %26, %31 : vector<16x128xf32>
    %c0_29 = arith.constant 0 : index
    %c0_30 = arith.constant 0 : index
    %33 = vector.load %arg5[%c0_29, %c0_30] : memref<1x128xf32, #tpu.memory_space<vmem>>, vector<1x128xf32>
    %34 = vector.broadcast %33 : vector<1x128xf32> to vector<16x128xf32>
    %35 = arith.addf %32, %34 : vector<16x128xf32>
    %c0_31 = arith.constant 0 : index
    %c0_32 = arith.constant 0 : index
    %c0_33 = arith.constant 0 : index
    %36 = vector.load %arg6[%c0_31, %c0_32, %c0_33] : memref<1x16x128xf32, #tpu.memory_space<vmem>>, vector<1x16x128xf32>
    %37 = vector.shape_cast %36 : vector<1x16x128xf32> to vector<16x128xf32>
    %38 = arith.addf %35, %37 : vector<16x128xf32>
    %c0_34 = arith.constant 0 : index
    %c0_35 = arith.constant 0 : index
    %c0_36 = arith.constant 0 : index
    %39 = vector.load %arg7[%c0_34, %c0_35, %c0_36] : memref<1x16x128xf32, #tpu.memory_space<vmem>>, vector<1x16x128xf32>
    %40 = vector.shape_cast %39 : vector<1x16x128xf32> to vector<16x128xf32>
    %41 = vector.shape_cast %38 : vector<16x128xf32> to vector<1x16x128xf32>
    tpu.vector_store %arg7[%c0_34, %c0_35, %c0_36], %41 {strides = array<i32>} : memref<1x16x128xf32, #tpu.memory_space<vmem>>, vector<1x16x128xf32>,
    %cst_37 = arith.constant dense<0.000000e+00> : vector<128xf32>
    %42 = vector.multi_reduction <add>, %38, %cst_37 [0] : vector<16x128xf32> to vector<128xf32>
    %43 = vector.shape_cast %42 : vector<128xf32> to vector<1x128xf32>
    %c0_38 = arith.constant 0 : index
    %c0_39 = arith.constant 0 : index
    %c0_40 = arith.constant 0 : index
    %44 = vector.load %arg8[%c0_38, %c0_39, %c0_40] : memref<1x1x128xf32, #tpu.memory_space<vmem>>, vector<1x1x128xf32>
    %45 = vector.shape_cast %44 : vector<1x1x128xf32> to vector<1x128xf32>
    %46 = vector.shape_cast %43 : vector<1x128xf32> to vector<1x1x128xf32>
    tpu.vector_store %arg8[%c0_38, %c0_39, %c0_40], %46 {strides = array<i32>} : memref<1x1x128xf32, #tpu.memory_space<vmem>>, vector<1x1x128xf32>,
    %47 = arith.mulf %38, %38 : vector<16x128xf32>
    %cst_41 = arith.constant dense<0.000000e+00> : vector<128xf32>
    %48 = vector.multi_reduction <add>, %47, %cst_41 [0] : vector<16x128xf32> to vector<128xf32>
    %49 = vector.shape_cast %48 : vector<128xf32> to vector<1x128xf32>
    %c0_42 = arith.constant 0 : index
    %c0_43 = arith.constant 0 : index
    %c0_44 = arith.constant 0 : index
    %50 = vector.load %arg9[%c0_42, %c0_43, %c0_44] : memref<1x1x128xf32, #tpu.memory_space<vmem>>, vector<1x1x128xf32>
    %51 = vector.shape_cast %50 : vector<1x1x128xf32> to vector<1x128xf32>
    %52 = vector.shape_cast %49 : vector<1x128xf32> to vector<1x1x128xf32>
    tpu.vector_store %arg9[%c0_42, %c0_43, %c0_44], %52 {strides = array<i32>} : memref<1x1x128xf32, #tpu.memory_space<vmem>>, vector<1x1x128xf32>,
    return
  }
  func.func @transform_0(%arg0: i32) -> (i32, i32, i32) {
    %c0_i32 = arith.constant 0 : i32
    %c0_i32_0 = arith.constant 0 : i32
    %c0_i32_1 = arith.constant 0 : i32
    return %arg0, %c0_i32, %c0_i32_0 : i32, i32, i32
  }
  func.func @transform_1(%arg0: i32) -> (i32, i32) {
    %c0_i32 = arith.constant 0 : i32
    %c0_i32_0 = arith.constant 0 : i32
    %c0_i32_1 = arith.constant 0 : i32
    return %c0_i32, %c0_i32_0 : i32, i32
  }
  func.func @transform_2(%arg0: i32) -> (i32, i32) {
    %c0_i32 = arith.constant 0 : i32
    %c0_i32_0 = arith.constant 0 : i32
    %c0_i32_1 = arith.constant 0 : i32
    return %c0_i32, %c0_i32_0 : i32, i32
  }
  func.func @transform_3(%arg0: i32) -> (i32, i32, i32) {
    %c0_i32 = arith.constant 0 : i32
    %c0_i32_0 = arith.constant 0 : i32
    %c0_i32_1 = arith.constant 0 : i32
    %c0_i32_2 = arith.constant 0 : i32
    return %c0_i32, %c0_i32_0, %c0_i32_1 : i32, i32, i32
  }
  func.func @transform_4(%arg0: i32) -> (i32, i32) {
    %c0_i32 = arith.constant 0 : i32
    %c0_i32_0 = arith.constant 0 : i32
    %c0_i32_1 = arith.constant 0 : i32
    return %c0_i32, %c0_i32_0 : i32, i32
  }
  func.func @transform_5(%arg0: i32) -> (i32, i32, i32) {
    %c0_i32 = arith.constant 0 : i32
    %c0_i32_0 = arith.constant 0 : i32
    %c0_i32_1 = arith.constant 0 : i32
    return %arg0, %c0_i32, %c0_i32_0 : i32, i32, i32
  }
  func.func @transform_6(%arg0: i32) -> (i32, i32, i32) {
    %c0_i32 = arith.constant 0 : i32
    %c0_i32_0 = arith.constant 0 : i32
    %c0_i32_1 = arith.constant 0 : i32
    return %arg0, %c0_i32, %c0_i32_0 : i32, i32, i32
  }
  func.func @transform_7(%arg0: i32) -> (i32, i32, i32) {
    %c0_i32 = arith.constant 0 : i32
    %c0_i32_0 = arith.constant 0 : i32
    %c0_i32_1 = arith.constant 0 : i32
    return %arg0, %c0_i32, %c0_i32_0 : i32, i32, i32
  }
  func.func @transform_8(%arg0: i32) -> (i32, i32, i32) {
    %c0_i32 = arith.constant 0 : i32
    %c0_i32_0 = arith.constant 0 : i32
    %c0_i32_1 = arith.constant 0 : i32
    return %arg0, %c0_i32, %c0_i32_0 : i32, i32, i32
  }
}

</mosaic_0001>

<llo_original>
// kernel: mul.4
$region0: #{mul.4}
  %s0 = inlined_call_operand.vmem [shape: f32[4,2,2,8], index: 0, kind: input, shape index: {}]
  %s1 = inlined_call_operand.vmem [shape: f32[4,32], index: 1, kind: output, shape index: {}]
  $region1: #{mul.4} parent=0
    #allocation0 [shape = 'u8[4096]{0}', space=vmem, size = 0x1000, scoped, tag = 'scoped mem for output reshape']
    #allocation1 [shape = 'u8[32768]{0}', space=vmem, size = 0x8000, scoped, tag = 'scoped mem for input reshape']
    %s3 = sshllo.u32 0, 2
    %s4 = smul.addr 2, 7
    %s5 = scalar_lea.vmem %s0, %s4
    %v6 = vld [vmem:[%s5] sm:%s3]
    %s7 = scalar_lea.vmem [#allocation1], 56
    %8 = vst [vmem:[%s7] sm:%s3] %v6
    %s9 = smul.addr 2, 6
    %s10 = scalar_lea.vmem %s0, %s9
    %v11 = vld [vmem:[%s10] sm:%s3]
    %s12 = scalar_lea.vmem [#allocation1], 48
    %13 = vst [vmem:[%s12] sm:%s3] %v11
    %s14 = smul.addr 2, 5
    %s15 = scalar_lea.vmem %s0, %s14
    %v16 = vld [vmem:[%s15] sm:%s3]
    %s17 = scalar_lea.vmem [#allocation1], 40
    %18 = vst [vmem:[%s17] sm:%s3] %v16
    %s19 = smul.addr 2, 4
    %s20 = scalar_lea.vmem %s0, %s19
    %v21 = vld [vmem:[%s20] sm:%s3]
    %s22 = scalar_lea.vmem [#allocation1], 32
    %23 = vst [vmem:[%s22] sm:%s3] %v21
    %s24 = smul.addr 2, 3
    %s25 = scalar_lea.vmem %s0, %s24
    %v26 = vld [vmem:[%s25] sm:%s3]
    %s27 = scalar_lea.vmem [#allocation1], 24
    %28 = vst [vmem:[%s27] sm:%s3] %v26
    %s29 = smul.addr 2, 2
    %s30 = scalar_lea.vmem %s0, %s29
    %v31 = vld [vmem:[%s30] sm:%s3]
    %s32 = scalar_lea.vmem [#allocation1], 16
    %33 = vst [vmem:[%s32] sm:%s3] %v31
    %s34 = scalar_lea.vmem %s0, 2
    %v35 = vld [vmem:[%s34] sm:%s3]
    %s36 = scalar_lea.vmem [#allocation1], 8
    %37 = vst [vmem:[%s36] sm:%s3] %v35
    %v38 = vld [vmem:[%s0] sm:%s3]
    %39 = vst [vmem:[#allocation1] sm:%s3] %v38
    %s40 = smov 3
    %v41 = vld [vmem:[#allocation1] ss:$16 sm:%s40]
    %s42 = smov 12
    %v43 = vld [vmem:[#allocation1] ss:$16 sm:%s42]
    %vm44 = vcmask 1043458
    %v45 = vsel %vm44, %v43, %v41
    %vm46 = vcmask 64512
    %47 = vst.msk [vmem:[#allocation0] sm:$0xf] %vm46, %v45
    %s48 = scalar_lea.vmem [#allocation1], 9
    %s49 = smov 3
    %v50 = vld [vmem:[%s48] ss:$16 sm:%s49]
    %s51 = scalar_lea.vmem [#allocation1], 9
    %s52 = smov 12
    %v53 = vld [vmem:[%s51] ss:$16 sm:%s52]
    %vm54 = vcmask 1043458
    %v55 = vsel %vm54, %v53, %v50
    %56 = vrot.lane.b32.xlu0 %v55, 24
    %v57 = vpop.permute.xlu0 %56
    %vm58 = vcmask 261312
    %59 = vst.msk [vmem:[#allocation0] sm:$0xf] %vm58, %v57
    %s60 = scalar_lea.vmem [#allocation1], 8
    %s61 = smov 3
    %v62 = vld [vmem:[%s60] ss:$16 sm:%s61]
    %s63 = scalar_lea.vmem [#allocation1], 8
    %s64 = smov 12
    %v65 = vld [vmem:[%s63] ss:$16 sm:%s64]
    %vm66 = vcmask 1043458
    %v67 = vsel %vm66, %v65, %v62
    %68 = vrot.lane.b32.xlu0 %v67, 16
    %v69 = vpop.permute.xlu0 %68
    %vm70 = vcmask 195712
    %71 = vst.msk [vmem:[#allocation0] sm:$0xf] %vm70, %v69
    %s72 = scalar_lea.vmem [#allocation1], 1
    %s73 = smov 3
    %v74 = vld [vmem:[%s72] ss:$16 sm:%s73]
    %s75 = scalar_lea.vmem [#allocation1], 1
    %s76 = smov 12
    %v77 = vld [vmem:[%s75] ss:$16 sm:%s76]
    %vm78 = vcmask 1043458
    %v79 = vsel %vm78, %v77, %v74
    %80 = vrot.lane.b32.xlu0 %v79, 8
    %v81 = vpop.permute.xlu0 %80
    %vm82 = vcmask 130112
    %83 = vst.msk [vmem:[#allocation0] sm:$0xf] %vm82, %v81
    %s85 = sshllo.u32 0, 4
    %v87 = vld [vmem:[#allocation0] sm:%s85]
    %s88 = sshllo.u32 0, 4
    %89 = vst [vmem:[%s1] sm:%s88] %v87

// kernel: tile.53
$region0: #{tile.53}
  #allocation0 [shape = 's32[1]{0}', space=sflag, size = 0x4, scoped, tag = 'scoped memory for tile.53']
  %s0 = inlined_call_operand.vmem [shape: f32[8], index: 0, kind: input, shape index: {}]
  %s1 = inlined_call_operand.vmem [shape: f32[32,8], index: 1, kind: output, shape index: {}]
  // Predicated region
  $region2: #{tile.53} parent=0 // pred_check
    _
  $region3: #{tile.53} parent=0 // pred_check_branch
    %3 = sbr.rel (0) target = $region5
  $region4: #{tile.53} parent=0 // pred_region
    _
  $region5: #{tile.53} parent=0 // pred_fallthru
    _
  %v4 = vld [vmem:[%s0] ss:$0 sm:$0xff]
  %5 = vst [vmem:[%s1] sm:$0xff] %v4
  %s6 = scalar_lea.vmem %s1, 8
  %7 = vst [vmem:[%s6] sm:$0xff] %v4
  %s8 = scalar_lea.vmem %s1, 16
  %9 = vst [vmem:[%s8] sm:$0xff] %v4
  %s10 = scalar_lea.vmem %s1, 24
  %11 = vst [vmem:[%s10] sm:$0xff] %v4

// kernel: tile.54
$region0: #{tile.54}
  %s0 = inlined_call_operand.vmem [shape: f32[32,8], index: 0, kind: input, shape index: {}]
  %s1 = inlined_call_operand.vmem [shape: f32[1,256], index: 1, kind: output, shape index: {}]
  $region1: #{tile.54} parent=0
    #allocation0 [shape = 'u8[8192]{0}', space=vmem, size = 0x2000, scoped, tag = 'scoped mem for output reshape']
    %s2 = smov 3
    %v3 = vld [vmem:[%s0] ss:$16 sm:%s2]
    %vm4 = vcmask 64512
    %5 = vst.msk [vmem:[#allocation0] ss:$8 sm:$0x3] %vm4, %v3
    %s6 = scalar_lea.vmem %s0, 15
    %s7 = smov 3
    %v8 = vld [vmem:[%s6] ss:$16 sm:%s7]
    %9 = vrot.lane.b32.xlu0 %v8, 120
    %v10 = vpop.permute.xlu0 %9
    %vm11 = vcmask 1048512
    %12 = vst.msk [vmem:[#allocation0] ss:$8 sm:$0x3] %vm11, %v10
    %s13 = scalar_lea.vmem %s0, 14
    %s14 = smov 3
    %v15 = vld [vmem:[%s13] ss:$16 sm:%s14]
    %16 = vrot.lane.b32.xlu0 %v15, 112
    %v17 = vpop.permute.xlu0 %16
    %vm18 = vcmask 982912
    %19 = vst.msk [vmem:[#allocation0] ss:$8 sm:$0x3] %vm18, %v17
    %s20 = scalar_lea.vmem %s0, 13
    %s21 = smov 3
    %v22 = vld [vmem:[%s20] ss:$16 sm:%s21]
    %23 = vrot.lane.b32.xlu0 %v22, 104
    %v24 = vpop.permute.xlu0 %23
    %vm25 = vcmask 917312
    %26 = vst.msk [vmem:[#allocation0] ss:$8 sm:$0x3] %vm25, %v24
    %s27 = scalar_lea.vmem %s0, 12
    %s28 = smov 3
    %v29 = vld [vmem:[%s27] ss:$16 sm:%s28]
    %30 = vrot.lane.b32.xlu0 %v29, 96
    %v31 = vpop.permute.xlu0 %30
    %vm32 = vcmask 851712
    %33 = vst.msk [vmem:[#allocation0] ss:$8 sm:$0x3] %vm32, %v31
    %s34 = scalar_lea.vmem %s0, 11
    %s35 = smov 3
    %v36 = vld [vmem:[%s34] ss:$16 sm:%s35]
    %37 = vrot.lane.b32.xlu0 %v36, 88
    %v38 = vpop.permute.xlu0 %37
    %vm39 = vcmask 786112
    %40 = vst.msk [vmem:[#allocation0] ss:$8 sm:$0x3] %vm39, %v38
    %s41 = scalar_lea.vmem %s0, 10
    %s42 = smov 3
    %v43 = vld [vmem:[%s41] ss:$16 sm:%s42]
    %44 = vrot.lane.b32.xlu0 %v43, 80
    %v45 = vpop.permute.xlu0 %44
    %vm46 = vcmask 720512
    %47 = vst.msk [vmem:[#allocation0] ss:$8 sm:$0x3] %vm46, %v45
    %s48 = scalar_lea.vmem %s0, 9
    %s49 = smov 3
    %v50 = vld [vmem:[%s48] ss:$16 sm:%s49]
    %51 = vrot.lane.b32.xlu0 %v50, 72
    %v52 = vpop.permute.xlu0 %51
    %vm53 = vcmask 654912
    %54 = vst.msk [vmem:[#allocation0] ss:$8 sm:$0x3] %vm53, %v52
    %s55 = scalar_lea.vmem %s0, 8
    %s56 = smov 3
    %v57 = vld [vmem:[%s55] ss:$16 sm:%s56]
    %58 = vrot.lane.b32.xlu0 %v57, 64
    %v59 = vpop.permute.xlu0 %58
    %vm60 = vcmask 589312
    %61 = vst.msk [vmem:[#allocation0] ss:$8 sm:$0x3] %vm60, %v59
    %s62 = scalar_lea.vmem %s0, 7
    %s63 = smov 3
    %v64 = vld [vmem:[%s62] ss:$16 sm:%s63]
    %65 = vrot.lane.b32.xlu0 %v64, 56
    %v66 = vpop.permute.xlu0 %65
    %vm67 = vcmask 523712
    %68 = vst.msk [vmem:[#allocation0] ss:$8 sm:$0x3] %vm67, %v66
    %s69 = scalar_lea.vmem %s0, 6
    %s70 = smov 3
    %v71 = vld [vmem:[%s69] ss:$16 sm:%s70]
    %72 = vrot.lane.b32.xlu0 %v71, 48
    %v73 = vpop.permute.xlu0 %72
    %vm74 = vcmask 458112
    %75 = vst.msk [vmem:[#allocation0] ss:$8 sm:$0x3] %vm74, %v73
    %s76 = scalar_lea.vmem %s0, 5
    %s77 = smov 3
    %v78 = vld [vmem:[%s76] ss:$16 sm:%s77]
    %79 = vrot.lane.b32.xlu0 %v78, 40
    %v80 = vpop.permute.xlu0 %79
    %vm81 = vcmask 392512
    %82 = vst.msk [vmem:[#allocation0] ss:$8 sm:$0x3] %vm81, %v80
    %s83 = scalar_lea.vmem %s0, 4
    %s84 = smov 3
    %v85 = vld [vmem:[%s83] ss:$16 sm:%s84]
    %86 = vrot.lane.b32.xlu0 %v85, 32
    %v87 = vpop.permute.xlu0 %86
    %vm88 = vcmask 326912
    %89 = vst.msk [vmem:[#allocation0] ss:$8 sm:$0x3] %vm88, %v87
    %s90 = scalar_lea.vmem %s0, 3
    %s91 = smov 3
    %v92 = vld [vmem:[%s90] ss:$16 sm:%s91]
    %93 = vrot.lane.b32.xlu0 %v92, 24
    %v94 = vpop.permute.xlu0 %93
    %vm95 = vcmask 261312
    %96 = vst.msk [vmem:[#allocation0] ss:$8 sm:$0x3] %vm95, %v94
    %s97 = scalar_lea.vmem %s0, 2
    %s98 = smov 3
    %v99 = vld [vmem:[%s97] ss:$16 sm:%s98]
    %100 = vrot.lane.b32.xlu0 %v99, 16
    %v101 = vpop.permute.xlu0 %100
    %vm102 = vcmask 195712
    %103 = vst.msk [vmem:[#allocation0] ss:$8 sm:$0x3] %vm102, %v101
    %s104 = scalar_lea.vmem %s0, 1
    %s105 = smov 3
    %v106 = vld [vmem:[%s104] ss:$16 sm:%s105]
    %107 = vrot.lane.b32.xlu0 %v106, 8
    %v108 = vpop.permute.xlu0 %107
    %vm109 = vcmask 130112
    %110 = vst.msk [vmem:[#allocation0] ss:$8 sm:$0x3] %vm109, %v108
    %s112 = sshllo.u32 0, 1
    %v114 = vld [vmem:[#allocation0] sm:%s112]
    %s115 = sshllo.u32 0, 1
    %116 = vst [vmem:[%s1] sm:%s115] %v114
    %s117 = scalar_lea.vmem [#allocation0], 8
    %v118 = vld [vmem:[%s117] sm:%s112]
    %s119 = sshllo.u32 0, 1
    %s120 = scalar_lea.vmem %s1, 1
    %121 = vst [vmem:[%s120] sm:%s119] %v118

// kernel: de_conv_forward.5
$region0: #{de_conv_forward.5}
  #allocation0 [shape = 'u32[]', space=smem, size = 0x4, offset = 0x4, fixed_abs, tag = 'smem constant byte address 0x4 - core index']
  #allocation1 [shape = 'u32[144,128]{1,0:T(1,128)}', space=vmem, size = 0x12000, scoped, tag = 'internal scratch']
  %s0 = inlined_call_operand.vmem [shape: f32[2,8,32], index: 0, kind: input, shape index: {}]
  %s1 = inlined_call_operand.vmem [shape: bf16[32,256], index: 1, kind: input, shape index: {}]
  %s2 = inlined_call_operand.vmem [shape: f32[1,256], index: 2, kind: input, shape index: {}]
  %s3 = inlined_call_operand.vmem [shape: f32[2,8,256], index: 3, kind: output, shape index: {}]
  %s4 = sld [smem:[#allocation0]]
  $region45: #{de_conv_forward.5} parent=0
    _
  %s6 = ssub.s32 1, %s4
  %s7 = scalar_select 0, %s6, %s4
  loop: start=0, step=1, limit=4
  $region2: #{de_conv_forward.5} parent=0 // loop_pre_header
    _
  $region3: #{de_conv_forward.5} parent=0 // loop_header
    %s9 = sphi 0, %s13
    %p10 = scmp.ge.s32.totalorder %s9, 4
    %s19 = sphi 0, %s21
    %s22 = sphi 0, %s19
    %s23 = sphi 0, %s22
    %s39 = sphi 0, %s23
    %s43 = sphi 0, %s43
    %s45 = sphi 0, %s43
    %s46 = sphi 0, %s45
    %s60 = sphi 0, %s46
    %s64 = sphi 0, %s64
    %s66 = sphi 0, %s64
    %s67 = sphi 0, %s66
    %s81 = sphi 0, %s67
    %s87 = sphi 0, %s89
    %s90 = sphi 0, %s87
    %s91 = sphi 0, %s90
    %s107 = sphi 0, %s91
  $region4: #{de_conv_forward.5} parent=0 // loop_header_branch
    %12 = sbr.rel (%p10) target = $region8
  $region5: #{de_conv_forward.5} parent=0 // loop_body
    %s14 = ssub.s32 %s9, 1
    %s15 = ssub.s32 %s9, 2
    %s16 = sadd.s32 %s9, 1
    %s17 = ssub.s32 %s9, %s16
    %p18 = scmp.eq.s32.totalorder %s17, 0
    %s20 = sadd.s32 %s19, 1
    %s21 = scalar_select %p18, %s19, %s20
    %p24 = pneg %p18
    %p25 = scmp.eq.s32.totalorder %s9, 1
    %p26 = por %p24, %p25
    %p27 = scmp.ne.s32.totalorder %s19, %s22
    %p28 = scmp.eq.s32.totalorder %s9, 0
    %p29 = por %p27, %p28
    %p30 = scmp.ne.s32.totalorder %s19, %s22
    %p31 = scmp.eq.s32.totalorder %s14, 1
    %p32 = por %p30, %p31
    %p33 = scmp.ne.s32.totalorder %s22, %s23
    %p34 = scmp.eq.s32.totalorder %s14, 0
    %p35 = por %p33, %p34
    %p36 = scmp.ne.s32.totalorder %s22, %s23
    %p37 = scmp.eq.s32.totalorder %s15, 1
    %p38 = por %p36, %p37
    %p40 = scmp.ne.s32.totalorder %s23, %s39
    %p41 = scmp.eq.s32.totalorder %s15, 0
    %p42 = por %p40, %p41
    %s44 = sadd.s32 %s43, 1
    %p47 = scmp.eq.s32.totalorder %s9, 1
    %p48 = scmp.ne.s32.totalorder %s43, %s45
    %p49 = scmp.eq.s32.totalorder %s9, 0
    %p50 = por %p48, %p49
    %p51 = scmp.ne.s32.totalorder %s43, %s45
    %p52 = scmp.eq.s32.totalorder %s14, 1
    %p53 = por %p51, %p52
    %p54 = scmp.ne.s32.totalorder %s45, %s46
    %p55 = scmp.eq.s32.totalorder %s14, 0
    %p56 = por %p54, %p55
    %p57 = scmp.ne.s32.totalorder %s45, %s46
    %p58 = scmp.eq.s32.totalorder %s15, 1
    %p59 = por %p57, %p58
    %p61 = scmp.ne.s32.totalorder %s46, %s60
    %p62 = scmp.eq.s32.totalorder %s15, 0
    %p63 = por %p61, %p62
    %s65 = sadd.s32 %s64, 1
    %p68 = scmp.eq.s32.totalorder %s9, 1
    %p69 = scmp.ne.s32.totalorder %s64, %s66
    %p70 = scmp.eq.s32.totalorder %s9, 0
    %p71 = por %p69, %p70
    %p72 = scmp.ne.s32.totalorder %s64, %s66
    %p73 = scmp.eq.s32.totalorder %s14, 1
    %p74 = por %p72, %p73
    %p75 = scmp.ne.s32.totalorder %s66, %s67
    %p76 = scmp.eq.s32.totalorder %s14, 0
    %p77 = por %p75, %p76
    %p78 = scmp.ne.s32.totalorder %s66, %s67
    %p79 = scmp.eq.s32.totalorder %s15, 1
    %p80 = por %p78, %p79
    %p82 = scmp.ne.s32.totalorder %s67, %s81
    %p83 = scmp.eq.s32.totalorder %s15, 0
    %p84 = por %p82, %p83
    %s85 = ssub.s32 %s9, %s16
    %p86 = scmp.eq.s32.totalorder %s85, 0
    %s88 = sadd.s32 %s87, 1
    %s89 = scalar_select %p86, %s87, %s88
    %p92 = pneg %p86
    %p93 = scmp.eq.s32.totalorder %s9, 1
    %p94 = por %p92, %p93
    %p95 = scmp.ne.s32.totalorder %s87, %s90
    %p96 = scmp.eq.s32.totalorder %s9, 0
    %p97 = por %p95, %p96
    %p98 = scmp.ne.s32.totalorder %s87, %s90
    %p99 = scmp.eq.s32.totalorder %s14, 1
    %p100 = por %p98, %p99
    %p101 = scmp.ne.s32.totalorder %s90, %s91
    %p102 = scmp.eq.s32.totalorder %s14, 0
    %p103 = por %p101, %p102
    %p104 = scmp.ne.s32.totalorder %s90, %s91
    %p105 = scmp.eq.s32.totalorder %s15, 1
    %p106 = por %p104, %p105
    %p108 = scmp.ne.s32.totalorder %s91, %s107
    %p109 = scmp.eq.s32.totalorder %s15, 0
    %p110 = por %p108, %p109
    %p111 = scmp.le.s32.totalorder 1, %s9
    %p112 = scmp.lt.s32.totalorder %s9, 3
    %p113 = pnand %p111, %p112
    %p114 = pneg %p113
    // Predicated region
    $region9: #{de_conv_forward.5} parent=5 // pred_check
      _
    $region10: #{de_conv_forward.5} parent=5 // pred_check_branch
      %116 = sbr.rel (%p113) target = $region12
    $region11: #{de_conv_forward.5} parent=5 // pred_region
      %s117 = ssub.s32 %s9, 1
      // Predicated region
      $region13: #{de_conv_forward.5} parent=11 // pred_check
        %p118 = pneg %p56
      $region14: #{de_conv_forward.5} parent=11 // pred_check_branch
        %120 = sbr.rel (%p118) target = $region16
      $region15: #{de_conv_forward.5} parent=11 // pred_region
        _
      $region16: #{de_conv_forward.5} parent=11 // pred_fallthru
        _
      // Predicated region
      $region17: #{de_conv_forward.5} parent=11 // pred_check
        %p121 = pneg %p77
      $region18: #{de_conv_forward.5} parent=11 // pred_check_branch
        %123 = sbr.rel (%p121) target = $region20
      $region19: #{de_conv_forward.5} parent=11 // pred_region
        _
      $region20: #{de_conv_forward.5} parent=11 // pred_fallthru
        _
    $region12: #{de_conv_forward.5} parent=5 // pred_fallthru
      _
    %p124 = scmp.lt.s32.totalorder %s9, 2
    // Predicated region
    $region21: #{de_conv_forward.5} parent=5 // pred_check
      %p125 = pneg %p124
    $region22: #{de_conv_forward.5} parent=5 // pred_check_branch
      %127 = sbr.rel (%p125) target = $region24
    $region23: #{de_conv_forward.5} parent=5 // pred_region
      // Predicated region
      $region25: #{de_conv_forward.5} parent=23 // pred_check
        %p128 = pneg %p29
      $region26: #{de_conv_forward.5} parent=23 // pred_check_branch
        %130 = sbr.rel (%p128) target = $region28
      $region27: #{de_conv_forward.5} parent=23 // pred_region
        %p131 = scmp.lt.s32.totalorder %s9, 1
        %s132 = scalar_select %p131, %s9, 1
        %s133 = smul.addr %s132, 8
        %s134 = scalar_lea.vmem %s0, %s133
      $region28: #{de_conv_forward.5} parent=23 // pred_fallthru
        _
    $region24: #{de_conv_forward.5} parent=5 // pred_fallthru
      _
    %p135 = scmp.le.s32.totalorder 1, %s9
    %p136 = scmp.lt.s32.totalorder %s9, 3
    %p137 = pnand %p135, %p136
    %p138 = pneg %p137
    // Predicated region
    $region29: #{de_conv_forward.5} parent=5 // pred_check
      _
    $region30: #{de_conv_forward.5} parent=5 // pred_check_branch
      %140 = sbr.rel (%p137) target = $region32
    $region31: #{de_conv_forward.5} parent=5 // pred_region
      %s141 = ssub.s32 %s9, 1
      %p142 = scmp.lt.s32.totalorder %s14, 1
      %s143 = scalar_select %p142, %s14, 1
      %s144 = smul.addr %s143, 8
      %s145 = scalar_lea.vmem %s0, %s144
      %p146 = pneg %p35
      %p147 = pneg %p32
      %p148 = pneg %p56
      %p149 = pneg %p53
      %p150 = pneg %p77
      %p151 = pneg %p74
      %p152 = pneg %p103
      %p153 = pneg %p100
      %p154 = scmp.lt.s32.totalorder %s14, 1
      %s155 = scalar_select %p154, %s14, 1
      %s156 = smul.addr %s155, 2
      %s157 = smul.addr %s156, 8
      %s158 = scalar_lea.vmem %s3, %s157
      %p159 = scmp.lt.s32.totalorder %s14, 1
      %s160 = scalar_select %p159, %s14, 1
      %s161 = smul.addr %s160, 8
      %s162 = scalar_lea.vmem %s0, %s161
      %p163 = scmp.lt.s32.totalorder %s14, 1
      %s164 = scalar_select %p163, %s14, 1
      %s165 = smul.addr %s164, 2
      %s166 = smul.addr %s165, 8
      %s167 = scalar_lea.vmem %s3, %s166
      %v169 = vld [vmem:[%s162] sm:$0xff]
      %v170 = vpack.c.bf16 %v169, %v169
      %v171 = vld [vmem:[%s1] sm:$0xff]
      %v172 = vld [vmem:[%s1 + $0x8] sm:$0xff]
      %v173 = vld [vmem:[%s1 + $0x10] sm:$0xff]
      %v174 = vld [vmem:[%s1 + $0x18] sm:$0xff]
      %v175 = vld [vmem:[%s2] sm:$0x3]
      %v177 = vlaneseq
      %v178 = vshrl.u32 %v177, 7
      %v179 = vsub.s32 0, %v178
      %v180 = vrot.slane %v175, %v179
      %v181 = vlaneseq
      %v182 = vshrl.u32 %v181, 7
      %v183 = vsub.s32 1, %v182
      %v184 = vrot.slane %v175, %v183
      %v191 = vunpack.c.l.b16 %v171
      %v192 = vunpack.c.h.b16 %v171
      %v193 = vunpack.c.l.b16 %v172
      %v194 = vunpack.c.h.b16 %v172
      %v195 = vunpack.c.l.b16 %v173
      %v196 = vunpack.c.h.b16 %v173
      %v197 = vunpack.c.l.b16 %v174
      %v198 = vunpack.c.h.b16 %v174
      %v199 = vpack.c.b16 %v193, %v191
      %v200 = vpack.c.b16 %v194, %v192
      %v201 = vpack.c.b16 %v197, %v195
      %v202 = vpack.c.b16 %v198, %v196
      %vm207 = vcmask 261120
      %v209 = vsel %vm207, %v170, 0
      %211 = vmatprep.subr.bf16.mxu0 %v200
      %212 = vmatpush1.bf16.msra.mxu0 %v199
      %213 = vmatprep.subr.bf16.mxu0 %v202
      %214 = vmatpush1.bf16.msra.mxu0 %v201
      %215 = vmatprep.subr.bf16.mxu0 0
      %216 = vmatpush1.bf16.msra.mxu0 0
      %217 = vmatprep.subr.bf16.mxu0 0
      %218 = vmatpush1.bf16.msra.mxu0 0
      %219 = vmatprep.subr.bf16.mxu0 0
      %220 = vmatpush1.bf16.msra.mxu0 0
      %221 = vmatprep.subr.bf16.mxu0 0
      %222 = vmatpush1.bf16.msra.mxu0 0
      %223 = vmatprep.subr.bf16.mxu0 0
      %224 = vmatpush1.bf16.msra.mxu0 0
      %225 = vmatprep.subr.bf16.mxu0 0
      %226 = vmatpush1.bf16.msra.mxu0 0
      %227 = vmatprep.subr.bf16.mxu0 0
      %228 = vmatpush1.bf16.msra.mxu0 0
      %229 = vmatprep.subr.bf16.mxu0 0
      %230 = vmatpush1.bf16.msra.mxu0 0
      %231 = vmatprep.subr.bf16.mxu0 0
      %232 = vmatpush1.bf16.msra.mxu0 0
      %233 = vmatprep.subr.bf16.mxu0 0
      %234 = vmatpush1.bf16.msra.mxu0 0
      %235 = vmatprep.subr.bf16.mxu0 0
      %236 = vmatpush1.bf16.msra.mxu0 0
      %237 = vmatprep.subr.bf16.mxu0 0
      %238 = vmatpush1.bf16.msra.mxu0 0
      %239 = vmatprep.subr.bf16.mxu0 0
      %240 = vmatpush1.bf16.msra.mxu0 0
      %241 = vmatprep.subr.bf16.mxu0 0
      %242 = vmatpush1.bf16.msra.mxu0 0
      %243 = vmatprep.mubr.bf16.mxu0 0
      %244 = vmatmul.mubr.bf16.gmra.mrb[0].mxu0 %v209
      %v245 = vpop.f32.mrb[0].mxu0
      %v246 = vadd.f32 %v180, %v245
      %v247 = vpop.f32.mrb[0].mxu0
      %v248 = vadd.f32 %v184, %v247
      %v249 = vpop.f32.mrb[0].mxu0
      %v250 = vpop.f32.mrb[0].mxu0
      %251 = vdwg.mxu0
      %252 = vst [vmem:[%s167] sm:$0xff] %v246
      %253 = vst [vmem:[%s167 + $0x8] sm:$0xff] %v248
      %p254 = scmp.lt.s32.totalorder %s14, 1
      %s255 = scalar_select %p254, %s14, 1
      %s256 = smul.addr %s255, 2
      %s257 = smul.addr %s256, 8
      %s258 = scalar_lea.vmem %s3, %s257
      // Predicated region
      $region33: #{de_conv_forward.5} parent=31 // pred_check
        %p259 = pneg %p100
      $region34: #{de_conv_forward.5} parent=31 // pred_check_branch
        %261 = sbr.rel (%p259) target = $region36
      $region35: #{de_conv_forward.5} parent=31 // pred_region
        _
      $region36: #{de_conv_forward.5} parent=31 // pred_fallthru
        _
    $region32: #{de_conv_forward.5} parent=5 // pred_fallthru
      _
    %p262 = scmp.le.s32.totalorder 2, %s9
    // Predicated region
    $region37: #{de_conv_forward.5} parent=5 // pred_check
      %p263 = pneg %p262
    $region38: #{de_conv_forward.5} parent=5 // pred_check_branch
      %265 = sbr.rel (%p263) target = $region40
    $region39: #{de_conv_forward.5} parent=5 // pred_region
      %s266 = ssub.s32 %s9, 2
      // Predicated region
      $region41: #{de_conv_forward.5} parent=39 // pred_check
        %p267 = pneg %p106
      $region42: #{de_conv_forward.5} parent=39 // pred_check_branch
        %269 = sbr.rel (%p267) target = $region44
      $region43: #{de_conv_forward.5} parent=39 // pred_region
        %p270 = scmp.lt.s32.totalorder %s15, 1
        %s271 = scalar_select %p270, %s15, 1
        %s272 = smul.addr %s271, 2
        %s273 = smul.addr %s272, 8
        %s274 = scalar_lea.vmem %s3, %s273
      $region44: #{de_conv_forward.5} parent=39 // pred_fallthru
        _
    $region40: #{de_conv_forward.5} parent=5 // pred_fallthru
      _
  $region6: #{de_conv_forward.5} parent=0 // loop_footer
    %s13 = sadd.s32 1, %s9
  $region7: #{de_conv_forward.5} parent=0 // loop_footer_branch
    %8 = sbr.rel target = $region3
  $region8: #{de_conv_forward.5} parent=0 // loop_exit
    _

// kernel: tile.73
$region0: #{tile.73}
  #allocation0 [shape = 's32[1]{0}', space=sflag, size = 0x4, scoped, tag = 'scoped memory for tile.73']
  %s0 = inlined_call_operand.vmem [shape: f32[16], index: 0, kind: input, shape index: {}]
  %s1 = inlined_call_operand.vmem [shape: f32[16,16], index: 1, kind: output, shape index: {}]
  // Predicated region
  $region2: #{tile.73} parent=0 // pred_check
    _
  $region3: #{tile.73} parent=0 // pred_check_branch
    %3 = sbr.rel (0) target = $region5
  $region4: #{tile.73} parent=0 // pred_region
    _
  $region5: #{tile.73} parent=0 // pred_fallthru
    _
  %v4 = vld [vmem:[%s0] ss:$0 sm:$0xff]
  %5 = vst [vmem:[%s1] sm:$0xff] %v4
  %s6 = scalar_lea.vmem %s1, 8
  %7 = vst [vmem:[%s6] sm:$0xff] %v4

// kernel: tile.74
$region0: #{tile.74}
  %s0 = inlined_call_operand.vmem [shape: f32[16,16], index: 0, kind: input, shape index: {}]
  %s1 = inlined_call_operand.vmem [shape: f32[1,256], index: 1, kind: output, shape index: {}]
  $region1: #{tile.74} parent=0
    #allocation0 [shape = 'u8[8192]{0}', space=vmem, size = 0x2000, scoped, tag = 'scoped mem for output reshape']
    %s2 = smov 3
    %v3 = vld [vmem:[%s0] ss:$8 sm:%s2]
    %vm4 = vcmask 130048
    %5 = vst.msk [vmem:[#allocation0] ss:$8 sm:$0x3] %vm4, %v3
    %s6 = scalar_lea.vmem %s0, 7
    %s7 = smov 3
    %v8 = vld [vmem:[%s6] ss:$8 sm:%s7]
    %9 = vrot.lane.b32.xlu0 %v8, 112
    %v10 = vpop.permute.xlu0 %9
    %vm11 = vcmask 1048448
    %12 = vst.msk [vmem:[#allocation0] ss:$8 sm:$0x3] %vm11, %v10
    %s13 = scalar_lea.vmem %s0, 6
    %s14 = smov 3
    %v15 = vld [vmem:[%s13] ss:$8 sm:%s14]
    %16 = vrot.lane.b32.xlu0 %v15, 96
    %v17 = vpop.permute.xlu0 %16
    %vm18 = vcmask 917248
    %19 = vst.msk [vmem:[#allocation0] ss:$8 sm:$0x3] %vm18, %v17
    %s20 = scalar_lea.vmem %s0, 5
    %s21 = smov 3
    %v22 = vld [vmem:[%s20] ss:$8 sm:%s21]
    %23 = vrot.lane.b32.xlu0 %v22, 80
    %v24 = vpop.permute.xlu0 %23
    %vm25 = vcmask 786048
    %26 = vst.msk [vmem:[#allocation0] ss:$8 sm:$0x3] %vm25, %v24
    %s27 = scalar_lea.vmem %s0, 4
    %s28 = smov 3
    %v29 = vld [vmem:[%s27] ss:$8 sm:%s28]
    %30 = vrot.lane.b32.xlu0 %v29, 64
    %v31 = vpop.permute.xlu0 %30
    %vm32 = vcmask 654848
    %33 = vst.msk [vmem:[#allocation0] ss:$8 sm:$0x3] %vm32, %v31
    %s34 = scalar_lea.vmem %s0, 3
    %s35 = smov 3
    %v36 = vld [vmem:[%s34] ss:$8 sm:%s35]
    %37 = vrot.lane.b32.xlu0 %v36, 48
    %v38 = vpop.permute.xlu0 %37
    %vm39 = vcmask 523648
    %40 = vst.msk [vmem:[#allocation0] ss:$8 sm:$0x3] %vm39, %v38
    %s41 = scalar_lea.vmem %s0, 2
    %s42 = smov 3
    %v43 = vld [vmem:[%s41] ss:$8 sm:%s42]
    %44 = vrot.lane.b32.xlu0 %v43, 32
    %v45 = vpop.permute.xlu0 %44
    %vm46 = vcmask 392448
    %47 = vst.msk [vmem:[#allocation0] ss:$8 sm:$0x3] %vm46, %v45
    %s48 = scalar_lea.vmem %s0, 1
    %s49 = smov 3
    %v50 = vld [vmem:[%s48] ss:$8 sm:%s49]
    %51 = vrot.lane.b32.xlu0 %v50, 16
    %v52 = vpop.permute.xlu0 %51
    %vm53 = vcmask 261248
    %54 = vst.msk [vmem:[#allocation0] ss:$8 sm:$0x3] %vm53, %v52
    %s56 = sshllo.u32 0, 1
    %v58 = vld [vmem:[#allocation0] sm:%s56]
    %s59 = sshllo.u32 0, 1
    %60 = vst [vmem:[%s1] sm:%s59] %v58
    %s61 = scalar_lea.vmem [#allocation0], 8
    %v62 = vld [vmem:[%s61] sm:%s56]
    %s63 = sshllo.u32 0, 1
    %s64 = scalar_lea.vmem %s1, 1
    %65 = vst [vmem:[%s64] sm:%s63] %v62

// kernel: de_conv_forward.6
$region0: #{de_conv_forward.6}
  #allocation0 [shape = 'u32[]', space=smem, size = 0x4, offset = 0x4, fixed_abs, tag = 'smem constant byte address 0x4 - core index']
  #allocation1 [shape = 'u32[144,128]{1,0:T(1,128)}', space=vmem, size = 0x12000, scoped, tag = 'internal scratch']
  %s0 = inlined_call_operand.vmem [shape: f32[2,16,256], index: 0, kind: input, shape index: {}]
  %s1 = inlined_call_operand.vmem [shape: f32[2,1,256], index: 1, kind: output, shape index: {0}]
  %s2 = inlined_call_operand.vmem [shape: f32[2,1,256], index: 2, kind: output, shape index: {1}]
  %3 = xla_tuple %s1, %s2
  %s4 = sld [smem:[#allocation0]]
  $region45: #{de_conv_forward.6} parent=0
    _
  %s6 = ssub.s32 1, %s4
  %s7 = scalar_select 0, %s6, %s4
  loop: start=0, step=1, limit=4
  $region2: #{de_conv_forward.6} parent=0 // loop_pre_header
    _
  $region3: #{de_conv_forward.6} parent=0 // loop_header
    %s9 = sphi 0, %s13
    %p10 = scmp.ge.s32.totalorder %s9, 4
    %s19 = sphi 0, %s21
    %s22 = sphi 0, %s19
    %s23 = sphi 0, %s22
    %s39 = sphi 0, %s23
    %s45 = sphi 0, %s47
    %s48 = sphi 0, %s45
    %s49 = sphi 0, %s48
    %s65 = sphi 0, %s49
    %s71 = sphi 0, %s73
    %s74 = sphi 0, %s71
    %s75 = sphi 0, %s74
    %s91 = sphi 0, %s75
  $region4: #{de_conv_forward.6} parent=0 // loop_header_branch
    %12 = sbr.rel (%p10) target = $region8
  $region5: #{de_conv_forward.6} parent=0 // loop_body
    %s14 = ssub.s32 %s9, 1
    %s15 = ssub.s32 %s9, 2
    %s16 = sadd.s32 %s9, 1
    %s17 = ssub.s32 %s9, %s16
    %p18 = scmp.eq.s32.totalorder %s17, 0
    %s20 = sadd.s32 %s19, 1
    %s21 = scalar_select %p18, %s19, %s20
    %p24 = pneg %p18
    %p25 = scmp.eq.s32.totalorder %s9, 1
    %p26 = por %p24, %p25
    %p27 = scmp.ne.s32.totalorder %s19, %s22
    %p28 = scmp.eq.s32.totalorder %s9, 0
    %p29 = por %p27, %p28
    %p30 = scmp.ne.s32.totalorder %s19, %s22
    %p31 = scmp.eq.s32.totalorder %s14, 1
    %p32 = por %p30, %p31
    %p33 = scmp.ne.s32.totalorder %s22, %s23
    %p34 = scmp.eq.s32.totalorder %s14, 0
    %p35 = por %p33, %p34
    %p36 = scmp.ne.s32.totalorder %s22, %s23
    %p37 = scmp.eq.s32.totalorder %s15, 1
    %p38 = por %p36, %p37
    %p40 = scmp.ne.s32.totalorder %s23, %s39
    %p41 = scmp.eq.s32.totalorder %s15, 0
    %p42 = por %p40, %p41
    %s43 = ssub.s32 %s9, %s16
    %p44 = scmp.eq.s32.totalorder %s43, 0
    %s46 = sadd.s32 %s45, 1
    %s47 = scalar_select %p44, %s45, %s46
    %p50 = pneg %p44
    %p51 = scmp.eq.s32.totalorder %s9, 1
    %p52 = por %p50, %p51
    %p53 = scmp.ne.s32.totalorder %s45, %s48
    %p54 = scmp.eq.s32.totalorder %s9, 0
    %p55 = por %p53, %p54
    %p56 = scmp.ne.s32.totalorder %s45, %s48
    %p57 = scmp.eq.s32.totalorder %s14, 1
    %p58 = por %p56, %p57
    %p59 = scmp.ne.s32.totalorder %s48, %s49
    %p60 = scmp.eq.s32.totalorder %s14, 0
    %p61 = por %p59, %p60
    %p62 = scmp.ne.s32.totalorder %s48, %s49
    %p63 = scmp.eq.s32.totalorder %s15, 1
    %p64 = por %p62, %p63
    %p66 = scmp.ne.s32.totalorder %s49, %s65
    %p67 = scmp.eq.s32.totalorder %s15, 0
    %p68 = por %p66, %p67
    %s69 = ssub.s32 %s9, %s16
    %p70 = scmp.eq.s32.totalorder %s69, 0
    %s72 = sadd.s32 %s71, 1
    %s73 = scalar_select %p70, %s71, %s72
    %p76 = pneg %p70
    %p77 = scmp.eq.s32.totalorder %s9, 1
    %p78 = por %p76, %p77
    %p79 = scmp.ne.s32.totalorder %s71, %s74
    %p80 = scmp.eq.s32.totalorder %s9, 0
    %p81 = por %p79, %p80
    %p82 = scmp.ne.s32.totalorder %s71, %s74
    %p83 = scmp.eq.s32.totalorder %s14, 1
    %p84 = por %p82, %p83
    %p85 = scmp.ne.s32.totalorder %s74, %s75
    %p86 = scmp.eq.s32.totalorder %s14, 0
    %p87 = por %p85, %p86
    %p88 = scmp.ne.s32.totalorder %s74, %s75
    %p89 = scmp.eq.s32.totalorder %s15, 1
    %p90 = por %p88, %p89
    %p92 = scmp.ne.s32.totalorder %s75, %s91
    %p93 = scmp.eq.s32.totalorder %s15, 0
    %p94 = por %p92, %p93
    %p95 = scmp.le.s32.totalorder 1, %s9
    %p96 = scmp.lt.s32.totalorder %s9, 3
    %p97 = pnand %p95, %p96
    %p98 = pneg %p97
    // Predicated region
    $region9: #{de_conv_forward.6} parent=5 // pred_check
      _
    $region10: #{de_conv_forward.6} parent=5 // pred_check_branch
      %100 = sbr.rel (%p97) target = $region12
    $region11: #{de_conv_forward.6} parent=5 // pred_region
      %s101 = ssub.s32 %s9, 1
    $region12: #{de_conv_forward.6} parent=5 // pred_fallthru
      _
    %p102 = scmp.lt.s32.totalorder %s9, 2
    // Predicated region
    $region13: #{de_conv_forward.6} parent=5 // pred_check
      %p103 = pneg %p102
    $region14: #{de_conv_forward.6} parent=5 // pred_check_branch
      %105 = sbr.rel (%p103) target = $region16
    $region15: #{de_conv_forward.6} parent=5 // pred_region
      // Predicated region
      $region17: #{de_conv_forward.6} parent=15 // pred_check
        %p106 = pneg %p29
      $region18: #{de_conv_forward.6} parent=15 // pred_check_branch
        %108 = sbr.rel (%p106) target = $region20
      $region19: #{de_conv_forward.6} parent=15 // pred_region
        %p109 = scmp.lt.s32.totalorder %s9, 1
        %s110 = scalar_select %p109, %s9, 1
        %s111 = smul.addr %s110, 4
        %s112 = smul.addr %s111, 8
        %s113 = scalar_lea.vmem %s0, %s112
      $region20: #{de_conv_forward.6} parent=15 // pred_fallthru
        _
    $region16: #{de_conv_forward.6} parent=5 // pred_fallthru
      _
    %p114 = scmp.le.s32.totalorder 1, %s9
    %p115 = scmp.lt.s32.totalorder %s9, 3
    %p116 = pnand %p114, %p115
    %p117 = pneg %p116
    // Predicated region
    $region21: #{de_conv_forward.6} parent=5 // pred_check
      _
    $region22: #{de_conv_forward.6} parent=5 // pred_check_branch
      %119 = sbr.rel (%p116) target = $region24
    $region23: #{de_conv_forward.6} parent=5 // pred_region
      %s120 = ssub.s32 %s9, 1
      %p121 = scmp.lt.s32.totalorder %s14, 1
      %s122 = scalar_select %p121, %s14, 1
      %s123 = smul.addr %s122, 4
      %s124 = smul.addr %s123, 8
      %s125 = scalar_lea.vmem %s0, %s124
      %p126 = pneg %p35
      %p127 = pneg %p32
      %p128 = pneg %p61
      %p129 = pneg %p58
      %p130 = scmp.lt.s32.totalorder %s14, 1
      %s131 = scalar_select %p130, %s14, 1
      %s132 = smul.addr %s131, 2
      %s133 = scalar_lea.vmem %s1, %s132
      %p134 = pneg %p87
      %p135 = pneg %p84
      %p136 = scmp.lt.s32.totalorder %s14, 1
      %s137 = scalar_select %p136, %s14, 1
      %s138 = smul.addr %s137, 2
      %s139 = scalar_lea.vmem %s2, %s138
      %p140 = scmp.lt.s32.totalorder %s14, 1
      %s141 = scalar_select %p140, %s14, 1
      %s142 = smul.addr %s141, 4
      %s143 = smul.addr %s142, 8
      %s144 = scalar_lea.vmem %s0, %s143
      %p145 = scmp.lt.s32.totalorder %s14, 1
      %s146 = scalar_select %p145, %s14, 1
      %s147 = smul.addr %s146, 2
      %s148 = scalar_lea.vmem %s1, %s147
      %p149 = scmp.lt.s32.totalorder %s14, 1
      %s150 = scalar_select %p149, %s14, 1
      %s151 = smul.addr %s150, 2
      %s152 = scalar_lea.vmem %s2, %s151
      %v153 = vld [vmem:[%s144] sm:$0xff]
      %v154 = vld [vmem:[%s144 + $0x8] sm:$0xff]
      %v155 = vld [vmem:[%s144 + $0x10] sm:$0xff]
      %v156 = vld [vmem:[%s144 + $0x18] sm:$0xff]
      %v157 = vadd.f32 %v153, %v155
      %v158 = vrot.slane %v157, 4
      %v159 = vadd.f32 %v157, %v158
      %v160 = vrot.slane %v159, 2
      %v161 = vadd.f32 %v159, %v160
      %v162 = vrot.slane %v161, 1
      %v163 = vadd.f32 %v161, %v162
      %v164 = vadd.f32 %v154, %v156
      %v165 = vrot.slane %v164, 4
      %v166 = vadd.f32 %v164, %v165
      %v167 = vrot.slane %v166, 2
      %v168 = vadd.f32 %v166, %v167
      %v169 = vrot.slane %v168, 1
      %v170 = vadd.f32 %v168, %v169
      %v173 = vcombine.low %v163, %v170
      %v175 = vunpack.c.l.s4 1966171168
      %v176 = vunpack.c.0.s8 %v175
      %v177 = vlaneseq
      %v178 = vshrl.u32 %v177, 7
      %v179 = vsub.s32 %v176, %v178
      %v180 = vrot.slane %v173, %v179
      %v182 = vunpack.c.l.s4 1966171168
      %v183 = vunpack.c.0.s8 %v182
      %v184 = vlaneseq
      %v185 = vshrl.u32 %v184, 7
      %v186 = vsub.s32 %v183, %v185
      %v187 = vrot.slane %v180, %v186
      %v189 = vlaneseq
      %vm190 = vcmp.ge.s32.totalorder %v189, 0
      %vm191 = vcmp.lt.s32.totalorder %v189, 256
      %vm192 = vmand %vm190, %vm191
      %193 = vst.msk [vmem:[%s148] sm:$0x3] %vm192, %v187
      %v194 = vmul.f32 %v153, %v153
      %v195 = vmul.f32 %v154, %v154
      %v196 = vmul.f32 %v155, %v155
      %v197 = vmul.f32 %v156, %v156
      %v198 = vadd.f32 %v194, %v196
      %v199 = vrot.slane %v198, 4
      %v200 = vadd.f32 %v198, %v199
      %v201 = vrot.slane %v200, 2
      %v202 = vadd.f32 %v200, %v201
      %v203 = vrot.slane %v202, 1
      %v204 = vadd.f32 %v202, %v203
      %v205 = vadd.f32 %v195, %v197
      %v206 = vrot.slane %v205, 4
      %v207 = vadd.f32 %v205, %v206
      %v208 = vrot.slane %v207, 2
      %v209 = vadd.f32 %v207, %v208
      %v210 = vrot.slane %v209, 1
      %v211 = vadd.f32 %v209, %v210
      %v214 = vcombine.low %v204, %v211
      %v216 = vunpack.c.l.s4 1966171168
      %v217 = vunpack.c.0.s8 %v216
      %v218 = vlaneseq
      %v219 = vshrl.u32 %v218, 7
      %v220 = vsub.s32 %v217, %v219
      %v221 = vrot.slane %v214, %v220
      %v223 = vunpack.c.l.s4 1966171168
      %v224 = vunpack.c.0.s8 %v223
      %v225 = vlaneseq
      %v226 = vshrl.u32 %v225, 7
      %v227 = vsub.s32 %v224, %v226
      %v228 = vrot.slane %v221, %v227
      %230 = vst.msk [vmem:[%s152] sm:$0x3] %vm192, %v228
      %p231 = scmp.lt.s32.totalorder %s14, 1
      %s232 = scalar_select %p231, %s14, 1
      %s233 = smul.addr %s232, 2
      %s234 = scalar_lea.vmem %s1, %s233
      %p235 = scmp.lt.s32.totalorder %s14, 1
      %s236 = scalar_select %p235, %s14, 1
      %s237 = smul.addr %s236, 2
      %s238 = scalar_lea.vmem %s2, %s237
      // Predicated region
      $region25: #{de_conv_forward.6} parent=23 // pred_check
        %p239 = pneg %p58
      $region26: #{de_conv_forward.6} parent=23 // pred_check_branch
        %241 = sbr.rel (%p239) target = $region28
      $region27: #{de_conv_forward.6} parent=23 // pred_region
        _
      $region28: #{de_conv_forward.6} parent=23 // pred_fallthru
        _
      // Predicated region
      $region29: #{de_conv_forward.6} parent=23 // pred_check
        %p242 = pneg %p84
      $region30: #{de_conv_forward.6} parent=23 // pred_check_branch
        %244 = sbr.rel (%p242) target = $region32
      $region31: #{de_conv_forward.6} parent=23 // pred_region
        _
      $region32: #{de_conv_forward.6} parent=23 // pred_fallthru
        _
    $region24: #{de_conv_forward.6} parent=5 // pred_fallthru
      _
    %p245 = scmp.le.s32.totalorder 2, %s9
    // Predicated region
    $region33: #{de_conv_forward.6} parent=5 // pred_check
      %p246 = pneg %p245
    $region34: #{de_conv_forward.6} parent=5 // pred_check_branch
      %248 = sbr.rel (%p246) target = $region36
    $region35: #{de_conv_forward.6} parent=5 // pred_region
      %s249 = ssub.s32 %s9, 2
      // Predicated region
      $region37: #{de_conv_forward.6} parent=35 // pred_check
        %p250 = pneg %p64
      $region38: #{de_conv_forward.6} parent=35 // pred_check_branch
        %252 = sbr.rel (%p250) target = $region40
      $region39: #{de_conv_forward.6} parent=35 // pred_region
        %p253 = scmp.lt.s32.totalorder %s15, 1
        %s254 = scalar_select %p253, %s15, 1
        %s255 = smul.addr %s254, 2
        %s256 = scalar_lea.vmem %s1, %s255
      $region40: #{de_conv_forward.6} parent=35 // pred_fallthru
        _
      // Predicated region
      $region41: #{de_conv_forward.6} parent=35 // pred_check
        %p257 = pneg %p90
      $region42: #{de_conv_forward.6} parent=35 // pred_check_branch
        %259 = sbr.rel (%p257) target = $region44
      $region43: #{de_conv_forward.6} parent=35 // pred_region
        %p260 = scmp.lt.s32.totalorder %s15, 1
        %s261 = scalar_select %p260, %s15, 1
        %s262 = smul.addr %s261, 2
        %s263 = scalar_lea.vmem %s2, %s262
      $region44: #{de_conv_forward.6} parent=35 // pred_fallthru
        _
    $region36: #{de_conv_forward.6} parent=5 // pred_fallthru
      _
  $region6: #{de_conv_forward.6} parent=0 // loop_footer
    %s13 = sadd.s32 1, %s9
  $region7: #{de_conv_forward.6} parent=0 // loop_footer_branch
    %8 = sbr.rel target = $region3
  $region8: #{de_conv_forward.6} parent=0 // loop_exit
    _

// kernel: tile.58
$region0: #{tile.58}
  #allocation0 [shape = 's32[1]{0}', space=sflag, size = 0x4, scoped, tag = 'scoped memory for tile.58']
  %s0 = inlined_call_operand.vmem [shape: f32[8], index: 0, kind: input, shape index: {}]
  %s1 = inlined_call_operand.vmem [shape: f32[16,8], index: 1, kind: output, shape index: {}]
  // Predicated region
  $region2: #{tile.58} parent=0 // pred_check
    _
  $region3: #{tile.58} parent=0 // pred_check_branch
    %3 = sbr.rel (0) target = $region5
  $region4: #{tile.58} parent=0 // pred_region
    _
  $region5: #{tile.58} parent=0 // pred_fallthru
    _
  %v4 = vld [vmem:[%s0] ss:$0 sm:$0xff]
  %5 = vst [vmem:[%s1] sm:$0xff] %v4
  %s6 = scalar_lea.vmem %s1, 8
  %7 = vst [vmem:[%s6] sm:$0xff] %v4

// kernel: tile.59
$region0: #{tile.59}
  %s0 = inlined_call_operand.vmem [shape: f32[16,8], index: 0, kind: input, shape index: {}]
  %s1 = inlined_call_operand.vmem [shape: f32[1,128], index: 1, kind: output, shape index: {}]
  $region1: #{tile.59} parent=0
    #allocation0 [shape = 'u8[4096]{0}', space=vmem, size = 0x1000, scoped, tag = 'scoped mem for output reshape']
    %v2 = vld [vmem:[%s0] sm:$0x1]
    %vm3 = vcmask 64512
    %4 = vst.msk [vmem:[#allocation0] sm:$0x1] %vm3, %v2
    %s5 = scalar_lea.vmem %s0, 15
    %v6 = vld [vmem:[%s5] sm:$0x1]
    %7 = vrot.lane.b32.xlu0 %v6, 120
    %v8 = vpop.permute.xlu0 %7
    %vm9 = vcmask 1048512
    %10 = vst.msk [vmem:[#allocation0] sm:$0x1] %vm9, %v8
    %s11 = scalar_lea.vmem %s0, 14
    %v12 = vld [vmem:[%s11] sm:$0x1]
    %13 = vrot.lane.b32.xlu0 %v12, 112
    %v14 = vpop.permute.xlu0 %13
    %vm15 = vcmask 982912
    %16 = vst.msk [vmem:[#allocation0] sm:$0x1] %vm15, %v14
    %s17 = scalar_lea.vmem %s0, 13
    %v18 = vld [vmem:[%s17] sm:$0x1]
    %19 = vrot.lane.b32.xlu0 %v18, 104
    %v20 = vpop.permute.xlu0 %19
    %vm21 = vcmask 917312
    %22 = vst.msk [vmem:[#allocation0] sm:$0x1] %vm21, %v20
    %s23 = scalar_lea.vmem %s0, 12
    %v24 = vld [vmem:[%s23] sm:$0x1]
    %25 = vrot.lane.b32.xlu0 %v24, 96
    %v26 = vpop.permute.xlu0 %25
    %vm27 = vcmask 851712
    %28 = vst.msk [vmem:[#allocation0] sm:$0x1] %vm27, %v26
    %s29 = scalar_lea.vmem %s0, 11
    %v30 = vld [vmem:[%s29] sm:$0x1]
    %31 = vrot.lane.b32.xlu0 %v30, 88
    %v32 = vpop.permute.xlu0 %31
    %vm33 = vcmask 786112
    %34 = vst.msk [vmem:[#allocation0] sm:$0x1] %vm33, %v32
    %s35 = scalar_lea.vmem %s0, 10
    %v36 = vld [vmem:[%s35] sm:$0x1]
    %37 = vrot.lane.b32.xlu0 %v36, 80
    %v38 = vpop.permute.xlu0 %37
    %vm39 = vcmask 720512
    %40 = vst.msk [vmem:[#allocation0] sm:$0x1] %vm39, %v38
    %s41 = scalar_lea.vmem %s0, 9
    %v42 = vld [vmem:[%s41] sm:$0x1]
    %43 = vrot.lane.b32.xlu0 %v42, 72
    %v44 = vpop.permute.xlu0 %43
    %vm45 = vcmask 654912
    %46 = vst.msk [vmem:[#allocation0] sm:$0x1] %vm45, %v44
    %s47 = scalar_lea.vmem %s0, 8
    %v48 = vld [vmem:[%s47] sm:$0x1]
    %49 = vrot.lane.b32.xlu0 %v48, 64
    %v50 = vpop.permute.xlu0 %49
    %vm51 = vcmask 589312
    %52 = vst.msk [vmem:[#allocation0] sm:$0x1] %vm51, %v50
    %s53 = scalar_lea.vmem %s0, 7
    %v54 = vld [vmem:[%s53] sm:$0x1]
    %55 = vrot.lane.b32.xlu0 %v54, 56
    %v56 = vpop.permute.xlu0 %55
    %vm57 = vcmask 523712
    %58 = vst.msk [vmem:[#allocation0] sm:$0x1] %vm57, %v56
    %s59 = scalar_lea.vmem %s0, 6
    %v60 = vld [vmem:[%s59] sm:$0x1]
    %61 = vrot.lane.b32.xlu0 %v60, 48
    %v62 = vpop.permute.xlu0 %61
    %vm63 = vcmask 458112
    %64 = vst.msk [vmem:[#allocation0] sm:$0x1] %vm63, %v62
    %s65 = scalar_lea.vmem %s0, 5
    %v66 = vld [vmem:[%s65] sm:$0x1]
    %67 = vrot.lane.b32.xlu0 %v66, 40
    %v68 = vpop.permute.xlu0 %67
    %vm69 = vcmask 392512
    %70 = vst.msk [vmem:[#allocation0] sm:$0x1] %vm69, %v68
    %s71 = scalar_lea.vmem %s0, 4
    %v72 = vld [vmem:[%s71] sm:$0x1]
    %73 = vrot.lane.b32.xlu0 %v72, 32
    %v74 = vpop.permute.xlu0 %73
    %vm75 = vcmask 326912
    %76 = vst.msk [vmem:[#allocation0] sm:$0x1] %vm75, %v74
    %s77 = scalar_lea.vmem %s0, 3
    %v78 = vld [vmem:[%s77] sm:$0x1]
    %79 = vrot.lane.b32.xlu0 %v78, 24
    %v80 = vpop.permute.xlu0 %79
    %vm81 = vcmask 261312
    %82 = vst.msk [vmem:[#allocation0] sm:$0x1] %vm81, %v80
    %s83 = scalar_lea.vmem %s0, 2
    %v84 = vld [vmem:[%s83] sm:$0x1]
    %85 = vrot.lane.b32.xlu0 %v84, 16
    %v86 = vpop.permute.xlu0 %85
    %vm87 = vcmask 195712
    %88 = vst.msk [vmem:[#allocation0] sm:$0x1] %vm87, %v86
    %s89 = scalar_lea.vmem %s0, 1
    %v90 = vld [vmem:[%s89] sm:$0x1]
    %91 = vrot.lane.b32.xlu0 %v90, 8
    %v92 = vpop.permute.xlu0 %91
    %vm93 = vcmask 130112
    %94 = vst.msk [vmem:[#allocation0] sm:$0x1] %vm93, %v92
    %s96 = sshllo.u32 0, 1
    %v98 = vld [vmem:[#allocation0] sm:%s96]
    %s99 = sshllo.u32 0, 1
    %100 = vst [vmem:[%s1] sm:%s99] %v98

// kernel: de_conv_forward.7
$region0: #{de_conv_forward.7}
  #allocation0 [shape = 'u32[]', space=smem, size = 0x4, offset = 0x4, fixed_abs, tag = 'smem constant byte address 0x4 - core index']
  #allocation1 [shape = 'u32[144,128]{1,0:T(1,128)}', space=vmem, size = 0x12000, scoped, tag = 'internal scratch']
  #allocation2 [shape = 'f32[18,256]{1,0:T(8,128)}', space=vmem, size = 0x6000, scoped, tag = 'scratch operand']
  %s0 = inlined_call_operand.vmem [shape: f32[2,16,256], index: 0, kind: input, shape index: {}]
  %s1 = inlined_call_operand.vmem [shape: f32[1,256], index: 1, kind: input, shape index: {}]
  %s2 = inlined_call_operand.vmem [shape: f32[1,256], index: 2, kind: input, shape index: {}]
  %s3 = inlined_call_operand.vmem [shape: bf16[3,256,128], index: 3, kind: input, shape index: {}]
  %s4 = inlined_call_operand.vmem [shape: f32[1,128], index: 4, kind: input, shape index: {}]
  %s5 = inlined_call_operand.vmem [shape: f32[2,16,128], index: 5, kind: output, shape index: {0}]
  %s6 = inlined_call_operand.vmem [shape: f32[2,1,128], index: 6, kind: output, shape index: {1}]
  %s7 = inlined_call_operand.vmem [shape: f32[2,1,128], index: 7, kind: output, shape index: {2}]
  %8 = xla_tuple %s5, %s6, %s7
  %s9 = sld [smem:[#allocation0]]
  $region69: #{de_conv_forward.7} parent=0
    _
  %s11 = ssub.s32 1, %s9
  %s12 = scalar_select 0, %s11, %s9
  loop: start=0, step=1, limit=4
  $region2: #{de_conv_forward.7} parent=0 // loop_pre_header
    _
  $region3: #{de_conv_forward.7} parent=0 // loop_header
    %s14 = sphi 0, %s18
    %p15 = scmp.ge.s32.totalorder %s14, 4
    %s24 = sphi 0, %s26
    %s27 = sphi 0, %s24
    %s28 = sphi 0, %s27
    %s44 = sphi 0, %s28
    %s48 = sphi 0, %s48
    %s50 = sphi 0, %s48
    %s51 = sphi 0, %s50
    %s65 = sphi 0, %s51
    %s69 = sphi 0, %s69
    %s71 = sphi 0, %s69
    %s72 = sphi 0, %s71
    %s86 = sphi 0, %s72
    %s90 = sphi 0, %s90
    %s92 = sphi 0, %s90
    %s93 = sphi 0, %s92
    %s107 = sphi 0, %s93
    %s111 = sphi 0, %s111
    %s113 = sphi 0, %s111
    %s114 = sphi 0, %s113
    %s128 = sphi 0, %s114
    %s134 = sphi 0, %s136
    %s137 = sphi 0, %s134
    %s138 = sphi 0, %s137
    %s154 = sphi 0, %s138
    %s160 = sphi 0, %s162
    %s163 = sphi 0, %s160
    %s164 = sphi 0, %s163
    %s180 = sphi 0, %s164
    %s186 = sphi 0, %s188
    %s189 = sphi 0, %s186
    %s190 = sphi 0, %s189
    %s206 = sphi 0, %s190
  $region4: #{de_conv_forward.7} parent=0 // loop_header_branch
    %17 = sbr.rel (%p15) target = $region8
  $region5: #{de_conv_forward.7} parent=0 // loop_body
    %s19 = ssub.s32 %s14, 1
    %s20 = ssub.s32 %s14, 2
    %s21 = sadd.s32 %s14, 1
    %s22 = ssub.s32 %s14, %s21
    %p23 = scmp.eq.s32.totalorder %s22, 0
    %s25 = sadd.s32 %s24, 1
    %s26 = scalar_select %p23, %s24, %s25
    %p29 = pneg %p23
    %p30 = scmp.eq.s32.totalorder %s14, 1
    %p31 = por %p29, %p30
    %p32 = scmp.ne.s32.totalorder %s24, %s27
    %p33 = scmp.eq.s32.totalorder %s14, 0
    %p34 = por %p32, %p33
    %p35 = scmp.ne.s32.totalorder %s24, %s27
    %p36 = scmp.eq.s32.totalorder %s19, 1
    %p37 = por %p35, %p36
    %p38 = scmp.ne.s32.totalorder %s27, %s28
    %p39 = scmp.eq.s32.totalorder %s19, 0
    %p40 = por %p38, %p39
    %p41 = scmp.ne.s32.totalorder %s27, %s28
    %p42 = scmp.eq.s32.totalorder %s20, 1
    %p43 = por %p41, %p42
    %p45 = scmp.ne.s32.totalorder %s28, %s44
    %p46 = scmp.eq.s32.totalorder %s20, 0
    %p47 = por %p45, %p46
    %s49 = sadd.s32 %s48, 1
    %p52 = scmp.eq.s32.totalorder %s14, 1
    %p53 = scmp.ne.s32.totalorder %s48, %s50
    %p54 = scmp.eq.s32.totalorder %s14, 0
    %p55 = por %p53, %p54
    %p56 = scmp.ne.s32.totalorder %s48, %s50
    %p57 = scmp.eq.s32.totalorder %s19, 1
    %p58 = por %p56, %p57
    %p59 = scmp.ne.s32.totalorder %s50, %s51
    %p60 = scmp.eq.s32.totalorder %s19, 0
    %p61 = por %p59, %p60
    %p62 = scmp.ne.s32.totalorder %s50, %s51
    %p63 = scmp.eq.s32.totalorder %s20, 1
    %p64 = por %p62, %p63
    %p66 = scmp.ne.s32.totalorder %s51, %s65
    %p67 = scmp.eq.s32.totalorder %s20, 0
    %p68 = por %p66, %p67
    %s70 = sadd.s32 %s69, 1
    %p73 = scmp.eq.s32.totalorder %s14, 1
    %p74 = scmp.ne.s32.totalorder %s69, %s71
    %p75 = scmp.eq.s32.totalorder %s14, 0
    %p76 = por %p74, %p75
    %p77 = scmp.ne.s32.totalorder %s69, %s71
    %p78 = scmp.eq.s32.totalorder %s19, 1
    %p79 = por %p77, %p78
    %p80 = scmp.ne.s32.totalorder %s71, %s72
    %p81 = scmp.eq.s32.totalorder %s19, 0
    %p82 = por %p80, %p81
    %p83 = scmp.ne.s32.totalorder %s71, %s72
    %p84 = scmp.eq.s32.totalorder %s20, 1
    %p85 = por %p83, %p84
    %p87 = scmp.ne.s32.totalorder %s72, %s86
    %p88 = scmp.eq.s32.totalorder %s20, 0
    %p89 = por %p87, %p88
    %s91 = sadd.s32 %s90, 1
    %p94 = scmp.eq.s32.totalorder %s14, 1
    %p95 = scmp.ne.s32.totalorder %s90, %s92
    %p96 = scmp.eq.s32.totalorder %s14, 0
    %p97 = por %p95, %p96
    %p98 = scmp.ne.s32.totalorder %s90, %s92
    %p99 = scmp.eq.s32.totalorder %s19, 1
    %p100 = por %p98, %p99
    %p101 = scmp.ne.s32.totalorder %s92, %s93
    %p102 = scmp.eq.s32.totalorder %s19, 0
    %p103 = por %p101, %p102
    %p104 = scmp.ne.s32.totalorder %s92, %s93
    %p105 = scmp.eq.s32.totalorder %s20, 1
    %p106 = por %p104, %p105
    %p108 = scmp.ne.s32.totalorder %s93, %s107
    %p109 = scmp.eq.s32.totalorder %s20, 0
    %p110 = por %p108, %p109
    %s112 = sadd.s32 %s111, 1
    %p115 = scmp.eq.s32.totalorder %s14, 1
    %p116 = scmp.ne.s32.totalorder %s111, %s113
    %p117 = scmp.eq.s32.totalorder %s14, 0
    %p118 = por %p116, %p117
    %p119 = scmp.ne.s32.totalorder %s111, %s113
    %p120 = scmp.eq.s32.totalorder %s19, 1
    %p121 = por %p119, %p120
    %p122 = scmp.ne.s32.totalorder %s113, %s114
    %p123 = scmp.eq.s32.totalorder %s19, 0
    %p124 = por %p122, %p123
    %p125 = scmp.ne.s32.totalorder %s113, %s114
    %p126 = scmp.eq.s32.totalorder %s20, 1
    %p127 = por %p125, %p126
    %p129 = scmp.ne.s32.totalorder %s114, %s128
    %p130 = scmp.eq.s32.totalorder %s20, 0
    %p131 = por %p129, %p130
    %s132 = ssub.s32 %s14, %s21
    %p133 = scmp.eq.s32.totalorder %s132, 0
    %s135 = sadd.s32 %s134, 1
    %s136 = scalar_select %p133, %s134, %s135
    %p139 = pneg %p133
    %p140 = scmp.eq.s32.totalorder %s14, 1
    %p141 = por %p139, %p140
    %p142 = scmp.ne.s32.totalorder %s134, %s137
    %p143 = scmp.eq.s32.totalorder %s14, 0
    %p144 = por %p142, %p143
    %p145 = scmp.ne.s32.totalorder %s134, %s137
    %p146 = scmp.eq.s32.totalorder %s19, 1
    %p147 = por %p145, %p146
    %p148 = scmp.ne.s32.totalorder %s137, %s138
    %p149 = scmp.eq.s32.totalorder %s19, 0
    %p150 = por %p148, %p149
    %p151 = scmp.ne.s32.totalorder %s137, %s138
    %p152 = scmp.eq.s32.totalorder %s20, 1
    %p153 = por %p151, %p152
    %p155 = scmp.ne.s32.totalorder %s138, %s154
    %p156 = scmp.eq.s32.totalorder %s20, 0
    %p157 = por %p155, %p156
    %s158 = ssub.s32 %s14, %s21
    %p159 = scmp.eq.s32.totalorder %s158, 0
    %s161 = sadd.s32 %s160, 1
    %s162 = scalar_select %p159, %s160, %s161
    %p165 = pneg %p159
    %p166 = scmp.eq.s32.totalorder %s14, 1
    %p167 = por %p165, %p166
    %p168 = scmp.ne.s32.totalorder %s160, %s163
    %p169 = scmp.eq.s32.totalorder %s14, 0
    %p170 = por %p168, %p169
    %p171 = scmp.ne.s32.totalorder %s160, %s163
    %p172 = scmp.eq.s32.totalorder %s19, 1
    %p173 = por %p171, %p172
    %p174 = scmp.ne.s32.totalorder %s163, %s164
    %p175 = scmp.eq.s32.totalorder %s19, 0
    %p176 = por %p174, %p175
    %p177 = scmp.ne.s32.totalorder %s163, %s164
    %p178 = scmp.eq.s32.totalorder %s20, 1
    %p179 = por %p177, %p178
    %p181 = scmp.ne.s32.totalorder %s164, %s180
    %p182 = scmp.eq.s32.totalorder %s20, 0
    %p183 = por %p181, %p182
    %s184 = ssub.s32 %s14, %s21
    %p185 = scmp.eq.s32.totalorder %s184, 0
    %s187 = sadd.s32 %s186, 1
    %s188 = scalar_select %p185, %s186, %s187
    %p191 = pneg %p185
    %p192 = scmp.eq.s32.totalorder %s14, 1
    %p193 = por %p191, %p192
    %p194 = scmp.ne.s32.totalorder %s186, %s189
    %p195 = scmp.eq.s32.totalorder %s14, 0
    %p196 = por %p194, %p195
    %p197 = scmp.ne.s32.totalorder %s186, %s189
    %p198 = scmp.eq.s32.totalorder %s19, 1
    %p199 = por %p197, %p198
    %p200 = scmp.ne.s32.totalorder %s189, %s190
    %p201 = scmp.eq.s32.totalorder %s19, 0
    %p202 = por %p200, %p201
    %p203 = scmp.ne.s32.totalorder %s189, %s190
    %p204 = scmp.eq.s32.totalorder %s20, 1
    %p205 = por %p203, %p204
    %p207 = scmp.ne.s32.totalorder %s190, %s206
    %p208 = scmp.eq.s32.totalorder %s20, 0
    %p209 = por %p207, %p208
    %p210 = scmp.le.s32.totalorder 1, %s14
    %p211 = scmp.lt.s32.totalorder %s14, 3
    %p212 = pnand %p210, %p211
    %p213 = pneg %p212
    // Predicated region
    $region9: #{de_conv_forward.7} parent=5 // pred_check
      _
    $region10: #{de_conv_forward.7} parent=5 // pred_check_branch
      %215 = sbr.rel (%p212) target = $region12
    $region11: #{de_conv_forward.7} parent=5 // pred_region
      %s216 = ssub.s32 %s14, 1
      // Predicated region
      $region13: #{de_conv_forward.7} parent=11 // pred_check
        %p217 = pneg %p61
      $region14: #{de_conv_forward.7} parent=11 // pred_check_branch
        %219 = sbr.rel (%p217) target = $region16
      $region15: #{de_conv_forward.7} parent=11 // pred_region
        _
      $region16: #{de_conv_forward.7} parent=11 // pred_fallthru
        _
      // Predicated region
      $region17: #{de_conv_forward.7} parent=11 // pred_check
        %p220 = pneg %p82
      $region18: #{de_conv_forward.7} parent=11 // pred_check_branch
        %222 = sbr.rel (%p220) target = $region20
      $region19: #{de_conv_forward.7} parent=11 // pred_region
        _
      $region20: #{de_conv_forward.7} parent=11 // pred_fallthru
        _
      // Predicated region
      $region21: #{de_conv_forward.7} parent=11 // pred_check
        %p223 = pneg %p103
      $region22: #{de_conv_forward.7} parent=11 // pred_check_branch
        %225 = sbr.rel (%p223) target = $region24
      $region23: #{de_conv_forward.7} parent=11 // pred_region
        _
      $region24: #{de_conv_forward.7} parent=11 // pred_fallthru
        _
      // Predicated region
      $region25: #{de_conv_forward.7} parent=11 // pred_check
        %p226 = pneg %p124
      $region26: #{de_conv_forward.7} parent=11 // pred_check_branch
        %228 = sbr.rel (%p226) target = $region28
      $region27: #{de_conv_forward.7} parent=11 // pred_region
        _
      $region28: #{de_conv_forward.7} parent=11 // pred_fallthru
        _
    $region12: #{de_conv_forward.7} parent=5 // pred_fallthru
      _
    %p229 = scmp.lt.s32.totalorder %s14, 2
    // Predicated region
    $region29: #{de_conv_forward.7} parent=5 // pred_check
      %p230 = pneg %p229
    $region30: #{de_conv_forward.7} parent=5 // pred_check_branch
      %232 = sbr.rel (%p230) target = $region32
    $region31: #{de_conv_forward.7} parent=5 // pred_region
      // Predicated region
      $region33: #{de_conv_forward.7} parent=31 // pred_check
        %p233 = pneg %p34
      $region34: #{de_conv_forward.7} parent=31 // pred_check_branch
        %235 = sbr.rel (%p233) target = $region36
      $region35: #{de_conv_forward.7} parent=31 // pred_region
        %p236 = scmp.lt.s32.totalorder %s14, 1
        %s237 = scalar_select %p236, %s14, 1
        %s238 = smul.addr %s237, 4
        %s239 = smul.addr %s238, 8
        %s240 = scalar_lea.vmem %s0, %s239
      $region36: #{de_conv_forward.7} parent=31 // pred_fallthru
        _
    $region32: #{de_conv_forward.7} parent=5 // pred_fallthru
      _
    %p241 = scmp.le.s32.totalorder 1, %s14
    %p242 = scmp.lt.s32.totalorder %s14, 3
    %p243 = pnand %p241, %p242
    %p244 = pneg %p243
    // Predicated region
    $region37: #{de_conv_forward.7} parent=5 // pred_check
      _
    $region38: #{de_conv_forward.7} parent=5 // pred_check_branch
      %246 = sbr.rel (%p243) target = $region40
    $region39: #{de_conv_forward.7} parent=5 // pred_region
      %s247 = ssub.s32 %s14, 1
      %p248 = scmp.lt.s32.totalorder %s19, 1
      %s249 = scalar_select %p248, %s19, 1
      %s250 = smul.addr %s249, 4
      %s251 = smul.addr %s250, 8
      %s252 = scalar_lea.vmem %s0, %s251
      %p253 = pneg %p40
      %p254 = pneg %p37
      %p255 = pneg %p61
      %p256 = pneg %p58
      %p257 = pneg %p82
      %p258 = pneg %p79
      %p259 = pneg %p103
      %p260 = pneg %p100
      %p261 = pneg %p124
      %p262 = pneg %p121
      %p263 = pneg %p150
      %p264 = pneg %p147
      %p265 = scmp.lt.s32.totalorder %s19, 1
      %s266 = scalar_select %p265, %s19, 1
      %s267 = smul.addr %s266, 2
      %s268 = smul.addr %s267, 8
      %s269 = scalar_lea.vmem %s5, %s268
      %p270 = pneg %p176
      %p271 = pneg %p173
      %p272 = scmp.lt.s32.totalorder %s19, 1
      %s273 = scalar_select %p272, %s19, 1
      %s274 = scalar_lea.vmem %s6, %s273
      %p275 = pneg %p202
      %p276 = pneg %p199
      %p277 = scmp.lt.s32.totalorder %s19, 1
      %s278 = scalar_select %p277, %s19, 1
      %s279 = scalar_lea.vmem %s7, %s278
      %p280 = scmp.lt.s32.totalorder %s19, 1
      %s281 = scalar_select %p280, %s19, 1
      %s282 = smul.addr %s281, 4
      %s283 = smul.addr %s282, 8
      %s284 = scalar_lea.vmem %s0, %s283
      %p285 = scmp.lt.s32.totalorder %s19, 1
      %s286 = scalar_select %p285, %s19, 1
      %s287 = smul.addr %s286, 2
      %s288 = smul.addr %s287, 8
      %s289 = scalar_lea.vmem %s5, %s288
      %p290 = scmp.lt.s32.totalorder %s19, 1
      %s291 = scalar_select %p290, %s19, 1
      %s292 = scalar_lea.vmem %s6, %s291
      %p293 = scmp.lt.s32.totalorder %s19, 1
      %s294 = scalar_select %p293, %s19, 1
      %s295 = scalar_lea.vmem %s7, %s294
      %v297 = vld [vmem:[%s284] sm:$0xff]
      %v298 = vld [vmem:[%s284 + $0x8] sm:$0xff]
      %v299 = vld [vmem:[%s284 + $0x10] sm:$0xff]
      %v300 = vld [vmem:[%s284 + $0x18] sm:$0xff]
      %v301 = vld [vmem:[%s1] sm:$0x3]
      %v303 = vlaneseq
      %v304 = vshrl.u32 %v303, 7
      %v305 = vsub.s32 0, %v304
      %v306 = vrot.slane %v301, %v305
      %v307 = vlaneseq
      %v308 = vshrl.u32 %v307, 7
      %v309 = vsub.s32 1, %v308
      %v310 = vrot.slane %v301, %v309
      %v313 = vmul.f32 %v297, %v306
      %v314 = vmul.f32 %v298, %v310
      %v315 = vmul.f32 %v299, %v306
      %v316 = vmul.f32 %v300, %v310
      %v317 = vld [vmem:[%s2] sm:$0x3]
      %v319 = vlaneseq
      %v320 = vshrl.u32 %v319, 7
      %v321 = vsub.s32 0, %v320
      %v322 = vrot.slane %v317, %v321
      %v323 = vlaneseq
      %v324 = vshrl.u32 %v323, 7
      %v325 = vsub.s32 1, %v324
      %v326 = vrot.slane %v317, %v325
      %v329 = vadd.f32 %v313, %v322
      %v330 = vadd.f32 %v314, %v326
      %v331 = vadd.f32 %v315, %v322
      %v332 = vadd.f32 %v316, %v326
      %v333 = vmax.f32 %v329, 0.0
      %v334 = vmax.f32 %v330, 0.0
      %v335 = vmax.f32 %v331, 0.0
      %v336 = vmax.f32 %v332, 0.0
      %v337 = vlaneseq
      %vm338 = vcmp.ge.s32.totalorder %v337, 0
      %vm339 = vcmp.lt.s32.totalorder %v337, 256
      %vm340 = vmand %vm338, %vm339
      %341 = vst.msk [vmem:[#allocation2] ss:$8 sm:$0x3] %vm340, 0.0
      %342 = vst.msk [vmem:[#allocation2] ss:$8 sm:$0x0] %vm340, 0.0
      %s343 = scalar_lea.vmem [#allocation2], 33
      %344 = vst.msk [vmem:[%s343] ss:$8 sm:$0x3] %vm340, 0.0
      %345 = vst.msk [vmem:[%s343] ss:$8 sm:$0x0] %vm340, 0.0
      %vm350 = vcmask 1040384
      %v351 = vrot.slane %v333, 7
      %v352 = vrot.slane %v334, 7
      %v353 = vrot.slane %v335, 7
      %v354 = vsel %vm350, %v351, %v353
      %v355 = vrot.slane %v336, 7
      %v356 = vsel %vm350, %v352, %v355
      %363 = vst [vmem:[#allocation2] sm:$0xfe] %v351
      %364 = vst [vmem:[#allocation2 + $0x8] sm:$0xfe] %v352
      %365 = vst [vmem:[#allocation2 + $0x10] sm:$0xff] %v354
      %366 = vst [vmem:[#allocation2 + $0x18] sm:$0xff] %v356
      %367 = vst [vmem:[#allocation2 + $0x20] sm:$0x1] %v353
      %368 = vst [vmem:[#allocation2 + $0x28] sm:$0x1] %v355
      %v369 = vld [vmem:[#allocation2] sm:$0xff]
      %v370 = vld [vmem:[#allocation2 + $0x8] sm:$0xff]
      %v371 = vld [vmem:[#allocation2 + $0x10] sm:$0xff]
      %v372 = vld [vmem:[#allocation2 + $0x18] sm:$0xff]
      %v373 = vpack.c.bf16 %v371, %v369
      %v374 = vpack.c.bf16 %v372, %v370
      %v375 = vld [vmem:[%s3] sm:$0xf]
      %v376 = vld [vmem:[%s3 + $0x4] sm:$0xf]
      %v377 = vld [vmem:[%s3 + $0x8] sm:$0xf]
      %v378 = vld [vmem:[%s3 + $0xc] sm:$0xf]
      %v379 = vld [vmem:[%s3 + $0x10] sm:$0xf]
      %v380 = vld [vmem:[%s3 + $0x14] sm:$0xf]
      %v381 = vld [vmem:[%s3 + $0x18] sm:$0xf]
      %v382 = vld [vmem:[%s3 + $0x1c] sm:$0xf]
      %v383 = vld [vmem:[%s3 + $0x20] sm:$0xf]
      %v384 = vld [vmem:[%s3 + $0x24] sm:$0xf]
      %v385 = vld [vmem:[%s3 + $0x28] sm:$0xf]
      %v386 = vld [vmem:[%s3 + $0x2c] sm:$0xf]
      %v387 = vld [vmem:[%s3 + $0x30] sm:$0xf]
      %v388 = vld [vmem:[%s3 + $0x34] sm:$0xf]
      %v389 = vld [vmem:[%s3 + $0x38] sm:$0xf]
      %v390 = vld [vmem:[%s3 + $0x3c] sm:$0xf]
      %v391 = vld [vmem:[%s3 + $0x40] sm:$0xf]
      %v392 = vld [vmem:[%s3 + $0x44] sm:$0xf]
      %v393 = vld [vmem:[%s3 + $0x48] sm:$0xf]
      %v394 = vld [vmem:[%s3 + $0x4c] sm:$0xf]
      %v395 = vld [vmem:[%s3 + $0x50] sm:$0xf]
      %v396 = vld [vmem:[%s3 + $0x54] sm:$0xf]
      %v397 = vld [vmem:[%s3 + $0x58] sm:$0xf]
      %v398 = vld [vmem:[%s3 + $0x5c] sm:$0xf]
      %v399 = vld [vmem:[%s3 + $0x60] sm:$0xf]
      %v400 = vld [vmem:[%s3 + $0x64] sm:$0xf]
      %v401 = vld [vmem:[%s3 + $0x68] sm:$0xf]
      %v402 = vld [vmem:[%s3 + $0x6c] sm:$0xf]
      %v403 = vld [vmem:[%s3 + $0x70] sm:$0xf]
      %v404 = vld [vmem:[%s3 + $0x74] sm:$0xf]
      %v405 = vld [vmem:[%s3 + $0x78] sm:$0xf]
      %v406 = vld [vmem:[%s3 + $0x7c] sm:$0xf]
      %v407 = vld [vmem:[#allocation2] sm:$0xfe]
      %v408 = vld [vmem:[#allocation2 + $0x8] sm:$0xfe]
      %v409 = vld [vmem:[#allocation2 + $0x20] sm:$0x1]
      %v410 = vld [vmem:[#allocation2 + $0x28] sm:$0x1]
      %v411 = vpack.c.bf16 %v371, %v407
      %v412 = vpack.c.bf16 %v372, %v408
      %v413 = vpack.c.bf16 %v409, %v409
      %v414 = vpack.c.bf16 %v410, %v410
      %s415 = scalar_lea.vmem %s3, 128
      %v416 = vld [vmem:[%s415] sm:$0xf]
      %v417 = vld [vmem:[%s415 + $0x4] sm:$0xf]
      %v418 = vld [vmem:[%s415 + $0x8] sm:$0xf]
      %v419 = vld [vmem:[%s415 + $0xc] sm:$0xf]
      %v420 = vld [vmem:[%s415 + $0x10] sm:$0xf]
      %v421 = vld [vmem:[%s415 + $0x14] sm:$0xf]
      %v422 = vld [vmem:[%s415 + $0x18] sm:$0xf]
      %v423 = vld [vmem:[%s415 + $0x1c] sm:$0xf]
      %v424 = vld [vmem:[%s415 + $0x20] sm:$0xf]
      %v425 = vld [vmem:[%s415 + $0x24] sm:$0xf]
      %v426 = vld [vmem:[%s415 + $0x28] sm:$0xf]
      %v427 = vld [vmem:[%s415 + $0x2c] sm:$0xf]
      %v428 = vld [vmem:[%s415 + $0x30] sm:$0xf]
      %v429 = vld [vmem:[%s415 + $0x34] sm:$0xf]
      %v430 = vld [vmem:[%s415 + $0x38] sm:$0xf]
      %v431 = vld [vmem:[%s415 + $0x3c] sm:$0xf]
      %v432 = vld [vmem:[%s415 + $0x40] sm:$0xf]
      %v433 = vld [vmem:[%s415 + $0x44] sm:$0xf]
      %v434 = vld [vmem:[%s415 + $0x48] sm:$0xf]
      %v435 = vld [vmem:[%s415 + $0x4c] sm:$0xf]
      %v436 = vld [vmem:[%s415 + $0x50] sm:$0xf]
      %v437 = vld [vmem:[%s415 + $0x54] sm:$0xf]
      %v438 = vld [vmem:[%s415 + $0x58] sm:$0xf]
      %v439 = vld [vmem:[%s415 + $0x5c] sm:$0xf]
      %v440 = vld [vmem:[%s415 + $0x60] sm:$0xf]
      %v441 = vld [vmem:[%s415 + $0x64] sm:$0xf]
      %v442 = vld [vmem:[%s415 + $0x68] sm:$0xf]
      %v443 = vld [vmem:[%s415 + $0x6c] sm:$0xf]
      %v444 = vld [vmem:[%s415 + $0x70] sm:$0xf]
      %v445 = vld [vmem:[%s415 + $0x74] sm:$0xf]
      %v446 = vld [vmem:[%s415 + $0x78] sm:$0xf]
      %v447 = vld [vmem:[%s415 + $0x7c] sm:$0xf]
      %vm448 = vsmask.f32 7424
      %v450 = vshrl.u32 %v411, 16
      %v452 = vshll.u32 %v411, 16
      %v454 = vrot.slane %v452, 1
      %v455 = vor.u32 %v450, %v454
      %v457 = vshll.u32 %v413, 16
      %v459 = vrot.slane %v457, 1
      %v460 = vsel %vm448, %v455, %v459
      %v462 = vshrl.u32 %v412, 16
      %v464 = vshll.u32 %v412, 16
      %v466 = vrot.slane %v464, 1
      %v467 = vor.u32 %v462, %v466
      %v469 = vshll.u32 %v414, 16
      %v471 = vrot.slane %v469, 1
      %v472 = vsel %vm448, %v467, %v471
      %v507 = vunpack.c.l.b16 %v416
      %v508 = vunpack.c.l.b16 %v417
      %v509 = vunpack.c.l.b16 %v418
      %v510 = vunpack.c.l.b16 %v419
      %v511 = vunpack.c.l.b16 %v420
      %v512 = vunpack.c.l.b16 %v421
      %v513 = vunpack.c.l.b16 %v422
      %v514 = vunpack.c.l.b16 %v423
      %v515 = vunpack.c.l.b16 %v424
      %v516 = vunpack.c.l.b16 %v425
      %v517 = vunpack.c.l.b16 %v426
      %v518 = vunpack.c.l.b16 %v427
      %v519 = vunpack.c.l.b16 %v428
      %v520 = vunpack.c.l.b16 %v429
      %v521 = vunpack.c.l.b16 %v430
      %v522 = vunpack.c.l.b16 %v431
      %v523 = vunpack.c.l.b16 %v432
      %v524 = vunpack.c.l.b16 %v433
      %v525 = vunpack.c.l.b16 %v434
      %v526 = vunpack.c.l.b16 %v435
      %v527 = vunpack.c.l.b16 %v436
      %v528 = vunpack.c.l.b16 %v437
      %v529 = vunpack.c.l.b16 %v438
      %v530 = vunpack.c.l.b16 %v439
      %v531 = vunpack.c.l.b16 %v440
      %v532 = vunpack.c.l.b16 %v441
      %v533 = vunpack.c.l.b16 %v442
      %v534 = vunpack.c.l.b16 %v443
      %v535 = vunpack.c.l.b16 %v444
      %v536 = vunpack.c.l.b16 %v445
      %v537 = vunpack.c.l.b16 %v446
      %v538 = vunpack.c.l.b16 %v447
      %v539 = vpack.c.b16 %v508, %v507
      %v540 = vpack.c.b16 %v510, %v509
      %v541 = vpack.c.b16 %v512, %v511
      %v542 = vpack.c.b16 %v514, %v513
      %v543 = vpack.c.b16 %v516, %v515
      %v544 = vpack.c.b16 %v518, %v517
      %v545 = vpack.c.b16 %v520, %v519
      %v546 = vpack.c.b16 %v522, %v521
      %v547 = vpack.c.b16 %v524, %v523
      %v548 = vpack.c.b16 %v526, %v525
      %v549 = vpack.c.b16 %v528, %v527
      %v550 = vpack.c.b16 %v530, %v529
      %v551 = vpack.c.b16 %v532, %v531
      %v552 = vpack.c.b16 %v534, %v533
      %v553 = vpack.c.b16 %v536, %v535
      %v554 = vpack.c.b16 %v538, %v537
      %571 = vmatprep.subr.bf16.mxu0 0
      %572 = vmatpush1.bf16.msra.mxu0 %v539
      %573 = vmatprep.subr.bf16.mxu0 0
      %574 = vmatpush1.bf16.msra.mxu0 %v540
      %575 = vmatprep.subr.bf16.mxu0 0
      %576 = vmatpush1.bf16.msra.mxu0 %v541
      %577 = vmatprep.subr.bf16.mxu0 0
      %578 = vmatpush1.bf16.msra.mxu0 %v542
      %579 = vmatprep.subr.bf16.mxu0 0
      %580 = vmatpush1.bf16.msra.mxu0 %v543
      %581 = vmatprep.subr.bf16.mxu0 0
      %582 = vmatpush1.bf16.msra.mxu0 %v544
      %583 = vmatprep.subr.bf16.mxu0 0
      %584 = vmatpush1.bf16.msra.mxu0 %v545
      %585 = vmatprep.subr.bf16.mxu0 0
      %586 = vmatpush1.bf16.msra.mxu0 %v546
      %587 = vmatprep.subr.bf16.mxu0 0
      %588 = vmatpush1.bf16.msra.mxu0 %v547
      %589 = vmatprep.subr.bf16.mxu0 0
      %590 = vmatpush1.bf16.msra.mxu0 %v548
      %591 = vmatprep.subr.bf16.mxu0 0
      %592 = vmatpush1.bf16.msra.mxu0 %v549
      %593 = vmatprep.subr.bf16.mxu0 0
      %594 = vmatpush1.bf16.msra.mxu0 %v550
      %595 = vmatprep.subr.bf16.mxu0 0
      %596 = vmatpush1.bf16.msra.mxu0 %v551
      %597 = vmatprep.subr.bf16.mxu0 0
      %598 = vmatpush1.bf16.msra.mxu0 %v552
      %599 = vmatprep.subr.bf16.mxu0 0
      %600 = vmatpush1.bf16.msra.mxu0 %v553
      %601 = vmatprep.subr.bf16.mxu0 0
      %602 = vmatpush1.bf16.msra.mxu0 %v554
      %603 = vmatprep.mubr.bf16.mxu0 %v472
      %604 = vmatmul.mubr.bf16.gmra.mrb[0].mxu0 %v460
      %v605 = vpop.f32.mrb[0].mxu0
      %v606 = vadd.f32 0.0, %v605
      %v607 = vpop.f32.mrb[0].mxu0
      %v608 = vpop.f32.mrb[0].mxu0
      %v609 = vadd.f32 0.0, %v608
      %v610 = vpop.f32.mrb[0].mxu0
      %611 = vdwg.mxu0
      %v644 = vunpack.c.l.b16 %v375
      %v645 = vunpack.c.l.b16 %v376
      %v646 = vunpack.c.l.b16 %v377
      %v647 = vunpack.c.l.b16 %v378
      %v648 = vunpack.c.l.b16 %v379
      %v649 = vunpack.c.l.b16 %v380
      %v650 = vunpack.c.l.b16 %v381
      %v651 = vunpack.c.l.b16 %v382
      %v652 = vunpack.c.l.b16 %v383
      %v653 = vunpack.c.l.b16 %v384
      %v654 = vunpack.c.l.b16 %v385
      %v655 = vunpack.c.l.b16 %v386
      %v656 = vunpack.c.l.b16 %v387
      %v657 = vunpack.c.l.b16 %v388
      %v658 = vunpack.c.l.b16 %v389
      %v659 = vunpack.c.l.b16 %v390
      %v660 = vunpack.c.l.b16 %v391
      %v661 = vunpack.c.l.b16 %v392
      %v662 = vunpack.c.l.b16 %v393
      %v663 = vunpack.c.l.b16 %v394
      %v664 = vunpack.c.l.b16 %v395
      %v665 = vunpack.c.l.b16 %v396
      %v666 = vunpack.c.l.b16 %v397
      %v667 = vunpack.c.l.b16 %v398
      %v668 = vunpack.c.l.b16 %v399
      %v669 = vunpack.c.l.b16 %v400
      %v670 = vunpack.c.l.b16 %v401
      %v671 = vunpack.c.l.b16 %v402
      %v672 = vunpack.c.l.b16 %v403
      %v673 = vunpack.c.l.b16 %v404
      %v674 = vunpack.c.l.b16 %v405
      %v675 = vunpack.c.l.b16 %v406
      %v676 = vpack.c.b16 %v645, %v644
      %v677 = vpack.c.b16 %v647, %v646
      %v678 = vpack.c.b16 %v649, %v648
      %v679 = vpack.c.b16 %v651, %v650
      %v680 = vpack.c.b16 %v653, %v652
      %v681 = vpack.c.b16 %v655, %v654
      %v682 = vpack.c.b16 %v657, %v656
      %v683 = vpack.c.b16 %v659, %v658
      %v684 = vpack.c.b16 %v661, %v660
      %v685 = vpack.c.b16 %v663, %v662
      %v686 = vpack.c.b16 %v665, %v664
      %v687 = vpack.c.b16 %v667, %v666
      %v688 = vpack.c.b16 %v669, %v668
      %v689 = vpack.c.b16 %v671, %v670
      %v690 = vpack.c.b16 %v673, %v672
      %v691 = vpack.c.b16 %v675, %v674
      %708 = vmatprep.subr.bf16.mxu0 0
      %709 = vmatpush1.bf16.msra.mxu0 %v676
      %710 = vmatprep.subr.bf16.mxu0 0
      %711 = vmatpush1.bf16.msra.mxu0 %v677
      %712 = vmatprep.subr.bf16.mxu0 0
      %713 = vmatpush1.bf16.msra.mxu0 %v678
      %714 = vmatprep.subr.bf16.mxu0 0
      %715 = vmatpush1.bf16.msra.mxu0 %v679
      %716 = vmatprep.subr.bf16.mxu0 0
      %717 = vmatpush1.bf16.msra.mxu0 %v680
      %718 = vmatprep.subr.bf16.mxu0 0
      %719 = vmatpush1.bf16.msra.mxu0 %v681
      %720 = vmatprep.subr.bf16.mxu0 0
      %721 = vmatpush1.bf16.msra.mxu0 %v682
      %722 = vmatprep.subr.bf16.mxu0 0
      %723 = vmatpush1.bf16.msra.mxu0 %v683
      %724 = vmatprep.subr.bf16.mxu0 0
      %725 = vmatpush1.bf16.msra.mxu0 %v684
      %726 = vmatprep.subr.bf16.mxu0 0
      %727 = vmatpush1.bf16.msra.mxu0 %v685
      %728 = vmatprep.subr.bf16.mxu0 0
      %729 = vmatpush1.bf16.msra.mxu0 %v686
      %730 = vmatprep.subr.bf16.mxu0 0
      %731 = vmatpush1.bf16.msra.mxu0 %v687
      %732 = vmatprep.subr.bf16.mxu0 0
      %733 = vmatpush1.bf16.msra.mxu0 %v688
      %734 = vmatprep.subr.bf16.mxu0 0
      %735 = vmatpush1.bf16.msra.mxu0 %v689
      %736 = vmatprep.subr.bf16.mxu0 0
      %737 = vmatpush1.bf16.msra.mxu0 %v690
      %738 = vmatprep.subr.bf16.mxu0 0
      %739 = vmatpush1.bf16.msra.mxu0 %v691
      %740 = vmatprep.mubr.bf16.mxu0 %v374
      %741 = vmatmul.mubr.bf16.gmra.mrb[0].mxu0 %v373
      %v742 = vpop.f32.mrb[0].mxu0
      %v743 = vadd.f32 %v606, %v742
      %v744 = vpop.f32.mrb[0].mxu0
      %v745 = vpop.f32.mrb[0].mxu0
      %v746 = vadd.f32 %v609, %v745
      %v747 = vpop.f32.mrb[0].mxu0
      %748 = vdwg.mxu0
      %v749 = vld [vmem:[#allocation2] sm:$0xfc]
      %v750 = vld [vmem:[#allocation2 + $0x8] sm:$0xfc]
      %v751 = vld [vmem:[#allocation2 + $0x20] sm:$0x3]
      %v752 = vld [vmem:[#allocation2 + $0x28] sm:$0x3]
      %v753 = vpack.c.bf16 %v371, %v749
      %v754 = vpack.c.bf16 %v372, %v750
      %v755 = vpack.c.bf16 %v751, %v751
      %v756 = vpack.c.bf16 %v752, %v752
      %s757 = scalar_lea.vmem %s3, 256
      %v758 = vld [vmem:[%s757] sm:$0xf]
      %v759 = vld [vmem:[%s757 + $0x4] sm:$0xf]
      %v760 = vld [vmem:[%s757 + $0x8] sm:$0xf]
      %v761 = vld [vmem:[%s757 + $0xc] sm:$0xf]
      %v762 = vld [vmem:[%s757 + $0x10] sm:$0xf]
      %v763 = vld [vmem:[%s757 + $0x14] sm:$0xf]
      %v764 = vld [vmem:[%s757 + $0x18] sm:$0xf]
      %v765 = vld [vmem:[%s757 + $0x1c] sm:$0xf]
      %v766 = vld [vmem:[%s757 + $0x20] sm:$0xf]
      %v767 = vld [vmem:[%s757 + $0x24] sm:$0xf]
      %v768 = vld [vmem:[%s757 + $0x28] sm:$0xf]
      %v769 = vld [vmem:[%s757 + $0x2c] sm:$0xf]
      %v770 = vld [vmem:[%s757 + $0x30] sm:$0xf]
      %v771 = vld [vmem:[%s757 + $0x34] sm:$0xf]
      %v772 = vld [vmem:[%s757 + $0x38] sm:$0xf]
      %v773 = vld [vmem:[%s757 + $0x3c] sm:$0xf]
      %v774 = vld [vmem:[%s757 + $0x40] sm:$0xf]
      %v775 = vld [vmem:[%s757 + $0x44] sm:$0xf]
      %v776 = vld [vmem:[%s757 + $0x48] sm:$0xf]
      %v777 = vld [vmem:[%s757 + $0x4c] sm:$0xf]
      %v778 = vld [vmem:[%s757 + $0x50] sm:$0xf]
      %v779 = vld [vmem:[%s757 + $0x54] sm:$0xf]
      %v780 = vld [vmem:[%s757 + $0x58] sm:$0xf]
      %v781 = vld [vmem:[%s757 + $0x5c] sm:$0xf]
      %v782 = vld [vmem:[%s757 + $0x60] sm:$0xf]
      %v783 = vld [vmem:[%s757 + $0x64] sm:$0xf]
      %v784 = vld [vmem:[%s757 + $0x68] sm:$0xf]
      %v785 = vld [vmem:[%s757 + $0x6c] sm:$0xf]
      %v786 = vld [vmem:[%s757 + $0x70] sm:$0xf]
      %v787 = vld [vmem:[%s757 + $0x74] sm:$0xf]
      %v788 = vld [vmem:[%s757 + $0x78] sm:$0xf]
      %v789 = vld [vmem:[%s757 + $0x7c] sm:$0xf]
      %vm794 = vcmask 1046528
      %v795 = vrot.slane %v753, 1
      %v796 = vrot.slane %v755, 1
      %v797 = vsel %vm794, %v795, %v796
      %v798 = vrot.slane %v754, 1
      %v799 = vrot.slane %v756, 1
      %v800 = vsel %vm794, %v798, %v799
      %v835 = vunpack.c.l.b16 %v758
      %v836 = vunpack.c.l.b16 %v759
      %v837 = vunpack.c.l.b16 %v760
      %v838 = vunpack.c.l.b16 %v761
      %v839 = vunpack.c.l.b16 %v762
      %v840 = vunpack.c.l.b16 %v763
      %v841 = vunpack.c.l.b16 %v764
      %v842 = vunpack.c.l.b16 %v765
      %v843 = vunpack.c.l.b16 %v766
      %v844 = vunpack.c.l.b16 %v767
      %v845 = vunpack.c.l.b16 %v768
      %v846 = vunpack.c.l.b16 %v769
      %v847 = vunpack.c.l.b16 %v770
      %v848 = vunpack.c.l.b16 %v771
      %v849 = vunpack.c.l.b16 %v772
      %v850 = vunpack.c.l.b16 %v773
      %v851 = vunpack.c.l.b16 %v774
      %v852 = vunpack.c.l.b16 %v775
      %v853 = vunpack.c.l.b16 %v776
      %v854 = vunpack.c.l.b16 %v777
      %v855 = vunpack.c.l.b16 %v778
      %v856 = vunpack.c.l.b16 %v779
      %v857 = vunpack.c.l.b16 %v780
      %v858 = vunpack.c.l.b16 %v781
      %v859 = vunpack.c.l.b16 %v782
      %v860 = vunpack.c.l.b16 %v783
      %v861 = vunpack.c.l.b16 %v784
      %v862 = vunpack.c.l.b16 %v785
      %v863 = vunpack.c.l.b16 %v786
      %v864 = vunpack.c.l.b16 %v787
      %v865 = vunpack.c.l.b16 %v788
      %v866 = vunpack.c.l.b16 %v789
      %v867 = vpack.c.b16 %v836, %v835
      %v868 = vpack.c.b16 %v838, %v837
      %v869 = vpack.c.b16 %v840, %v839
      %v870 = vpack.c.b16 %v842, %v841
      %v871 = vpack.c.b16 %v844, %v843
      %v872 = vpack.c.b16 %v846, %v845
      %v873 = vpack.c.b16 %v848, %v847
      %v874 = vpack.c.b16 %v850, %v849
      %v875 = vpack.c.b16 %v852, %v851
      %v876 = vpack.c.b16 %v854, %v853
      %v877 = vpack.c.b16 %v856, %v855
      %v878 = vpack.c.b16 %v858, %v857
      %v879 = vpack.c.b16 %v860, %v859
      %v880 = vpack.c.b16 %v862, %v861
      %v881 = vpack.c.b16 %v864, %v863
      %v882 = vpack.c.b16 %v866, %v865
      %899 = vmatprep.subr.bf16.mxu0 0
      %900 = vmatpush1.bf16.msra.mxu0 %v867
      %901 = vmatprep.subr.bf16.mxu0 0
      %902 = vmatpush1.bf16.msra.mxu0 %v868
      %903 = vmatprep.subr.bf16.mxu0 0
      %904 = vmatpush1.bf16.msra.mxu0 %v869
      %905 = vmatprep.subr.bf16.mxu0 0
      %906 = vmatpush1.bf16.msra.mxu0 %v870
      %907 = vmatprep.subr.bf16.mxu0 0
      %908 = vmatpush1.bf16.msra.mxu0 %v871
      %909 = vmatprep.subr.bf16.mxu0 0
      %910 = vmatpush1.bf16.msra.mxu0 %v872
      %911 = vmatprep.subr.bf16.mxu0 0
      %912 = vmatpush1.bf16.msra.mxu0 %v873
      %913 = vmatprep.subr.bf16.mxu0 0
      %914 = vmatpush1.bf16.msra.mxu0 %v874
      %915 = vmatprep.subr.bf16.mxu0 0
      %916 = vmatpush1.bf16.msra.mxu0 %v875
      %917 = vmatprep.subr.bf16.mxu0 0
      %918 = vmatpush1.bf16.msra.mxu0 %v876
      %919 = vmatprep.subr.bf16.mxu0 0
      %920 = vmatpush1.bf16.msra.mxu0 %v877
      %921 = vmatprep.subr.bf16.mxu0 0
      %922 = vmatpush1.bf16.msra.mxu0 %v878
      %923 = vmatprep.subr.bf16.mxu0 0
      %924 = vmatpush1.bf16.msra.mxu0 %v879
      %925 = vmatprep.subr.bf16.mxu0 0
      %926 = vmatpush1.bf16.msra.mxu0 %v880
      %927 = vmatprep.subr.bf16.mxu0 0
      %928 = vmatpush1.bf16.msra.mxu0 %v881
      %929 = vmatprep.subr.bf16.mxu0 0
      %930 = vmatpush1.bf16.msra.mxu0 %v882
      %931 = vmatprep.mubr.bf16.mxu0 %v800
      %932 = vmatmul.mubr.bf16.gmra.mrb[0].mxu0 %v797
      %v933 = vpop.f32.mrb[0].mxu0
      %v934 = vadd.f32 0.0, %v933
      %v935 = vpop.f32.mrb[0].mxu0
      %v936 = vpop.f32.mrb[0].mxu0
      %v937 = vadd.f32 0.0, %v936
      %v938 = vpop.f32.mrb[0].mxu0
      %939 = vdwg.mxu0
      %v940 = vadd.f32 %v743, %v934
      %v941 = vadd.f32 %v746, %v937
      %v942 = vld [vmem:[%s4] sm:$0x1]
      %v944 = vlaneseq
      %v945 = vshrl.u32 %v944, 7
      %v946 = vsub.s32 0, %v945
      %v947 = vrot.slane %v942, %v946
      %v949 = vadd.f32 %v940, %v947
      %v950 = vadd.f32 %v941, %v947
      %951 = vst [vmem:[%s289] sm:$0xff] %v949
      %952 = vst [vmem:[%s289 + $0x8] sm:$0xff] %v950
      %v953 = vadd.f32 %v949, %v950
      %v954 = vrot.slane %v953, 4
      %v955 = vadd.f32 %v953, %v954
      %v956 = vrot.slane %v955, 2
      %v957 = vadd.f32 %v955, %v956
      %v958 = vrot.slane %v957, 1
      %v959 = vadd.f32 %v957, %v958
      %960 = vst [vmem:[%s292] sm:$0x1] %v959
      %v961 = vmul.f32 %v949, %v949
      %v962 = vmul.f32 %v950, %v950
      %v963 = vadd.f32 %v961, %v962
      %v964 = vrot.slane %v963, 4
      %v965 = vadd.f32 %v963, %v964
      %v966 = vrot.slane %v965, 2
      %v967 = vadd.f32 %v965, %v966
      %v968 = vrot.slane %v967, 1
      %v969 = vadd.f32 %v967, %v968
      %970 = vst [vmem:[%s295] sm:$0x1] %v969
      %p971 = scmp.lt.s32.totalorder %s19, 1
      %s972 = scalar_select %p971, %s19, 1
      %s973 = smul.addr %s972, 2
      %s974 = smul.addr %s973, 8
      %s975 = scalar_lea.vmem %s5, %s974
      %p976 = scmp.lt.s32.totalorder %s19, 1
      %s977 = scalar_select %p976, %s19, 1
      %s978 = scalar_lea.vmem %s6, %s977
      %p979 = scmp.lt.s32.totalorder %s19, 1
      %s980 = scalar_select %p979, %s19, 1
      %s981 = scalar_lea.vmem %s7, %s980
      // Predicated region
      $region41: #{de_conv_forward.7} parent=39 // pred_check
        %p982 = pneg %p147
      $region42: #{de_conv_forward.7} parent=39 // pred_check_branch
        %984 = sbr.rel (%p982) target = $region44
      $region43: #{de_conv_forward.7} parent=39 // pred_region
        _
      $region44: #{de_conv_forward.7} parent=39 // pred_fallthru
        _
      // Predicated region
      $region45: #{de_conv_forward.7} parent=39 // pred_check
        %p985 = pneg %p173
      $region46: #{de_conv_forward.7} parent=39 // pred_check_branch
        %987 = sbr.rel (%p985) target = $region48
      $region47: #{de_conv_forward.7} parent=39 // pred_region
        _
      $region48: #{de_conv_forward.7} parent=39 // pred_fallthru
        _
      // Predicated region
      $region49: #{de_conv_forward.7} parent=39 // pred_check
        %p988 = pneg %p199
      $region50: #{de_conv_forward.7} parent=39 // pred_check_branch
        %990 = sbr.rel (%p988) target = $region52
      $region51: #{de_conv_forward.7} parent=39 // pred_region
        _
      $region52: #{de_conv_forward.7} parent=39 // pred_fallthru
        _
    $region40: #{de_conv_forward.7} parent=5 // pred_fallthru
      _
    %p991 = scmp.le.s32.totalorder 2, %s14
    // Predicated region
    $region53: #{de_conv_forward.7} parent=5 // pred_check
      %p992 = pneg %p991
    $region54: #{de_conv_forward.7} parent=5 // pred_check_branch
      %994 = sbr.rel (%p992) target = $region56
    $region55: #{de_conv_forward.7} parent=5 // pred_region
      %s995 = ssub.s32 %s14, 2
      // Predicated region
      $region57: #{de_conv_forward.7} parent=55 // pred_check
        %p996 = pneg %p153
      $region58: #{de_conv_forward.7} parent=55 // pred_check_branch
        %998 = sbr.rel (%p996) target = $region60
      $region59: #{de_conv_forward.7} parent=55 // pred_region
        %p999 = scmp.lt.s32.totalorder %s20, 1
        %s1000 = scalar_select %p999, %s20, 1
        %s1001 = smul.addr %s1000, 2
        %s1002 = smul.addr %s1001, 8
        %s1003 = scalar_lea.vmem %s5, %s1002
      $region60: #{de_conv_forward.7} parent=55 // pred_fallthru
        _
      // Predicated region
      $region61: #{de_conv_forward.7} parent=55 // pred_check
        %p1004 = pneg %p179
      $region62: #{de_conv_forward.7} parent=55 // pred_check_branch
        %1006 = sbr.rel (%p1004) target = $region64
      $region63: #{de_conv_forward.7} parent=55 // pred_region
        %p1007 = scmp.lt.s32.totalorder %s20, 1
        %s1008 = scalar_select %p1007, %s20, 1
        %s1009 = scalar_lea.vmem %s6, %s1008
      $region64: #{de_conv_forward.7} parent=55 // pred_fallthru
        _
      // Predicated region
      $region65: #{de_conv_forward.7} parent=55 // pred_check
        %p1010 = pneg %p205
      $region66: #{de_conv_forward.7} parent=55 // pred_check_branch
        %1012 = sbr.rel (%p1010) target = $region68
      $region67: #{de_conv_forward.7} parent=55 // pred_region
        %p1013 = scmp.lt.s32.totalorder %s20, 1
        %s1014 = scalar_select %p1013, %s20, 1
        %s1015 = scalar_lea.vmem %s7, %s1014
      $region68: #{de_conv_forward.7} parent=55 // pred_fallthru
        _
    $region56: #{de_conv_forward.7} parent=5 // pred_fallthru
      _
  $region6: #{de_conv_forward.7} parent=0 // loop_footer
    %s18 = sadd.s32 1, %s14
  $region7: #{de_conv_forward.7} parent=0 // loop_footer_branch
    %13 = sbr.rel target = $region3
  $region8: #{de_conv_forward.7} parent=0 // loop_exit
    _

// kernel: de_conv_forward.8
$region0: #{de_conv_forward.8}
  #allocation0 [shape = 'u32[]', space=smem, size = 0x4, offset = 0x4, fixed_abs, tag = 'smem constant byte address 0x4 - core index']
  #allocation1 [shape = 'u32[144,128]{1,0:T(1,128)}', space=vmem, size = 0x12000, scoped, tag = 'internal scratch']
  #allocation2 [shape = 'f32[18,256]{1,0:T(8,128)}', space=vmem, size = 0x6000, scoped, tag = 'scratch operand']
  %s0 = inlined_call_operand.vmem [shape: f32[2,16,256], index: 0, kind: input, shape index: {}]
  %s1 = inlined_call_operand.vmem [shape: f32[1,256], index: 1, kind: input, shape index: {}]
  %s2 = inlined_call_operand.vmem [shape: f32[1,256], index: 2, kind: input, shape index: {}]
  %s3 = inlined_call_operand.vmem [shape: bf16[3,256,128], index: 3, kind: input, shape index: {}]
  %s4 = inlined_call_operand.vmem [shape: f32[1,128], index: 4, kind: input, shape index: {}]
  %s5 = inlined_call_operand.vmem [shape: f32[2,16,128], index: 5, kind: output, shape index: {0}]
  %s6 = inlined_call_operand.hbm [shape: f32[2,1,128], index: 6, kind: output, shape index: {1}]
  %s7 = inlined_call_operand.hbm [shape: f32[2,1,128], index: 7, kind: output, shape index: {2}]
  %8 = xla_tuple %s5, %s6, %s7
  %s9 = sld [smem:[#allocation0]]
  $region69: #{de_conv_forward.8} parent=0
    _
  %s11 = ssub.s32 1, %s9
  %s12 = scalar_select 0, %s11, %s9
  $region1: #{de_conv_forward.8} parent=0
    #allocation3 [shape = 'u8[1024]{0}', space=vmem, size = 0x400, scoped, tag = 'output window, operand 1']
    #allocation4 [shape = 's32[2]{0}', space=sflag, size = 0x8, scoped, tag = 'scoped memory for de_conv_forward.8']
    #allocation5 [shape = 'u8[1024]{0}', space=vmem, size = 0x400, scoped, tag = 'output window, operand 2']
    #allocation6 [shape = 's32[2]{0}', space=sflag, size = 0x8, scoped, tag = 'scoped memory for de_conv_forward.8']
    %13 = vsyncpa [#allocation4], 0
    %s14 = scalar_lea.sflag [#allocation4], 1
    %15 = vsyncpa %s14, 0
    %16 = vsyncpa [#allocation6], 0
    %s17 = scalar_lea.sflag [#allocation6], 1
    %18 = vsyncpa %s17, 0
    loop: start=0, step=1, limit=4
    $region2: #{de_conv_forward.8} parent=1 // loop_pre_header
      _
    $region3: #{de_conv_forward.8} parent=1 // loop_header
      %s20 = sphi 0, %s24
      %p21 = scmp.ge.s32.totalorder %s20, 4
      %s30 = sphi 0, %s32
      %s33 = sphi 0, %s30
      %s34 = sphi 0, %s33
      %s50 = sphi 0, %s34
      %s54 = sphi 0, %s54
      %s56 = sphi 0, %s54
      %s57 = sphi 0, %s56
      %s71 = sphi 0, %s57
      %s75 = sphi 0, %s75
      %s77 = sphi 0, %s75
      %s78 = sphi 0, %s77
      %s92 = sphi 0, %s78
      %s96 = sphi 0, %s96
      %s98 = sphi 0, %s96
      %s99 = sphi 0, %s98
      %s113 = sphi 0, %s99
      %s117 = sphi 0, %s117
      %s119 = sphi 0, %s117
      %s120 = sphi 0, %s119
      %s134 = sphi 0, %s120
      %s140 = sphi 0, %s142
      %s143 = sphi 0, %s140
      %s144 = sphi 0, %s143
      %s160 = sphi 0, %s144
      %s166 = sphi 0, %s168
      %s169 = sphi 0, %s166
      %s170 = sphi 0, %s169
      %s186 = sphi 0, %s170
      %s192 = sphi 0, %s194
      %s195 = sphi 0, %s192
      %s196 = sphi 0, %s195
      %s212 = sphi 0, %s196
    $region4: #{de_conv_forward.8} parent=1 // loop_header_branch
      %23 = sbr.rel (%p21) target = $region8
    $region5: #{de_conv_forward.8} parent=1 // loop_body
      %s25 = ssub.s32 %s20, 1
      %s26 = ssub.s32 %s20, 2
      %s27 = sadd.s32 %s20, 1
      %s28 = ssub.s32 %s20, %s27
      %p29 = scmp.eq.s32.totalorder %s28, 0
      %s31 = sadd.s32 %s30, 1
      %s32 = scalar_select %p29, %s30, %s31
      %p35 = pneg %p29
      %p36 = scmp.eq.s32.totalorder %s20, 1
      %p37 = por %p35, %p36
      %p38 = scmp.ne.s32.totalorder %s30, %s33
      %p39 = scmp.eq.s32.totalorder %s20, 0
      %p40 = por %p38, %p39
      %p41 = scmp.ne.s32.totalorder %s30, %s33
      %p42 = scmp.eq.s32.totalorder %s25, 1
      %p43 = por %p41, %p42
      %p44 = scmp.ne.s32.totalorder %s33, %s34
      %p45 = scmp.eq.s32.totalorder %s25, 0
      %p46 = por %p44, %p45
      %p47 = scmp.ne.s32.totalorder %s33, %s34
      %p48 = scmp.eq.s32.totalorder %s26, 1
      %p49 = por %p47, %p48
      %p51 = scmp.ne.s32.totalorder %s34, %s50
      %p52 = scmp.eq.s32.totalorder %s26, 0
      %p53 = por %p51, %p52
      %s55 = sadd.s32 %s54, 1
      %p58 = scmp.eq.s32.totalorder %s20, 1
      %p59 = scmp.ne.s32.totalorder %s54, %s56
      %p60 = scmp.eq.s32.totalorder %s20, 0
      %p61 = por %p59, %p60
      %p62 = scmp.ne.s32.totalorder %s54, %s56
      %p63 = scmp.eq.s32.totalorder %s25, 1
      %p64 = por %p62, %p63
      %p65 = scmp.ne.s32.totalorder %s56, %s57
      %p66 = scmp.eq.s32.totalorder %s25, 0
      %p67 = por %p65, %p66
      %p68 = scmp.ne.s32.totalorder %s56, %s57
      %p69 = scmp.eq.s32.totalorder %s26, 1
      %p70 = por %p68, %p69
      %p72 = scmp.ne.s32.totalorder %s57, %s71
      %p73 = scmp.eq.s32.totalorder %s26, 0
      %p74 = por %p72, %p73
      %s76 = sadd.s32 %s75, 1
      %p79 = scmp.eq.s32.totalorder %s20, 1
      %p80 = scmp.ne.s32.totalorder %s75, %s77
      %p81 = scmp.eq.s32.totalorder %s20, 0
      %p82 = por %p80, %p81
      %p83 = scmp.ne.s32.totalorder %s75, %s77
      %p84 = scmp.eq.s32.totalorder %s25, 1
      %p85 = por %p83, %p84
      %p86 = scmp.ne.s32.totalorder %s77, %s78
      %p87 = scmp.eq.s32.totalorder %s25, 0
      %p88 = por %p86, %p87
      %p89 = scmp.ne.s32.totalorder %s77, %s78
      %p90 = scmp.eq.s32.totalorder %s26, 1
      %p91 = por %p89, %p90
      %p93 = scmp.ne.s32.totalorder %s78, %s92
      %p94 = scmp.eq.s32.totalorder %s26, 0
      %p95 = por %p93, %p94
      %s97 = sadd.s32 %s96, 1
      %p100 = scmp.eq.s32.totalorder %s20, 1
      %p101 = scmp.ne.s32.totalorder %s96, %s98
      %p102 = scmp.eq.s32.totalorder %s20, 0
      %p103 = por %p101, %p102
      %p104 = scmp.ne.s32.totalorder %s96, %s98
      %p105 = scmp.eq.s32.totalorder %s25, 1
      %p106 = por %p104, %p105
      %p107 = scmp.ne.s32.totalorder %s98, %s99
      %p108 = scmp.eq.s32.totalorder %s25, 0
      %p109 = por %p107, %p108
      %p110 = scmp.ne.s32.totalorder %s98, %s99
      %p111 = scmp.eq.s32.totalorder %s26, 1
      %p112 = por %p110, %p111
      %p114 = scmp.ne.s32.totalorder %s99, %s113
      %p115 = scmp.eq.s32.totalorder %s26, 0
      %p116 = por %p114, %p115
      %s118 = sadd.s32 %s117, 1
      %p121 = scmp.eq.s32.totalorder %s20, 1
      %p122 = scmp.ne.s32.totalorder %s117, %s119
      %p123 = scmp.eq.s32.totalorder %s20, 0
      %p124 = por %p122, %p123
      %p125 = scmp.ne.s32.totalorder %s117, %s119
      %p126 = scmp.eq.s32.totalorder %s25, 1
      %p127 = por %p125, %p126
      %p128 = scmp.ne.s32.totalorder %s119, %s120
      %p129 = scmp.eq.s32.totalorder %s25, 0
      %p130 = por %p128, %p129
      %p131 = scmp.ne.s32.totalorder %s119, %s120
      %p132 = scmp.eq.s32.totalorder %s26, 1
      %p133 = por %p131, %p132
      %p135 = scmp.ne.s32.totalorder %s120, %s134
      %p136 = scmp.eq.s32.totalorder %s26, 0
      %p137 = por %p135, %p136
      %s138 = ssub.s32 %s20, %s27
      %p139 = scmp.eq.s32.totalorder %s138, 0
      %s141 = sadd.s32 %s140, 1
      %s142 = scalar_select %p139, %s140, %s141
      %p145 = pneg %p139
      %p146 = scmp.eq.s32.totalorder %s20, 1
      %p147 = por %p145, %p146
      %p148 = scmp.ne.s32.totalorder %s140, %s143
      %p149 = scmp.eq.s32.totalorder %s20, 0
      %p150 = por %p148, %p149
      %p151 = scmp.ne.s32.totalorder %s140, %s143
      %p152 = scmp.eq.s32.totalorder %s25, 1
      %p153 = por %p151, %p152
      %p154 = scmp.ne.s32.totalorder %s143, %s144
      %p155 = scmp.eq.s32.totalorder %s25, 0
      %p156 = por %p154, %p155
      %p157 = scmp.ne.s32.totalorder %s143, %s144
      %p158 = scmp.eq.s32.totalorder %s26, 1
      %p159 = por %p157, %p158
      %p161 = scmp.ne.s32.totalorder %s144, %s160
      %p162 = scmp.eq.s32.totalorder %s26, 0
      %p163 = por %p161, %p162
      %s164 = ssub.s32 %s20, %s27
      %p165 = scmp.eq.s32.totalorder %s164, 0
      %s167 = sadd.s32 %s166, 1
      %s168 = scalar_select %p165, %s166, %s167
      %p171 = pneg %p165
      %p172 = scmp.eq.s32.totalorder %s20, 1
      %p173 = por %p171, %p172
      %p174 = scmp.ne.s32.totalorder %s166, %s169
      %p175 = scmp.eq.s32.totalorder %s20, 0
      %p176 = por %p174, %p175
      %p177 = scmp.ne.s32.totalorder %s166, %s169
      %p178 = scmp.eq.s32.totalorder %s25, 1
      %p179 = por %p177, %p178
      %p180 = scmp.ne.s32.totalorder %s169, %s170
      %p181 = scmp.eq.s32.totalorder %s25, 0
      %p182 = por %p180, %p181
      %p183 = scmp.ne.s32.totalorder %s169, %s170
      %p184 = scmp.eq.s32.totalorder %s26, 1
      %p185 = por %p183, %p184
      %p187 = scmp.ne.s32.totalorder %s170, %s186
      %p188 = scmp.eq.s32.totalorder %s26, 0
      %p189 = por %p187, %p188
      %s190 = ssub.s32 %s20, %s27
      %p191 = scmp.eq.s32.totalorder %s190, 0
      %s193 = sadd.s32 %s192, 1
      %s194 = scalar_select %p191, %s192, %s193
      %p197 = pneg %p191
      %p198 = scmp.eq.s32.totalorder %s20, 1
      %p199 = por %p197, %p198
      %p200 = scmp.ne.s32.totalorder %s192, %s195
      %p201 = scmp.eq.s32.totalorder %s20, 0
      %p202 = por %p200, %p201
      %p203 = scmp.ne.s32.totalorder %s192, %s195
      %p204 = scmp.eq.s32.totalorder %s25, 1
      %p205 = por %p203, %p204
      %p206 = scmp.ne.s32.totalorder %s195, %s196
      %p207 = scmp.eq.s32.totalorder %s25, 0
      %p208 = por %p206, %p207
      %p209 = scmp.ne.s32.totalorder %s195, %s196
      %p210 = scmp.eq.s32.totalorder %s26, 1
      %p211 = por %p209, %p210
      %p213 = scmp.ne.s32.totalorder %s196, %s212
      %p214 = scmp.eq.s32.totalorder %s26, 0
      %p215 = por %p213, %p214
      %p216 = scmp.le.s32.totalorder 1, %s20
      %p217 = scmp.lt.s32.totalorder %s20, 3
      %p218 = pnand %p216, %p217
      %p219 = pneg %p218
      // Predicated region
      $region9: #{de_conv_forward.8} parent=5 // pred_check
        _
      $region10: #{de_conv_forward.8} parent=5 // pred_check_branch
        %221 = sbr.rel (%p218) target = $region12
      $region11: #{de_conv_forward.8} parent=5 // pred_region
        %s222 = ssub.s32 %s20, 1
        // Predicated region
        $region13: #{de_conv_forward.8} parent=11 // pred_check
          %p223 = pneg %p67
        $region14: #{de_conv_forward.8} parent=11 // pred_check_branch
          %225 = sbr.rel (%p223) target = $region16
        $region15: #{de_conv_forward.8} parent=11 // pred_region
          _
        $region16: #{de_conv_forward.8} parent=11 // pred_fallthru
          _
        // Predicated region
        $region17: #{de_conv_forward.8} parent=11 // pred_check
          %p226 = pneg %p88
        $region18: #{de_conv_forward.8} parent=11 // pred_check_branch
          %228 = sbr.rel (%p226) target = $region20
        $region19: #{de_conv_forward.8} parent=11 // pred_region
          _
        $region20: #{de_conv_forward.8} parent=11 // pred_fallthru
          _
        // Predicated region
        $region21: #{de_conv_forward.8} parent=11 // pred_check
          %p229 = pneg %p109
        $region22: #{de_conv_forward.8} parent=11 // pred_check_branch
          %231 = sbr.rel (%p229) target = $region24
        $region23: #{de_conv_forward.8} parent=11 // pred_region
          _
        $region24: #{de_conv_forward.8} parent=11 // pred_fallthru
          _
        // Predicated region
        $region25: #{de_conv_forward.8} parent=11 // pred_check
          %p232 = pneg %p130
        $region26: #{de_conv_forward.8} parent=11 // pred_check_branch
          %234 = sbr.rel (%p232) target = $region28
        $region27: #{de_conv_forward.8} parent=11 // pred_region
          _
        $region28: #{de_conv_forward.8} parent=11 // pred_fallthru
          _
      $region12: #{de_conv_forward.8} parent=5 // pred_fallthru
        _
      %p235 = scmp.lt.s32.totalorder %s20, 2
      // Predicated region
      $region29: #{de_conv_forward.8} parent=5 // pred_check
        %p236 = pneg %p235
      $region30: #{de_conv_forward.8} parent=5 // pred_check_branch
        %238 = sbr.rel (%p236) target = $region32
      $region31: #{de_conv_forward.8} parent=5 // pred_region
        // Predicated region
        $region33: #{de_conv_forward.8} parent=31 // pred_check
          %p239 = pneg %p40
        $region34: #{de_conv_forward.8} parent=31 // pred_check_branch
          %241 = sbr.rel (%p239) target = $region36
        $region35: #{de_conv_forward.8} parent=31 // pred_region
          %p242 = scmp.lt.s32.totalorder %s20, 1
          %s243 = scalar_select %p242, %s20, 1
          %s244 = smul.addr %s243, 4
          %s245 = smul.addr %s244, 8
          %s246 = scalar_lea.vmem %s0, %s245
        $region36: #{de_conv_forward.8} parent=31 // pred_fallthru
          _
      $region32: #{de_conv_forward.8} parent=5 // pred_fallthru
        _
      %p247 = scmp.le.s32.totalorder 1, %s20
      %p248 = scmp.lt.s32.totalorder %s20, 3
      %p249 = pnand %p247, %p248
      %p250 = pneg %p249
      // Predicated region
      $region37: #{de_conv_forward.8} parent=5 // pred_check
        _
      $region38: #{de_conv_forward.8} parent=5 // pred_check_branch
        %252 = sbr.rel (%p249) target = $region40
      $region39: #{de_conv_forward.8} parent=5 // pred_region
        %s253 = ssub.s32 %s20, 1
        %p254 = scmp.lt.s32.totalorder %s25, 1
        %s255 = scalar_select %p254, %s25, 1
        %s256 = smul.addr %s255, 4
        %s257 = smul.addr %s256, 8
        %s258 = scalar_lea.vmem %s0, %s257
        %p259 = pneg %p46
        %p260 = pneg %p43
        %p261 = pneg %p67
        %p262 = pneg %p64
        %p263 = pneg %p88
        %p264 = pneg %p85
        %p265 = pneg %p109
        %p266 = pneg %p106
        %p267 = pneg %p130
        %p268 = pneg %p127
        %p269 = pneg %p156
        %p270 = pneg %p153
        %p271 = scmp.lt.s32.totalorder %s25, 1
        %s272 = scalar_select %p271, %s25, 1
        %s273 = smul.addr %s272, 2
        %s274 = smul.addr %s273, 8
        %s275 = scalar_lea.vmem %s5, %s274
        %p276 = pneg %p182
        %p277 = pneg %p179
        %s278 = sand.u32 %s169, 1
        %s279 = scalar_lea.sflag [#allocation4], %s278
        %s280 = sand.u32 %s169, 1
        %s281 = scalar_lea.vmem [#allocation3], %s280
        %p282 = pneg %p208
        %p283 = pneg %p205
        %s284 = sand.u32 %s195, 1
        %s285 = scalar_lea.sflag [#allocation6], %s284
        %s286 = sand.u32 %s195, 1
        %s287 = scalar_lea.vmem [#allocation5], %s286
        %p288 = scmp.lt.s32.totalorder %s25, 1
        %s289 = scalar_select %p288, %s25, 1
        %s290 = smul.addr %s289, 4
        %s291 = smul.addr %s290, 8
        %s292 = scalar_lea.vmem %s0, %s291
        %p293 = scmp.lt.s32.totalorder %s25, 1
        %s294 = scalar_select %p293, %s25, 1
        %s295 = smul.addr %s294, 2
        %s296 = smul.addr %s295, 8
        %s297 = scalar_lea.vmem %s5, %s296
        %v299 = vld [vmem:[%s292] sm:$0xff]
        %v300 = vld [vmem:[%s292 + $0x8] sm:$0xff]
        %v301 = vld [vmem:[%s292 + $0x10] sm:$0xff]
        %v302 = vld [vmem:[%s292 + $0x18] sm:$0xff]
        %v303 = vld [vmem:[%s1] sm:$0x3]
        %v305 = vlaneseq
        %v306 = vshrl.u32 %v305, 7
        %v307 = vsub.s32 0, %v306
        %v308 = vrot.slane %v303, %v307
        %v309 = vlaneseq
        %v310 = vshrl.u32 %v309, 7
        %v311 = vsub.s32 1, %v310
        %v312 = vrot.slane %v303, %v311
        %v315 = vmul.f32 %v299, %v308
        %v316 = vmul.f32 %v300, %v312
        %v317 = vmul.f32 %v301, %v308
        %v318 = vmul.f32 %v302, %v312
        %v319 = vld [vmem:[%s2] sm:$0x3]
        %v321 = vlaneseq
        %v322 = vshrl.u32 %v321, 7
        %v323 = vsub.s32 0, %v322
        %v324 = vrot.slane %v319, %v323
        %v325 = vlaneseq
        %v326 = vshrl.u32 %v325, 7
        %v327 = vsub.s32 1, %v326
        %v328 = vrot.slane %v319, %v327
        %v331 = vadd.f32 %v315, %v324
        %v332 = vadd.f32 %v316, %v328
        %v333 = vadd.f32 %v317, %v324
        %v334 = vadd.f32 %v318, %v328
        %v335 = vmax.f32 %v331, 0.0
        %v336 = vmax.f32 %v332, 0.0
        %v337 = vmax.f32 %v333, 0.0
        %v338 = vmax.f32 %v334, 0.0
        %v339 = vlaneseq
        %vm340 = vcmp.ge.s32.totalorder %v339, 0
        %vm341 = vcmp.lt.s32.totalorder %v339, 256
        %vm342 = vmand %vm340, %vm341
        %343 = vst.msk [vmem:[#allocation2] ss:$8 sm:$0x3] %vm342, 0.0
        %344 = vst.msk [vmem:[#allocation2] ss:$8 sm:$0x0] %vm342, 0.0
        %s345 = scalar_lea.vmem [#allocation2], 33
        %346 = vst.msk [vmem:[%s345] ss:$8 sm:$0x3] %vm342, 0.0
        %347 = vst.msk [vmem:[%s345] ss:$8 sm:$0x0] %vm342, 0.0
        %vm352 = vcmask 1040384
        %v353 = vrot.slane %v335, 7
        %v354 = vrot.slane %v336, 7
        %v355 = vrot.slane %v337, 7
        %v356 = vsel %vm352, %v353, %v355
        %v357 = vrot.slane %v338, 7
        %v358 = vsel %vm352, %v354, %v357
        %365 = vst [vmem:[#allocation2] sm:$0xfe] %v353
        %366 = vst [vmem:[#allocation2 + $0x8] sm:$0xfe] %v354
        %367 = vst [vmem:[#allocation2 + $0x10] sm:$0xff] %v356
        %368 = vst [vmem:[#allocation2 + $0x18] sm:$0xff] %v358
        %369 = vst [vmem:[#allocation2 + $0x20] sm:$0x1] %v355
        %370 = vst [vmem:[#allocation2 + $0x28] sm:$0x1] %v357
        %v371 = vld [vmem:[#allocation2] sm:$0xff]
        %v372 = vld [vmem:[#allocation2 + $0x8] sm:$0xff]
        %v373 = vld [vmem:[#allocation2 + $0x10] sm:$0xff]
        %v374 = vld [vmem:[#allocation2 + $0x18] sm:$0xff]
        %v375 = vpack.c.bf16 %v373, %v371
        %v376 = vpack.c.bf16 %v374, %v372
        %v377 = vld [vmem:[%s3] sm:$0xf]
        %v378 = vld [vmem:[%s3 + $0x4] sm:$0xf]
        %v379 = vld [vmem:[%s3 + $0x8] sm:$0xf]
        %v380 = vld [vmem:[%s3 + $0xc] sm:$0xf]
        %v381 = vld [vmem:[%s3 + $0x10] sm:$0xf]
        %v382 = vld [vmem:[%s3 + $0x14] sm:$0xf]
        %v383 = vld [vmem:[%s3 + $0x18] sm:$0xf]
        %v384 = vld [vmem:[%s3 + $0x1c] sm:$0xf]
        %v385 = vld [vmem:[%s3 + $0x20] sm:$0xf]
        %v386 = vld [vmem:[%s3 + $0x24] sm:$0xf]
        %v387 = vld [vmem:[%s3 + $0x28] sm:$0xf]
        %v388 = vld [vmem:[%s3 + $0x2c] sm:$0xf]
        %v389 = vld [vmem:[%s3 + $0x30] sm:$0xf]
        %v390 = vld [vmem:[%s3 + $0x34] sm:$0xf]
        %v391 = vld [vmem:[%s3 + $0x38] sm:$0xf]
        %v392 = vld [vmem:[%s3 + $0x3c] sm:$0xf]
        %v393 = vld [vmem:[%s3 + $0x40] sm:$0xf]
        %v394 = vld [vmem:[%s3 + $0x44] sm:$0xf]
        %v395 = vld [vmem:[%s3 + $0x48] sm:$0xf]
        %v396 = vld [vmem:[%s3 + $0x4c] sm:$0xf]
        %v397 = vld [vmem:[%s3 + $0x50] sm:$0xf]
        %v398 = vld [vmem:[%s3 + $0x54] sm:$0xf]
        %v399 = vld [vmem:[%s3 + $0x58] sm:$0xf]
        %v400 = vld [vmem:[%s3 + $0x5c] sm:$0xf]
        %v401 = vld [vmem:[%s3 + $0x60] sm:$0xf]
        %v402 = vld [vmem:[%s3 + $0x64] sm:$0xf]
        %v403 = vld [vmem:[%s3 + $0x68] sm:$0xf]
        %v404 = vld [vmem:[%s3 + $0x6c] sm:$0xf]
        %v405 = vld [vmem:[%s3 + $0x70] sm:$0xf]
        %v406 = vld [vmem:[%s3 + $0x74] sm:$0xf]
        %v407 = vld [vmem:[%s3 + $0x78] sm:$0xf]
        %v408 = vld [vmem:[%s3 + $0x7c] sm:$0xf]
        %v409 = vld [vmem:[#allocation2] sm:$0xfe]
        %v410 = vld [vmem:[#allocation2 + $0x8] sm:$0xfe]
        %v411 = vld [vmem:[#allocation2 + $0x20] sm:$0x1]
        %v412 = vld [vmem:[#allocation2 + $0x28] sm:$0x1]
        %v413 = vpack.c.bf16 %v373, %v409
        %v414 = vpack.c.bf16 %v374, %v410
        %v415 = vpack.c.bf16 %v411, %v411
        %v416 = vpack.c.bf16 %v412, %v412
        %s417 = scalar_lea.vmem %s3, 128
        %v418 = vld [vmem:[%s417] sm:$0xf]
        %v419 = vld [vmem:[%s417 + $0x4] sm:$0xf]
        %v420 = vld [vmem:[%s417 + $0x8] sm:$0xf]
        %v421 = vld [vmem:[%s417 + $0xc] sm:$0xf]
        %v422 = vld [vmem:[%s417 + $0x10] sm:$0xf]
        %v423 = vld [vmem:[%s417 + $0x14] sm:$0xf]
        %v424 = vld [vmem:[%s417 + $0x18] sm:$0xf]
        %v425 = vld [vmem:[%s417 + $0x1c] sm:$0xf]
        %v426 = vld [vmem:[%s417 + $0x20] sm:$0xf]
        %v427 = vld [vmem:[%s417 + $0x24] sm:$0xf]
        %v428 = vld [vmem:[%s417 + $0x28] sm:$0xf]
        %v429 = vld [vmem:[%s417 + $0x2c] sm:$0xf]
        %v430 = vld [vmem:[%s417 + $0x30] sm:$0xf]
        %v431 = vld [vmem:[%s417 + $0x34] sm:$0xf]
        %v432 = vld [vmem:[%s417 + $0x38] sm:$0xf]
        %v433 = vld [vmem:[%s417 + $0x3c] sm:$0xf]
        %v434 = vld [vmem:[%s417 + $0x40] sm:$0xf]
        %v435 = vld [vmem:[%s417 + $0x44] sm:$0xf]
        %v436 = vld [vmem:[%s417 + $0x48] sm:$0xf]
        %v437 = vld [vmem:[%s417 + $0x4c] sm:$0xf]
        %v438 = vld [vmem:[%s417 + $0x50] sm:$0xf]
        %v439 = vld [vmem:[%s417 + $0x54] sm:$0xf]
        %v440 = vld [vmem:[%s417 + $0x58] sm:$0xf]
        %v441 = vld [vmem:[%s417 + $0x5c] sm:$0xf]
        %v442 = vld [vmem:[%s417 + $0x60] sm:$0xf]
        %v443 = vld [vmem:[%s417 + $0x64] sm:$0xf]
        %v444 = vld [vmem:[%s417 + $0x68] sm:$0xf]
        %v445 = vld [vmem:[%s417 + $0x6c] sm:$0xf]
        %v446 = vld [vmem:[%s417 + $0x70] sm:$0xf]
        %v447 = vld [vmem:[%s417 + $0x74] sm:$0xf]
        %v448 = vld [vmem:[%s417 + $0x78] sm:$0xf]
        %v449 = vld [vmem:[%s417 + $0x7c] sm:$0xf]
        %vm450 = vsmask.f32 7424
        %v452 = vshrl.u32 %v413, 16
        %v454 = vshll.u32 %v413, 16
        %v456 = vrot.slane %v454, 1
        %v457 = vor.u32 %v452, %v456
        %v459 = vshll.u32 %v415, 16
        %v461 = vrot.slane %v459, 1
        %v462 = vsel %vm450, %v457, %v461
        %v464 = vshrl.u32 %v414, 16
        %v466 = vshll.u32 %v414, 16
        %v468 = vrot.slane %v466, 1
        %v469 = vor.u32 %v464, %v468
        %v471 = vshll.u32 %v416, 16
        %v473 = vrot.slane %v471, 1
        %v474 = vsel %vm450, %v469, %v473
        %v509 = vunpack.c.l.b16 %v418
        %v510 = vunpack.c.l.b16 %v419
        %v511 = vunpack.c.l.b16 %v420
        %v512 = vunpack.c.l.b16 %v421
        %v513 = vunpack.c.l.b16 %v422
        %v514 = vunpack.c.l.b16 %v423
        %v515 = vunpack.c.l.b16 %v424
        %v516 = vunpack.c.l.b16 %v425
        %v517 = vunpack.c.l.b16 %v426
        %v518 = vunpack.c.l.b16 %v427
        %v519 = vunpack.c.l.b16 %v428
        %v520 = vunpack.c.l.b16 %v429
        %v521 = vunpack.c.l.b16 %v430
        %v522 = vunpack.c.l.b16 %v431
        %v523 = vunpack.c.l.b16 %v432
        %v524 = vunpack.c.l.b16 %v433
        %v525 = vunpack.c.l.b16 %v434
        %v526 = vunpack.c.l.b16 %v435
        %v527 = vunpack.c.l.b16 %v436
        %v528 = vunpack.c.l.b16 %v437
        %v529 = vunpack.c.l.b16 %v438
        %v530 = vunpack.c.l.b16 %v439
        %v531 = vunpack.c.l.b16 %v440
        %v532 = vunpack.c.l.b16 %v441
        %v533 = vunpack.c.l.b16 %v442
        %v534 = vunpack.c.l.b16 %v443
        %v535 = vunpack.c.l.b16 %v444
        %v536 = vunpack.c.l.b16 %v445
        %v537 = vunpack.c.l.b16 %v446
        %v538 = vunpack.c.l.b16 %v447
        %v539 = vunpack.c.l.b16 %v448
        %v540 = vunpack.c.l.b16 %v449
        %v541 = vpack.c.b16 %v510, %v509
        %v542 = vpack.c.b16 %v512, %v511
        %v543 = vpack.c.b16 %v514, %v513
        %v544 = vpack.c.b16 %v516, %v515
        %v545 = vpack.c.b16 %v518, %v517
        %v546 = vpack.c.b16 %v520, %v519
        %v547 = vpack.c.b16 %v522, %v521
        %v548 = vpack.c.b16 %v524, %v523
        %v549 = vpack.c.b16 %v526, %v525
        %v550 = vpack.c.b16 %v528, %v527
        %v551 = vpack.c.b16 %v530, %v529
        %v552 = vpack.c.b16 %v532, %v531
        %v553 = vpack.c.b16 %v534, %v533
        %v554 = vpack.c.b16 %v536, %v535
        %v555 = vpack.c.b16 %v538, %v537
        %v556 = vpack.c.b16 %v540, %v539
        %573 = vmatprep.subr.bf16.mxu0 0
        %574 = vmatpush1.bf16.msra.mxu0 %v541
        %575 = vmatprep.subr.bf16.mxu0 0
        %576 = vmatpush1.bf16.msra.mxu0 %v542
        %577 = vmatprep.subr.bf16.mxu0 0
        %578 = vmatpush1.bf16.msra.mxu0 %v543
        %579 = vmatprep.subr.bf16.mxu0 0
        %580 = vmatpush1.bf16.msra.mxu0 %v544
        %581 = vmatprep.subr.bf16.mxu0 0
        %582 = vmatpush1.bf16.msra.mxu0 %v545
        %583 = vmatprep.subr.bf16.mxu0 0
        %584 = vmatpush1.bf16.msra.mxu0 %v546
        %585 = vmatprep.subr.bf16.mxu0 0
        %586 = vmatpush1.bf16.msra.mxu0 %v547
        %587 = vmatprep.subr.bf16.mxu0 0
        %588 = vmatpush1.bf16.msra.mxu0 %v548
        %589 = vmatprep.subr.bf16.mxu0 0
        %590 = vmatpush1.bf16.msra.mxu0 %v549
        %591 = vmatprep.subr.bf16.mxu0 0
        %592 = vmatpush1.bf16.msra.mxu0 %v550
        %593 = vmatprep.subr.bf16.mxu0 0
        %594 = vmatpush1.bf16.msra.mxu0 %v551
        %595 = vmatprep.subr.bf16.mxu0 0
        %596 = vmatpush1.bf16.msra.mxu0 %v552
        %597 = vmatprep.subr.bf16.mxu0 0
        %598 = vmatpush1.bf16.msra.mxu0 %v553
        %599 = vmatprep.subr.bf16.mxu0 0
        %600 = vmatpush1.bf16.msra.mxu0 %v554
        %601 = vmatprep.subr.bf16.mxu0 0
        %602 = vmatpush1.bf16.msra.mxu0 %v555
        %603 = vmatprep.subr.bf16.mxu0 0
        %604 = vmatpush1.bf16.msra.mxu0 %v556
        %605 = vmatprep.mubr.bf16.mxu0 %v474
        %606 = vmatmul.mubr.bf16.gmra.mrb[0].mxu0 %v462
        %v607 = vpop.f32.mrb[0].mxu0
        %v608 = vadd.f32 0.0, %v607
        %v609 = vpop.f32.mrb[0].mxu0
        %v610 = vpop.f32.mrb[0].mxu0
        %v611 = vadd.f32 0.0, %v610
        %v612 = vpop.f32.mrb[0].mxu0
        %613 = vdwg.mxu0
        %v646 = vunpack.c.l.b16 %v377
        %v647 = vunpack.c.l.b16 %v378
        %v648 = vunpack.c.l.b16 %v379
        %v649 = vunpack.c.l.b16 %v380
        %v650 = vunpack.c.l.b16 %v381
        %v651 = vunpack.c.l.b16 %v382
        %v652 = vunpack.c.l.b16 %v383
        %v653 = vunpack.c.l.b16 %v384
        %v654 = vunpack.c.l.b16 %v385
        %v655 = vunpack.c.l.b16 %v386
        %v656 = vunpack.c.l.b16 %v387
        %v657 = vunpack.c.l.b16 %v388
        %v658 = vunpack.c.l.b16 %v389
        %v659 = vunpack.c.l.b16 %v390
        %v660 = vunpack.c.l.b16 %v391
        %v661 = vunpack.c.l.b16 %v392
        %v662 = vunpack.c.l.b16 %v393
        %v663 = vunpack.c.l.b16 %v394
        %v664 = vunpack.c.l.b16 %v395
        %v665 = vunpack.c.l.b16 %v396
        %v666 = vunpack.c.l.b16 %v397
        %v667 = vunpack.c.l.b16 %v398
        %v668 = vunpack.c.l.b16 %v399
        %v669 = vunpack.c.l.b16 %v400
        %v670 = vunpack.c.l.b16 %v401
        %v671 = vunpack.c.l.b16 %v402
        %v672 = vunpack.c.l.b16 %v403
        %v673 = vunpack.c.l.b16 %v404
        %v674 = vunpack.c.l.b16 %v405
        %v675 = vunpack.c.l.b16 %v406
        %v676 = vunpack.c.l.b16 %v407
        %v677 = vunpack.c.l.b16 %v408
        %v678 = vpack.c.b16 %v647, %v646
        %v679 = vpack.c.b16 %v649, %v648
        %v680 = vpack.c.b16 %v651, %v650
        %v681 = vpack.c.b16 %v653, %v652
        %v682 = vpack.c.b16 %v655, %v654
        %v683 = vpack.c.b16 %v657, %v656
        %v684 = vpack.c.b16 %v659, %v658
        %v685 = vpack.c.b16 %v661, %v660
        %v686 = vpack.c.b16 %v663, %v662
        %v687 = vpack.c.b16 %v665, %v664
        %v688 = vpack.c.b16 %v667, %v666
        %v689 = vpack.c.b16 %v669, %v668
        %v690 = vpack.c.b16 %v671, %v670
        %v691 = vpack.c.b16 %v673, %v672
        %v692 = vpack.c.b16 %v675, %v674
        %v693 = vpack.c.b16 %v677, %v676
        %710 = vmatprep.subr.bf16.mxu0 0
        %711 = vmatpush1.bf16.msra.mxu0 %v678
        %712 = vmatprep.subr.bf16.mxu0 0
        %713 = vmatpush1.bf16.msra.mxu0 %v679
        %714 = vmatprep.subr.bf16.mxu0 0
        %715 = vmatpush1.bf16.msra.mxu0 %v680
        %716 = vmatprep.subr.bf16.mxu0 0
        %717 = vmatpush1.bf16.msra.mxu0 %v681
        %718 = vmatprep.subr.bf16.mxu0 0
        %719 = vmatpush1.bf16.msra.mxu0 %v682
        %720 = vmatprep.subr.bf16.mxu0 0
        %721 = vmatpush1.bf16.msra.mxu0 %v683
        %722 = vmatprep.subr.bf16.mxu0 0
        %723 = vmatpush1.bf16.msra.mxu0 %v684
        %724 = vmatprep.subr.bf16.mxu0 0
        %725 = vmatpush1.bf16.msra.mxu0 %v685
        %726 = vmatprep.subr.bf16.mxu0 0
        %727 = vmatpush1.bf16.msra.mxu0 %v686
        %728 = vmatprep.subr.bf16.mxu0 0
        %729 = vmatpush1.bf16.msra.mxu0 %v687
        %730 = vmatprep.subr.bf16.mxu0 0
        %731 = vmatpush1.bf16.msra.mxu0 %v688
        %732 = vmatprep.subr.bf16.mxu0 0
        %733 = vmatpush1.bf16.msra.mxu0 %v689
        %734 = vmatprep.subr.bf16.mxu0 0
        %735 = vmatpush1.bf16.msra.mxu0 %v690
        %736 = vmatprep.subr.bf16.mxu0 0
        %737 = vmatpush1.bf16.msra.mxu0 %v691
        %738 = vmatprep.subr.bf16.mxu0 0
        %739 = vmatpush1.bf16.msra.mxu0 %v692
        %740 = vmatprep.subr.bf16.mxu0 0
        %741 = vmatpush1.bf16.msra.mxu0 %v693
        %742 = vmatprep.mubr.bf16.mxu0 %v376
        %743 = vmatmul.mubr.bf16.gmra.mrb[0].mxu0 %v375
        %v744 = vpop.f32.mrb[0].mxu0
        %v745 = vadd.f32 %v608, %v744
        %v746 = vpop.f32.mrb[0].mxu0
        %v747 = vpop.f32.mrb[0].mxu0
        %v748 = vadd.f32 %v611, %v747
        %v749 = vpop.f32.mrb[0].mxu0
        %750 = vdwg.mxu0
        %v751 = vld [vmem:[#allocation2] sm:$0xfc]
        %v752 = vld [vmem:[#allocation2 + $0x8] sm:$0xfc]
        %v753 = vld [vmem:[#allocation2 + $0x20] sm:$0x3]
        %v754 = vld [vmem:[#allocation2 + $0x28] sm:$0x3]
        %v755 = vpack.c.bf16 %v373, %v751
        %v756 = vpack.c.bf16 %v374, %v752
        %v757 = vpack.c.bf16 %v753, %v753
        %v758 = vpack.c.bf16 %v754, %v754
        %s759 = scalar_lea.vmem %s3, 256
        %v760 = vld [vmem:[%s759] sm:$0xf]
        %v761 = vld [vmem:[%s759 + $0x4] sm:$0xf]
        %v762 = vld [vmem:[%s759 + $0x8] sm:$0xf]
        %v763 = vld [vmem:[%s759 + $0xc] sm:$0xf]
        %v764 = vld [vmem:[%s759 + $0x10] sm:$0xf]
        %v765 = vld [vmem:[%s759 + $0x14] sm:$0xf]
        %v766 = vld [vmem:[%s759 + $0x18] sm:$0xf]
        %v767 = vld [vmem:[%s759 + $0x1c] sm:$0xf]
        %v768 = vld [vmem:[%s759 + $0x20] sm:$0xf]
        %v769 = vld [vmem:[%s759 + $0x24] sm:$0xf]
        %v770 = vld [vmem:[%s759 + $0x28] sm:$0xf]
        %v771 = vld [vmem:[%s759 + $0x2c] sm:$0xf]
        %v772 = vld [vmem:[%s759 + $0x30] sm:$0xf]
        %v773 = vld [vmem:[%s759 + $0x34] sm:$0xf]
        %v774 = vld [vmem:[%s759 + $0x38] sm:$0xf]
        %v775 = vld [vmem:[%s759 + $0x3c] sm:$0xf]
        %v776 = vld [vmem:[%s759 + $0x40] sm:$0xf]
        %v777 = vld [vmem:[%s759 + $0x44] sm:$0xf]
        %v778 = vld [vmem:[%s759 + $0x48] sm:$0xf]
        %v779 = vld [vmem:[%s759 + $0x4c] sm:$0xf]
        %v780 = vld [vmem:[%s759 + $0x50] sm:$0xf]
        %v781 = vld [vmem:[%s759 + $0x54] sm:$0xf]
        %v782 = vld [vmem:[%s759 + $0x58] sm:$0xf]
        %v783 = vld [vmem:[%s759 + $0x5c] sm:$0xf]
        %v784 = vld [vmem:[%s759 + $0x60] sm:$0xf]
        %v785 = vld [vmem:[%s759 + $0x64] sm:$0xf]
        %v786 = vld [vmem:[%s759 + $0x68] sm:$0xf]
        %v787 = vld [vmem:[%s759 + $0x6c] sm:$0xf]
        %v788 = vld [vmem:[%s759 + $0x70] sm:$0xf]
        %v789 = vld [vmem:[%s759 + $0x74] sm:$0xf]
        %v790 = vld [vmem:[%s759 + $0x78] sm:$0xf]
        %v791 = vld [vmem:[%s759 + $0x7c] sm:$0xf]
        %vm796 = vcmask 1046528
        %v797 = vrot.slane %v755, 1
        %v798 = vrot.slane %v757, 1
        %v799 = vsel %vm796, %v797, %v798
        %v800 = vrot.slane %v756, 1
        %v801 = vrot.slane %v758, 1
        %v802 = vsel %vm796, %v800, %v801
        %v837 = vunpack.c.l.b16 %v760
        %v838 = vunpack.c.l.b16 %v761
        %v839 = vunpack.c.l.b16 %v762
        %v840 = vunpack.c.l.b16 %v763
        %v841 = vunpack.c.l.b16 %v764
        %v842 = vunpack.c.l.b16 %v765
        %v843 = vunpack.c.l.b16 %v766
        %v844 = vunpack.c.l.b16 %v767
        %v845 = vunpack.c.l.b16 %v768
        %v846 = vunpack.c.l.b16 %v769
        %v847 = vunpack.c.l.b16 %v770
        %v848 = vunpack.c.l.b16 %v771
        %v849 = vunpack.c.l.b16 %v772
        %v850 = vunpack.c.l.b16 %v773
        %v851 = vunpack.c.l.b16 %v774
        %v852 = vunpack.c.l.b16 %v775
        %v853 = vunpack.c.l.b16 %v776
        %v854 = vunpack.c.l.b16 %v777
        %v855 = vunpack.c.l.b16 %v778
        %v856 = vunpack.c.l.b16 %v779
        %v857 = vunpack.c.l.b16 %v780
        %v858 = vunpack.c.l.b16 %v781
        %v859 = vunpack.c.l.b16 %v782
        %v860 = vunpack.c.l.b16 %v783
        %v861 = vunpack.c.l.b16 %v784
        %v862 = vunpack.c.l.b16 %v785
        %v863 = vunpack.c.l.b16 %v786
        %v864 = vunpack.c.l.b16 %v787
        %v865 = vunpack.c.l.b16 %v788
        %v866 = vunpack.c.l.b16 %v789
        %v867 = vunpack.c.l.b16 %v790
        %v868 = vunpack.c.l.b16 %v791
        %v869 = vpack.c.b16 %v838, %v837
        %v870 = vpack.c.b16 %v840, %v839
        %v871 = vpack.c.b16 %v842, %v841
        %v872 = vpack.c.b16 %v844, %v843
        %v873 = vpack.c.b16 %v846, %v845
        %v874 = vpack.c.b16 %v848, %v847
        %v875 = vpack.c.b16 %v850, %v849
        %v876 = vpack.c.b16 %v852, %v851
        %v877 = vpack.c.b16 %v854, %v853
        %v878 = vpack.c.b16 %v856, %v855
        %v879 = vpack.c.b16 %v858, %v857
        %v880 = vpack.c.b16 %v860, %v859
        %v881 = vpack.c.b16 %v862, %v861
        %v882 = vpack.c.b16 %v864, %v863
        %v883 = vpack.c.b16 %v866, %v865
        %v884 = vpack.c.b16 %v868, %v867
        %901 = vmatprep.subr.bf16.mxu0 0
        %902 = vmatpush1.bf16.msra.mxu0 %v869
        %903 = vmatprep.subr.bf16.mxu0 0
        %904 = vmatpush1.bf16.msra.mxu0 %v870
        %905 = vmatprep.subr.bf16.mxu0 0
        %906 = vmatpush1.bf16.msra.mxu0 %v871
        %907 = vmatprep.subr.bf16.mxu0 0
        %908 = vmatpush1.bf16.msra.mxu0 %v872
        %909 = vmatprep.subr.bf16.mxu0 0
        %910 = vmatpush1.bf16.msra.mxu0 %v873
        %911 = vmatprep.subr.bf16.mxu0 0
        %912 = vmatpush1.bf16.msra.mxu0 %v874
        %913 = vmatprep.subr.bf16.mxu0 0
        %914 = vmatpush1.bf16.msra.mxu0 %v875
        %915 = vmatprep.subr.bf16.mxu0 0
        %916 = vmatpush1.bf16.msra.mxu0 %v876
        %917 = vmatprep.subr.bf16.mxu0 0
        %918 = vmatpush1.bf16.msra.mxu0 %v877
        %919 = vmatprep.subr.bf16.mxu0 0
        %920 = vmatpush1.bf16.msra.mxu0 %v878
        %921 = vmatprep.subr.bf16.mxu0 0
        %922 = vmatpush1.bf16.msra.mxu0 %v879
        %923 = vmatprep.subr.bf16.mxu0 0
        %924 = vmatpush1.bf16.msra.mxu0 %v880
        %925 = vmatprep.subr.bf16.mxu0 0
        %926 = vmatpush1.bf16.msra.mxu0 %v881
        %927 = vmatprep.subr.bf16.mxu0 0
        %928 = vmatpush1.bf16.msra.mxu0 %v882
        %929 = vmatprep.subr.bf16.mxu0 0
        %930 = vmatpush1.bf16.msra.mxu0 %v883
        %931 = vmatprep.subr.bf16.mxu0 0
        %932 = vmatpush1.bf16.msra.mxu0 %v884
        %933 = vmatprep.mubr.bf16.mxu0 %v802
        %934 = vmatmul.mubr.bf16.gmra.mrb[0].mxu0 %v799
        %v935 = vpop.f32.mrb[0].mxu0
        %v936 = vadd.f32 0.0, %v935
        %v937 = vpop.f32.mrb[0].mxu0
        %v938 = vpop.f32.mrb[0].mxu0
        %v939 = vadd.f32 0.0, %v938
        %v940 = vpop.f32.mrb[0].mxu0
        %941 = vdwg.mxu0
        %v942 = vadd.f32 %v745, %v936
        %v943 = vadd.f32 %v748, %v939
        %v944 = vld [vmem:[%s4] sm:$0x1]
        %v946 = vlaneseq
        %v947 = vshrl.u32 %v946, 7
        %v948 = vsub.s32 0, %v947
        %v949 = vrot.slane %v944, %v948
        %v951 = vadd.f32 %v942, %v949
        %v952 = vadd.f32 %v943, %v949
        %953 = vst [vmem:[%s297] sm:$0xff] %v951
        %954 = vst [vmem:[%s297 + $0x8] sm:$0xff] %v952
        %v955 = vadd.f32 %v951, %v952
        %v956 = vrot.slane %v955, 4
        %v957 = vadd.f32 %v955, %v956
        %v958 = vrot.slane %v957, 2
        %v959 = vadd.f32 %v957, %v958
        %v960 = vrot.slane %v959, 1
        %v961 = vadd.f32 %v959, %v960
        %962 = vst [vmem:[%s281] sm:$0x1] %v961
        %v963 = vmul.f32 %v951, %v951
        %v964 = vmul.f32 %v952, %v952
        %v965 = vadd.f32 %v963, %v964
        %v966 = vrot.slane %v965, 4
        %v967 = vadd.f32 %v965, %v966
        %v968 = vrot.slane %v967, 2
        %v969 = vadd.f32 %v967, %v968
        %v970 = vrot.slane %v969, 1
        %v971 = vadd.f32 %v969, %v970
        %972 = vst [vmem:[%s287] sm:$0x1] %v971
        %p973 = scmp.lt.s32.totalorder %s25, 1
        %s974 = scalar_select %p973, %s25, 1
        %s975 = smul.addr %s974, 2
        %s976 = smul.addr %s975, 8
        %s977 = scalar_lea.vmem %s5, %s976
        %s978 = sand.u32 %s169, 1
        %s979 = scalar_lea.sflag [#allocation4], %s978
        %s980 = sand.u32 %s169, 1
        %s981 = scalar_lea.vmem [#allocation3], %s980
        %s982 = sand.u32 %s195, 1
        %s983 = scalar_lea.sflag [#allocation6], %s982
        %s984 = sand.u32 %s195, 1
        %s985 = scalar_lea.vmem [#allocation5], %s984
        // Predicated region
        $region41: #{de_conv_forward.8} parent=39 // pred_check
          %p986 = pneg %p153
        $region42: #{de_conv_forward.8} parent=39 // pred_check_branch
          %988 = sbr.rel (%p986) target = $region44
        $region43: #{de_conv_forward.8} parent=39 // pred_region
          _
        $region44: #{de_conv_forward.8} parent=39 // pred_fallthru
          _
        // Predicated region
        $region45: #{de_conv_forward.8} parent=39 // pred_check
          %p989 = pneg %p179
        $region46: #{de_conv_forward.8} parent=39 // pred_check_branch
          %991 = sbr.rel (%p989) target = $region48
        $region47: #{de_conv_forward.8} parent=39 // pred_region
          %s993 = ssub.s32 16, 16
          %994 = vsyncadd %s979, %s993
          %s995 = smul.addr %s25, 16
          %s996 = scalar_lea.hbm %s6, %s995
          %s998 = sshll.u32 %s981, 4
          %s999 = int_to_ptr.vmem [resolvable:$true] %s998
          %1001 = dma.vmem_to_hbm [thread:$0]  %s999, 16, %s996, %s979
        $region48: #{de_conv_forward.8} parent=39 // pred_fallthru
          _
        // Predicated region
        $region49: #{de_conv_forward.8} parent=39 // pred_check
          %p1002 = pneg %p205
        $region50: #{de_conv_forward.8} parent=39 // pred_check_branch
          %1004 = sbr.rel (%p1002) target = $region52
        $region51: #{de_conv_forward.8} parent=39 // pred_region
          %s1006 = ssub.s32 16, 16
          %1007 = vsyncadd %s983, %s1006
          %s1008 = smul.addr %s25, 16
          %s1009 = scalar_lea.hbm %s7, %s1008
          %s1011 = sshll.u32 %s985, 4
          %s1012 = int_to_ptr.vmem [resolvable:$true] %s1011
          %1014 = dma.vmem_to_hbm [thread:$0]  %s1012, 16, %s1009, %s983
        $region52: #{de_conv_forward.8} parent=39 // pred_fallthru
          _
      $region40: #{de_conv_forward.8} parent=5 // pred_fallthru
        _
      %p1015 = scmp.le.s32.totalorder 2, %s20
      // Predicated region
      $region53: #{de_conv_forward.8} parent=5 // pred_check
        %p1016 = pneg %p1015
      $region54: #{de_conv_forward.8} parent=5 // pred_check_branch
        %1018 = sbr.rel (%p1016) target = $region56
      $region55: #{de_conv_forward.8} parent=5 // pred_region
        %s1019 = ssub.s32 %s20, 2
        // Predicated region
        $region57: #{de_conv_forward.8} parent=55 // pred_check
          %p1020 = pneg %p159
        $region58: #{de_conv_forward.8} parent=55 // pred_check_branch
          %1022 = sbr.rel (%p1020) target = $region60
        $region59: #{de_conv_forward.8} parent=55 // pred_region
          %p1023 = scmp.lt.s32.totalorder %s26, 1
          %s1024 = scalar_select %p1023, %s26, 1
          %s1025 = smul.addr %s1024, 2
          %s1026 = smul.addr %s1025, 8
          %s1027 = scalar_lea.vmem %s5, %s1026
        $region60: #{de_conv_forward.8} parent=55 // pred_fallthru
          _
        // Predicated region
        $region61: #{de_conv_forward.8} parent=55 // pred_check
          %p1028 = pneg %p185
        $region62: #{de_conv_forward.8} parent=55 // pred_check_branch
          %1030 = sbr.rel (%p1028) target = $region64
        $region63: #{de_conv_forward.8} parent=55 // pred_region
          %s1031 = sand.u32 %s170, 1
          %s1032 = scalar_lea.sflag [#allocation4], %s1031
          %s1033 = sand.u32 %s170, 1
          %s1034 = scalar_lea.vmem [#allocation3], %s1033
          %1035 = dma.done %s1032, 16
        $region64: #{de_conv_forward.8} parent=55 // pred_fallthru
          _
        // Predicated region
        $region65: #{de_conv_forward.8} parent=55 // pred_check
          %p1036 = pneg %p211
        $region66: #{de_conv_forward.8} parent=55 // pred_check_branch
          %1038 = sbr.rel (%p1036) target = $region68
        $region67: #{de_conv_forward.8} parent=55 // pred_region
          %s1039 = sand.u32 %s196, 1
          %s1040 = scalar_lea.sflag [#allocation6], %s1039
          %s1041 = sand.u32 %s196, 1
          %s1042 = scalar_lea.vmem [#allocation5], %s1041
          %1043 = dma.done %s1040, 16
        $region68: #{de_conv_forward.8} parent=55 // pred_fallthru
          _
      $region56: #{de_conv_forward.8} parent=5 // pred_fallthru
        _
    $region6: #{de_conv_forward.8} parent=1 // loop_footer
      %s24 = sadd.s32 1, %s20
    $region7: #{de_conv_forward.8} parent=1 // loop_footer_branch
      %19 = sbr.rel target = $region3
    $region8: #{de_conv_forward.8} parent=1 // loop_exit
      _
    %1044 = vsyncpa [#allocation4], 1
    %s1045 = scalar_lea.sflag [#allocation4], 1
    %1046 = vsyncpa %s1045, 1
    %1047 = vsyncpa [#allocation6], 1
    %s1048 = scalar_lea.sflag [#allocation6], 1
    %1049 = vsyncpa %s1048, 1

// kernel: de_conv_forward.9
$region0: #{de_conv_forward.9}
  #allocation0 [shape = 'u32[]', space=smem, size = 0x4, offset = 0x4, fixed_abs, tag = 'smem constant byte address 0x4 - core index']
  #allocation1 [shape = 'u32[144,128]{1,0:T(1,128)}', space=vmem, size = 0x12000, scoped, tag = 'internal scratch']
  #allocation2 [shape = 'f32[18,128]{1,0:T(8,128)}', space=vmem, size = 0x3000, scoped, tag = 'scratch operand']
  %s0 = inlined_call_operand.vmem [shape: f32[2,16,128], index: 0, kind: input, shape index: {}]
  %s1 = inlined_call_operand.vmem [shape: f32[1,128], index: 1, kind: input, shape index: {}]
  %s2 = inlined_call_operand.vmem [shape: f32[1,128], index: 2, kind: input, shape index: {}]
  %s3 = inlined_call_operand.vmem [shape: bf16[3,128,128], index: 3, kind: input, shape index: {}]
  %s4 = inlined_call_operand.vmem [shape: f32[1,128], index: 4, kind: input, shape index: {}]
  %s5 = inlined_call_operand.vmem [shape: f32[2,16,128], index: 5, kind: input, shape index: {}]
  %s6 = inlined_call_operand.vmem [shape: f32[2,16,128], index: 6, kind: output, shape index: {0}]
  %s7 = inlined_call_operand.hbm [shape: f32[2,1,128], index: 7, kind: output, shape index: {1}]
  %s8 = inlined_call_operand.hbm [shape: f32[2,1,128], index: 8, kind: output, shape index: {2}]
  %9 = xla_tuple %s6, %s7, %s8
  %s10 = sld [smem:[#allocation0]]
  $region73: #{de_conv_forward.9} parent=0
    _
  %s12 = ssub.s32 1, %s10
  %s13 = scalar_select 0, %s12, %s10
  $region1: #{de_conv_forward.9} parent=0
    #allocation3 [shape = 'u8[1024]{0}', space=vmem, size = 0x400, scoped, tag = 'output window, operand 1']
    #allocation4 [shape = 's32[2]{0}', space=sflag, size = 0x8, scoped, tag = 'scoped memory for de_conv_forward.9']
    #allocation5 [shape = 'u8[1024]{0}', space=vmem, size = 0x400, scoped, tag = 'output window, operand 2']
    #allocation6 [shape = 's32[2]{0}', space=sflag, size = 0x8, scoped, tag = 'scoped memory for de_conv_forward.9']
    %14 = vsyncpa [#allocation4], 0
    %s15 = scalar_lea.sflag [#allocation4], 1
    %16 = vsyncpa %s15, 0
    %17 = vsyncpa [#allocation6], 0
    %s18 = scalar_lea.sflag [#allocation6], 1
    %19 = vsyncpa %s18, 0
    loop: start=0, step=1, limit=4
    $region2: #{de_conv_forward.9} parent=1 // loop_pre_header
      _
    $region3: #{de_conv_forward.9} parent=1 // loop_header
      %s21 = sphi 0, %s25
      %p22 = scmp.ge.s32.totalorder %s21, 4
      %s31 = sphi 0, %s33
      %s34 = sphi 0, %s31
      %s35 = sphi 0, %s34
      %s51 = sphi 0, %s35
      %s55 = sphi 0, %s55
      %s57 = sphi 0, %s55
      %s58 = sphi 0, %s57
      %s72 = sphi 0, %s58
      %s76 = sphi 0, %s76
      %s78 = sphi 0, %s76
      %s79 = sphi 0, %s78
      %s93 = sphi 0, %s79
      %s97 = sphi 0, %s97
      %s99 = sphi 0, %s97
      %s100 = sphi 0, %s99
      %s114 = sphi 0, %s100
      %s118 = sphi 0, %s118
      %s120 = sphi 0, %s118
      %s121 = sphi 0, %s120
      %s135 = sphi 0, %s121
      %s141 = sphi 0, %s143
      %s144 = sphi 0, %s141
      %s145 = sphi 0, %s144
      %s161 = sphi 0, %s145
      %s167 = sphi 0, %s169
      %s170 = sphi 0, %s167
      %s171 = sphi 0, %s170
      %s187 = sphi 0, %s171
      %s193 = sphi 0, %s195
      %s196 = sphi 0, %s193
      %s197 = sphi 0, %s196
      %s213 = sphi 0, %s197
      %s219 = sphi 0, %s221
      %s222 = sphi 0, %s219
      %s223 = sphi 0, %s222
      %s239 = sphi 0, %s223
    $region4: #{de_conv_forward.9} parent=1 // loop_header_branch
      %24 = sbr.rel (%p22) target = $region8
    $region5: #{de_conv_forward.9} parent=1 // loop_body
      %s26 = ssub.s32 %s21, 1
      %s27 = ssub.s32 %s21, 2
      %s28 = sadd.s32 %s21, 1
      %s29 = ssub.s32 %s21, %s28
      %p30 = scmp.eq.s32.totalorder %s29, 0
      %s32 = sadd.s32 %s31, 1
      %s33 = scalar_select %p30, %s31, %s32
      %p36 = pneg %p30
      %p37 = scmp.eq.s32.totalorder %s21, 1
      %p38 = por %p36, %p37
      %p39 = scmp.ne.s32.totalorder %s31, %s34
      %p40 = scmp.eq.s32.totalorder %s21, 0
      %p41 = por %p39, %p40
      %p42 = scmp.ne.s32.totalorder %s31, %s34
      %p43 = scmp.eq.s32.totalorder %s26, 1
      %p44 = por %p42, %p43
      %p45 = scmp.ne.s32.totalorder %s34, %s35
      %p46 = scmp.eq.s32.totalorder %s26, 0
      %p47 = por %p45, %p46
      %p48 = scmp.ne.s32.totalorder %s34, %s35
      %p49 = scmp.eq.s32.totalorder %s27, 1
      %p50 = por %p48, %p49
      %p52 = scmp.ne.s32.totalorder %s35, %s51
      %p53 = scmp.eq.s32.totalorder %s27, 0
      %p54 = por %p52, %p53
      %s56 = sadd.s32 %s55, 1
      %p59 = scmp.eq.s32.totalorder %s21, 1
      %p60 = scmp.ne.s32.totalorder %s55, %s57
      %p61 = scmp.eq.s32.totalorder %s21, 0
      %p62 = por %p60, %p61
      %p63 = scmp.ne.s32.totalorder %s55, %s57
      %p64 = scmp.eq.s32.totalorder %s26, 1
      %p65 = por %p63, %p64
      %p66 = scmp.ne.s32.totalorder %s57, %s58
      %p67 = scmp.eq.s32.totalorder %s26, 0
      %p68 = por %p66, %p67
      %p69 = scmp.ne.s32.totalorder %s57, %s58
      %p70 = scmp.eq.s32.totalorder %s27, 1
      %p71 = por %p69, %p70
      %p73 = scmp.ne.s32.totalorder %s58, %s72
      %p74 = scmp.eq.s32.totalorder %s27, 0
      %p75 = por %p73, %p74
      %s77 = sadd.s32 %s76, 1
      %p80 = scmp.eq.s32.totalorder %s21, 1
      %p81 = scmp.ne.s32.totalorder %s76, %s78
      %p82 = scmp.eq.s32.totalorder %s21, 0
      %p83 = por %p81, %p82
      %p84 = scmp.ne.s32.totalorder %s76, %s78
      %p85 = scmp.eq.s32.totalorder %s26, 1
      %p86 = por %p84, %p85
      %p87 = scmp.ne.s32.totalorder %s78, %s79
      %p88 = scmp.eq.s32.totalorder %s26, 0
      %p89 = por %p87, %p88
      %p90 = scmp.ne.s32.totalorder %s78, %s79
      %p91 = scmp.eq.s32.totalorder %s27, 1
      %p92 = por %p90, %p91
      %p94 = scmp.ne.s32.totalorder %s79, %s93
      %p95 = scmp.eq.s32.totalorder %s27, 0
      %p96 = por %p94, %p95
      %s98 = sadd.s32 %s97, 1
      %p101 = scmp.eq.s32.totalorder %s21, 1
      %p102 = scmp.ne.s32.totalorder %s97, %s99
      %p103 = scmp.eq.s32.totalorder %s21, 0
      %p104 = por %p102, %p103
      %p105 = scmp.ne.s32.totalorder %s97, %s99
      %p106 = scmp.eq.s32.totalorder %s26, 1
      %p107 = por %p105, %p106
      %p108 = scmp.ne.s32.totalorder %s99, %s100
      %p109 = scmp.eq.s32.totalorder %s26, 0
      %p110 = por %p108, %p109
      %p111 = scmp.ne.s32.totalorder %s99, %s100
      %p112 = scmp.eq.s32.totalorder %s27, 1
      %p113 = por %p111, %p112
      %p115 = scmp.ne.s32.totalorder %s100, %s114
      %p116 = scmp.eq.s32.totalorder %s27, 0
      %p117 = por %p115, %p116
      %s119 = sadd.s32 %s118, 1
      %p122 = scmp.eq.s32.totalorder %s21, 1
      %p123 = scmp.ne.s32.totalorder %s118, %s120
      %p124 = scmp.eq.s32.totalorder %s21, 0
      %p125 = por %p123, %p124
      %p126 = scmp.ne.s32.totalorder %s118, %s120
      %p127 = scmp.eq.s32.totalorder %s26, 1
      %p128 = por %p126, %p127
      %p129 = scmp.ne.s32.totalorder %s120, %s121
      %p130 = scmp.eq.s32.totalorder %s26, 0
      %p131 = por %p129, %p130
      %p132 = scmp.ne.s32.totalorder %s120, %s121
      %p133 = scmp.eq.s32.totalorder %s27, 1
      %p134 = por %p132, %p133
      %p136 = scmp.ne.s32.totalorder %s121, %s135
      %p137 = scmp.eq.s32.totalorder %s27, 0
      %p138 = por %p136, %p137
      %s139 = ssub.s32 %s21, %s28
      %p140 = scmp.eq.s32.totalorder %s139, 0
      %s142 = sadd.s32 %s141, 1
      %s143 = scalar_select %p140, %s141, %s142
      %p146 = pneg %p140
      %p147 = scmp.eq.s32.totalorder %s21, 1
      %p148 = por %p146, %p147
      %p149 = scmp.ne.s32.totalorder %s141, %s144
      %p150 = scmp.eq.s32.totalorder %s21, 0
      %p151 = por %p149, %p150
      %p152 = scmp.ne.s32.totalorder %s141, %s144
      %p153 = scmp.eq.s32.totalorder %s26, 1
      %p154 = por %p152, %p153
      %p155 = scmp.ne.s32.totalorder %s144, %s145
      %p156 = scmp.eq.s32.totalorder %s26, 0
      %p157 = por %p155, %p156
      %p158 = scmp.ne.s32.totalorder %s144, %s145
      %p159 = scmp.eq.s32.totalorder %s27, 1
      %p160 = por %p158, %p159
      %p162 = scmp.ne.s32.totalorder %s145, %s161
      %p163 = scmp.eq.s32.totalorder %s27, 0
      %p164 = por %p162, %p163
      %s165 = ssub.s32 %s21, %s28
      %p166 = scmp.eq.s32.totalorder %s165, 0
      %s168 = sadd.s32 %s167, 1
      %s169 = scalar_select %p166, %s167, %s168
      %p172 = pneg %p166
      %p173 = scmp.eq.s32.totalorder %s21, 1
      %p174 = por %p172, %p173
      %p175 = scmp.ne.s32.totalorder %s167, %s170
      %p176 = scmp.eq.s32.totalorder %s21, 0
      %p177 = por %p175, %p176
      %p178 = scmp.ne.s32.totalorder %s167, %s170
      %p179 = scmp.eq.s32.totalorder %s26, 1
      %p180 = por %p178, %p179
      %p181 = scmp.ne.s32.totalorder %s170, %s171
      %p182 = scmp.eq.s32.totalorder %s26, 0
      %p183 = por %p181, %p182
      %p184 = scmp.ne.s32.totalorder %s170, %s171
      %p185 = scmp.eq.s32.totalorder %s27, 1
      %p186 = por %p184, %p185
      %p188 = scmp.ne.s32.totalorder %s171, %s187
      %p189 = scmp.eq.s32.totalorder %s27, 0
      %p190 = por %p188, %p189
      %s191 = ssub.s32 %s21, %s28
      %p192 = scmp.eq.s32.totalorder %s191, 0
      %s194 = sadd.s32 %s193, 1
      %s195 = scalar_select %p192, %s193, %s194
      %p198 = pneg %p192
      %p199 = scmp.eq.s32.totalorder %s21, 1
      %p200 = por %p198, %p199
      %p201 = scmp.ne.s32.totalorder %s193, %s196
      %p202 = scmp.eq.s32.totalorder %s21, 0
      %p203 = por %p201, %p202
      %p204 = scmp.ne.s32.totalorder %s193, %s196
      %p205 = scmp.eq.s32.totalorder %s26, 1
      %p206 = por %p204, %p205
      %p207 = scmp.ne.s32.totalorder %s196, %s197
      %p208 = scmp.eq.s32.totalorder %s26, 0
      %p209 = por %p207, %p208
      %p210 = scmp.ne.s32.totalorder %s196, %s197
      %p211 = scmp.eq.s32.totalorder %s27, 1
      %p212 = por %p210, %p211
      %p214 = scmp.ne.s32.totalorder %s197, %s213
      %p215 = scmp.eq.s32.totalorder %s27, 0
      %p216 = por %p214, %p215
      %s217 = ssub.s32 %s21, %s28
      %p218 = scmp.eq.s32.totalorder %s217, 0
      %s220 = sadd.s32 %s219, 1
      %s221 = scalar_select %p218, %s219, %s220
      %p224 = pneg %p218
      %p225 = scmp.eq.s32.totalorder %s21, 1
      %p226 = por %p224, %p225
      %p227 = scmp.ne.s32.totalorder %s219, %s222
      %p228 = scmp.eq.s32.totalorder %s21, 0
      %p229 = por %p227, %p228
      %p230 = scmp.ne.s32.totalorder %s219, %s222
      %p231 = scmp.eq.s32.totalorder %s26, 1
      %p232 = por %p230, %p231
      %p233 = scmp.ne.s32.totalorder %s222, %s223
      %p234 = scmp.eq.s32.totalorder %s26, 0
      %p235 = por %p233, %p234
      %p236 = scmp.ne.s32.totalorder %s222, %s223
      %p237 = scmp.eq.s32.totalorder %s27, 1
      %p238 = por %p236, %p237
      %p240 = scmp.ne.s32.totalorder %s223, %s239
      %p241 = scmp.eq.s32.totalorder %s27, 0
      %p242 = por %p240, %p241
      %p243 = scmp.le.s32.totalorder 1, %s21
      %p244 = scmp.lt.s32.totalorder %s21, 3
      %p245 = pnand %p243, %p244
      %p246 = pneg %p245
      // Predicated region
      $region9: #{de_conv_forward.9} parent=5 // pred_check
        _
      $region10: #{de_conv_forward.9} parent=5 // pred_check_branch
        %248 = sbr.rel (%p245) target = $region12
      $region11: #{de_conv_forward.9} parent=5 // pred_region
        %s249 = ssub.s32 %s21, 1
        // Predicated region
        $region13: #{de_conv_forward.9} parent=11 // pred_check
          %p250 = pneg %p68
        $region14: #{de_conv_forward.9} parent=11 // pred_check_branch
          %252 = sbr.rel (%p250) target = $region16
        $region15: #{de_conv_forward.9} parent=11 // pred_region
          _
        $region16: #{de_conv_forward.9} parent=11 // pred_fallthru
          _
        // Predicated region
        $region17: #{de_conv_forward.9} parent=11 // pred_check
          %p253 = pneg %p89
        $region18: #{de_conv_forward.9} parent=11 // pred_check_branch
          %255 = sbr.rel (%p253) target = $region20
        $region19: #{de_conv_forward.9} parent=11 // pred_region
          _
        $region20: #{de_conv_forward.9} parent=11 // pred_fallthru
          _
        // Predicated region
        $region21: #{de_conv_forward.9} parent=11 // pred_check
          %p256 = pneg %p110
        $region22: #{de_conv_forward.9} parent=11 // pred_check_branch
          %258 = sbr.rel (%p256) target = $region24
        $region23: #{de_conv_forward.9} parent=11 // pred_region
          _
        $region24: #{de_conv_forward.9} parent=11 // pred_fallthru
          _
        // Predicated region
        $region25: #{de_conv_forward.9} parent=11 // pred_check
          %p259 = pneg %p131
        $region26: #{de_conv_forward.9} parent=11 // pred_check_branch
          %261 = sbr.rel (%p259) target = $region28
        $region27: #{de_conv_forward.9} parent=11 // pred_region
          _
        $region28: #{de_conv_forward.9} parent=11 // pred_fallthru
          _
      $region12: #{de_conv_forward.9} parent=5 // pred_fallthru
        _
      %p262 = scmp.lt.s32.totalorder %s21, 2
      // Predicated region
      $region29: #{de_conv_forward.9} parent=5 // pred_check
        %p263 = pneg %p262
      $region30: #{de_conv_forward.9} parent=5 // pred_check_branch
        %265 = sbr.rel (%p263) target = $region32
      $region31: #{de_conv_forward.9} parent=5 // pred_region
        // Predicated region
        $region33: #{de_conv_forward.9} parent=31 // pred_check
          %p266 = pneg %p41
        $region34: #{de_conv_forward.9} parent=31 // pred_check_branch
          %268 = sbr.rel (%p266) target = $region36
        $region35: #{de_conv_forward.9} parent=31 // pred_region
          %p269 = scmp.lt.s32.totalorder %s21, 1
          %s270 = scalar_select %p269, %s21, 1
          %s271 = smul.addr %s270, 2
          %s272 = smul.addr %s271, 8
          %s273 = scalar_lea.vmem %s0, %s272
        $region36: #{de_conv_forward.9} parent=31 // pred_fallthru
          _
        // Predicated region
        $region37: #{de_conv_forward.9} parent=31 // pred_check
          %p274 = pneg %p151
        $region38: #{de_conv_forward.9} parent=31 // pred_check_branch
          %276 = sbr.rel (%p274) target = $region40
        $region39: #{de_conv_forward.9} parent=31 // pred_region
          %p277 = scmp.lt.s32.totalorder %s21, 1
          %s278 = scalar_select %p277, %s21, 1
          %s279 = smul.addr %s278, 2
          %s280 = smul.addr %s279, 8
          %s281 = scalar_lea.vmem %s5, %s280
        $region40: #{de_conv_forward.9} parent=31 // pred_fallthru
          _
      $region32: #{de_conv_forward.9} parent=5 // pred_fallthru
        _
      %p282 = scmp.le.s32.totalorder 1, %s21
      %p283 = scmp.lt.s32.totalorder %s21, 3
      %p284 = pnand %p282, %p283
      %p285 = pneg %p284
      // Predicated region
      $region41: #{de_conv_forward.9} parent=5 // pred_check
        _
      $region42: #{de_conv_forward.9} parent=5 // pred_check_branch
        %287 = sbr.rel (%p284) target = $region44
      $region43: #{de_conv_forward.9} parent=5 // pred_region
        %s288 = ssub.s32 %s21, 1
        %p289 = scmp.lt.s32.totalorder %s26, 1
        %s290 = scalar_select %p289, %s26, 1
        %s291 = smul.addr %s290, 2
        %s292 = smul.addr %s291, 8
        %s293 = scalar_lea.vmem %s0, %s292
        %p294 = pneg %p47
        %p295 = pneg %p44
        %p296 = pneg %p68
        %p297 = pneg %p65
        %p298 = pneg %p89
        %p299 = pneg %p86
        %p300 = pneg %p110
        %p301 = pneg %p107
        %p302 = pneg %p131
        %p303 = pneg %p128
        %p304 = scmp.lt.s32.totalorder %s26, 1
        %s305 = scalar_select %p304, %s26, 1
        %s306 = smul.addr %s305, 2
        %s307 = smul.addr %s306, 8
        %s308 = scalar_lea.vmem %s5, %s307
        %p309 = pneg %p157
        %p310 = pneg %p154
        %p311 = pneg %p183
        %p312 = pneg %p180
        %p313 = scmp.lt.s32.totalorder %s26, 1
        %s314 = scalar_select %p313, %s26, 1
        %s315 = smul.addr %s314, 2
        %s316 = smul.addr %s315, 8
        %s317 = scalar_lea.vmem %s6, %s316
        %p318 = pneg %p209
        %p319 = pneg %p206
        %s320 = sand.u32 %s196, 1
        %s321 = scalar_lea.sflag [#allocation4], %s320
        %s322 = sand.u32 %s196, 1
        %s323 = scalar_lea.vmem [#allocation3], %s322
        %p324 = pneg %p235
        %p325 = pneg %p232
        %s326 = sand.u32 %s222, 1
        %s327 = scalar_lea.sflag [#allocation6], %s326
        %s328 = sand.u32 %s222, 1
        %s329 = scalar_lea.vmem [#allocation5], %s328
        %p330 = scmp.lt.s32.totalorder %s26, 1
        %s331 = scalar_select %p330, %s26, 1
        %s332 = smul.addr %s331, 2
        %s333 = smul.addr %s332, 8
        %s334 = scalar_lea.vmem %s0, %s333
        %p335 = scmp.lt.s32.totalorder %s26, 1
        %s336 = scalar_select %p335, %s26, 1
        %s337 = smul.addr %s336, 2
        %s338 = smul.addr %s337, 8
        %s339 = scalar_lea.vmem %s5, %s338
        %p340 = scmp.lt.s32.totalorder %s26, 1
        %s341 = scalar_select %p340, %s26, 1
        %s342 = smul.addr %s341, 2
        %s343 = smul.addr %s342, 8
        %s344 = scalar_lea.vmem %s6, %s343
        %v346 = vld [vmem:[%s334] sm:$0xff]
        %v347 = vld [vmem:[%s334 + $0x8] sm:$0xff]
        %v348 = vld [vmem:[%s1] sm:$0x1]
        %v350 = vlaneseq
        %v351 = vshrl.u32 %v350, 7
        %v352 = vsub.s32 0, %v351
        %v353 = vrot.slane %v348, %v352
        %v355 = vmul.f32 %v346, %v353
        %v356 = vmul.f32 %v347, %v353
        %v357 = vld [vmem:[%s2] sm:$0x1]
        %v359 = vlaneseq
        %v360 = vshrl.u32 %v359, 7
        %v361 = vsub.s32 0, %v360
        %v362 = vrot.slane %v357, %v361
        %v364 = vadd.f32 %v355, %v362
        %v365 = vadd.f32 %v356, %v362
        %v366 = vmax.f32 %v364, 0.0
        %v367 = vmax.f32 %v365, 0.0
        %368 = vst [vmem:[#allocation2] sm:$0x1] 0.0
        %369 = vst [vmem:[#allocation2 + $0x11] sm:$0x1] 0.0
        %370 = vst [vmem:[#allocation2 + $0x1] sm:$0xff] %v366
        %371 = vst [vmem:[#allocation2 + $0x9] sm:$0xff] %v367
        %v372 = vld [vmem:[#allocation2] sm:$0xff]
        %v373 = vld [vmem:[#allocation2 + $0x8] sm:$0xff]
        %v374 = vpack.c.bf16 %v373, %v372
        %v375 = vld [vmem:[%s3] sm:$0xf]
        %v376 = vld [vmem:[%s3 + $0x4] sm:$0xf]
        %v377 = vld [vmem:[%s3 + $0x8] sm:$0xf]
        %v378 = vld [vmem:[%s3 + $0xc] sm:$0xf]
        %v379 = vld [vmem:[%s3 + $0x10] sm:$0xf]
        %v380 = vld [vmem:[%s3 + $0x14] sm:$0xf]
        %v381 = vld [vmem:[%s3 + $0x18] sm:$0xf]
        %v382 = vld [vmem:[%s3 + $0x1c] sm:$0xf]
        %v383 = vld [vmem:[%s3 + $0x20] sm:$0xf]
        %v384 = vld [vmem:[%s3 + $0x24] sm:$0xf]
        %v385 = vld [vmem:[%s3 + $0x28] sm:$0xf]
        %v386 = vld [vmem:[%s3 + $0x2c] sm:$0xf]
        %v387 = vld [vmem:[%s3 + $0x30] sm:$0xf]
        %v388 = vld [vmem:[%s3 + $0x34] sm:$0xf]
        %v389 = vld [vmem:[%s3 + $0x38] sm:$0xf]
        %v390 = vld [vmem:[%s3 + $0x3c] sm:$0xf]
        %v391 = vld [vmem:[#allocation2 + $0x1] sm:$0xff]
        %v392 = vld [vmem:[#allocation2 + $0x9] sm:$0xff]
        %v393 = vpack.c.bf16 %v392, %v391
        %s394 = scalar_lea.vmem %s3, 64
        %v395 = vld [vmem:[%s394] sm:$0xf]
        %v396 = vld [vmem:[%s394 + $0x4] sm:$0xf]
        %v397 = vld [vmem:[%s394 + $0x8] sm:$0xf]
        %v398 = vld [vmem:[%s394 + $0xc] sm:$0xf]
        %v399 = vld [vmem:[%s394 + $0x10] sm:$0xf]
        %v400 = vld [vmem:[%s394 + $0x14] sm:$0xf]
        %v401 = vld [vmem:[%s394 + $0x18] sm:$0xf]
        %v402 = vld [vmem:[%s394 + $0x1c] sm:$0xf]
        %v403 = vld [vmem:[%s394 + $0x20] sm:$0xf]
        %v404 = vld [vmem:[%s394 + $0x24] sm:$0xf]
        %v405 = vld [vmem:[%s394 + $0x28] sm:$0xf]
        %v406 = vld [vmem:[%s394 + $0x2c] sm:$0xf]
        %v407 = vld [vmem:[%s394 + $0x30] sm:$0xf]
        %v408 = vld [vmem:[%s394 + $0x34] sm:$0xf]
        %v409 = vld [vmem:[%s394 + $0x38] sm:$0xf]
        %v410 = vld [vmem:[%s394 + $0x3c] sm:$0xf]
        %v427 = vunpack.c.l.b16 %v395
        %v428 = vunpack.c.l.b16 %v396
        %v429 = vunpack.c.l.b16 %v397
        %v430 = vunpack.c.l.b16 %v398
        %v431 = vunpack.c.l.b16 %v399
        %v432 = vunpack.c.l.b16 %v400
        %v433 = vunpack.c.l.b16 %v401
        %v434 = vunpack.c.l.b16 %v402
        %v435 = vunpack.c.l.b16 %v403
        %v436 = vunpack.c.l.b16 %v404
        %v437 = vunpack.c.l.b16 %v405
        %v438 = vunpack.c.l.b16 %v406
        %v439 = vunpack.c.l.b16 %v407
        %v440 = vunpack.c.l.b16 %v408
        %v441 = vunpack.c.l.b16 %v409
        %v442 = vunpack.c.l.b16 %v410
        %v443 = vpack.c.b16 %v428, %v427
        %v444 = vpack.c.b16 %v430, %v429
        %v445 = vpack.c.b16 %v432, %v431
        %v446 = vpack.c.b16 %v434, %v433
        %v447 = vpack.c.b16 %v436, %v435
        %v448 = vpack.c.b16 %v438, %v437
        %v449 = vpack.c.b16 %v440, %v439
        %v450 = vpack.c.b16 %v442, %v441
        %459 = vmatprep.subr.bf16.mxu0 0
        %460 = vmatpush1.bf16.msra.mxu0 %v443
        %461 = vmatprep.subr.bf16.mxu0 0
        %462 = vmatpush1.bf16.msra.mxu0 %v444
        %463 = vmatprep.subr.bf16.mxu0 0
        %464 = vmatpush1.bf16.msra.mxu0 %v445
        %465 = vmatprep.subr.bf16.mxu0 0
        %466 = vmatpush1.bf16.msra.mxu0 %v446
        %467 = vmatprep.subr.bf16.mxu0 0
        %468 = vmatpush1.bf16.msra.mxu0 %v447
        %469 = vmatprep.subr.bf16.mxu0 0
        %470 = vmatpush1.bf16.msra.mxu0 %v448
        %471 = vmatprep.subr.bf16.mxu0 0
        %472 = vmatpush1.bf16.msra.mxu0 %v449
        %473 = vmatprep.subr.bf16.mxu0 0
        %474 = vmatpush1.bf16.msra.mxu0 %v450
        %475 = vmatprep.subr.bf16.mxu0 0
        %476 = vmatpush1.bf16.msra.mxu0 0
        %477 = vmatprep.subr.bf16.mxu0 0
        %478 = vmatpush1.bf16.msra.mxu0 0
        %479 = vmatprep.subr.bf16.mxu0 0
        %480 = vmatpush1.bf16.msra.mxu0 0
        %481 = vmatprep.subr.bf16.mxu0 0
        %482 = vmatpush1.bf16.msra.mxu0 0
        %483 = vmatprep.subr.bf16.mxu0 0
        %484 = vmatpush1.bf16.msra.mxu0 0
        %485 = vmatprep.subr.bf16.mxu0 0
        %486 = vmatpush1.bf16.msra.mxu0 0
        %487 = vmatprep.subr.bf16.mxu0 0
        %488 = vmatpush1.bf16.msra.mxu0 0
        %489 = vmatprep.subr.bf16.mxu0 0
        %490 = vmatpush1.bf16.msra.mxu0 0
        %491 = vmatprep.mubr.bf16.mxu0 0
        %492 = vmatmul.mubr.bf16.gmra.mrb[0].mxu0 %v393
        %v493 = vpop.f32.mrb[0].mxu0
        %v494 = vadd.f32 0.0, %v493
        %v495 = vpop.f32.mrb[0].mxu0
        %v496 = vpop.f32.mrb[0].mxu0
        %v497 = vadd.f32 0.0, %v496
        %v498 = vpop.f32.mrb[0].mxu0
        %499 = vdwg.mxu0
        %v516 = vunpack.c.l.b16 %v375
        %v517 = vunpack.c.l.b16 %v376
        %v518 = vunpack.c.l.b16 %v377
        %v519 = vunpack.c.l.b16 %v378
        %v520 = vunpack.c.l.b16 %v379
        %v521 = vunpack.c.l.b16 %v380
        %v522 = vunpack.c.l.b16 %v381
        %v523 = vunpack.c.l.b16 %v382
        %v524 = vunpack.c.l.b16 %v383
        %v525 = vunpack.c.l.b16 %v384
        %v526 = vunpack.c.l.b16 %v385
        %v527 = vunpack.c.l.b16 %v386
        %v528 = vunpack.c.l.b16 %v387
        %v529 = vunpack.c.l.b16 %v388
        %v530 = vunpack.c.l.b16 %v389
        %v531 = vunpack.c.l.b16 %v390
        %v532 = vpack.c.b16 %v517, %v516
        %v533 = vpack.c.b16 %v519, %v518
        %v534 = vpack.c.b16 %v521, %v520
        %v535 = vpack.c.b16 %v523, %v522
        %v536 = vpack.c.b16 %v525, %v524
        %v537 = vpack.c.b16 %v527, %v526
        %v538 = vpack.c.b16 %v529, %v528
        %v539 = vpack.c.b16 %v531, %v530
        %548 = vmatprep.subr.bf16.mxu0 0
        %549 = vmatpush1.bf16.msra.mxu0 %v532
        %550 = vmatprep.subr.bf16.mxu0 0
        %551 = vmatpush1.bf16.msra.mxu0 %v533
        %552 = vmatprep.subr.bf16.mxu0 0
        %553 = vmatpush1.bf16.msra.mxu0 %v534
        %554 = vmatprep.subr.bf16.mxu0 0
        %555 = vmatpush1.bf16.msra.mxu0 %v535
        %556 = vmatprep.subr.bf16.mxu0 0
        %557 = vmatpush1.bf16.msra.mxu0 %v536
        %558 = vmatprep.subr.bf16.mxu0 0
        %559 = vmatpush1.bf16.msra.mxu0 %v537
        %560 = vmatprep.subr.bf16.mxu0 0
        %561 = vmatpush1.bf16.msra.mxu0 %v538
        %562 = vmatprep.subr.bf16.mxu0 0
        %563 = vmatpush1.bf16.msra.mxu0 %v539
        %564 = vmatprep.subr.bf16.mxu0 0
        %565 = vmatpush1.bf16.msra.mxu0 0
        %566 = vmatprep.subr.bf16.mxu0 0
        %567 = vmatpush1.bf16.msra.mxu0 0
        %568 = vmatprep.subr.bf16.mxu0 0
        %569 = vmatpush1.bf16.msra.mxu0 0
        %570 = vmatprep.subr.bf16.mxu0 0
        %571 = vmatpush1.bf16.msra.mxu0 0
        %572 = vmatprep.subr.bf16.mxu0 0
        %573 = vmatpush1.bf16.msra.mxu0 0
        %574 = vmatprep.subr.bf16.mxu0 0
        %575 = vmatpush1.bf16.msra.mxu0 0
        %576 = vmatprep.subr.bf16.mxu0 0
        %577 = vmatpush1.bf16.msra.mxu0 0
        %578 = vmatprep.subr.bf16.mxu0 0
        %579 = vmatpush1.bf16.msra.mxu0 0
        %580 = vmatprep.mubr.bf16.mxu0 0
        %581 = vmatmul.mubr.bf16.gmra.mrb[0].mxu0 %v374
        %v582 = vpop.f32.mrb[0].mxu0
        %v583 = vadd.f32 %v494, %v582
        %v584 = vpop.f32.mrb[0].mxu0
        %v585 = vpop.f32.mrb[0].mxu0
        %v586 = vadd.f32 %v497, %v585
        %v587 = vpop.f32.mrb[0].mxu0
        %588 = vdwg.mxu0
        %v589 = vld [vmem:[#allocation2 + $0x2] sm:$0xff]
        %v590 = vld [vmem:[#allocation2 + $0xa] sm:$0xff]
        %v591 = vpack.c.bf16 %v590, %v589
        %s592 = scalar_lea.vmem %s3, 128
        %v593 = vld [vmem:[%s592] sm:$0xf]
        %v594 = vld [vmem:[%s592 + $0x4] sm:$0xf]
        %v595 = vld [vmem:[%s592 + $0x8] sm:$0xf]
        %v596 = vld [vmem:[%s592 + $0xc] sm:$0xf]
        %v597 = vld [vmem:[%s592 + $0x10] sm:$0xf]
        %v598 = vld [vmem:[%s592 + $0x14] sm:$0xf]
        %v599 = vld [vmem:[%s592 + $0x18] sm:$0xf]
        %v600 = vld [vmem:[%s592 + $0x1c] sm:$0xf]
        %v601 = vld [vmem:[%s592 + $0x20] sm:$0xf]
        %v602 = vld [vmem:[%s592 + $0x24] sm:$0xf]
        %v603 = vld [vmem:[%s592 + $0x28] sm:$0xf]
        %v604 = vld [vmem:[%s592 + $0x2c] sm:$0xf]
        %v605 = vld [vmem:[%s592 + $0x30] sm:$0xf]
        %v606 = vld [vmem:[%s592 + $0x34] sm:$0xf]
        %v607 = vld [vmem:[%s592 + $0x38] sm:$0xf]
        %v608 = vld [vmem:[%s592 + $0x3c] sm:$0xf]
        %v625 = vunpack.c.l.b16 %v593
        %v626 = vunpack.c.l.b16 %v594
        %v627 = vunpack.c.l.b16 %v595
        %v628 = vunpack.c.l.b16 %v596
        %v629 = vunpack.c.l.b16 %v597
        %v630 = vunpack.c.l.b16 %v598
        %v631 = vunpack.c.l.b16 %v599
        %v632 = vunpack.c.l.b16 %v600
        %v633 = vunpack.c.l.b16 %v601
        %v634 = vunpack.c.l.b16 %v602
        %v635 = vunpack.c.l.b16 %v603
        %v636 = vunpack.c.l.b16 %v604
        %v637 = vunpack.c.l.b16 %v605
        %v638 = vunpack.c.l.b16 %v606
        %v639 = vunpack.c.l.b16 %v607
        %v640 = vunpack.c.l.b16 %v608
        %v641 = vpack.c.b16 %v626, %v625
        %v642 = vpack.c.b16 %v628, %v627
        %v643 = vpack.c.b16 %v630, %v629
        %v644 = vpack.c.b16 %v632, %v631
        %v645 = vpack.c.b16 %v634, %v633
        %v646 = vpack.c.b16 %v636, %v635
        %v647 = vpack.c.b16 %v638, %v637
        %v648 = vpack.c.b16 %v640, %v639
        %657 = vmatprep.subr.bf16.mxu0 0
        %658 = vmatpush1.bf16.msra.mxu0 %v641
        %659 = vmatprep.subr.bf16.mxu0 0
        %660 = vmatpush1.bf16.msra.mxu0 %v642
        %661 = vmatprep.subr.bf16.mxu0 0
        %662 = vmatpush1.bf16.msra.mxu0 %v643
        %663 = vmatprep.subr.bf16.mxu0 0
        %664 = vmatpush1.bf16.msra.mxu0 %v644
        %665 = vmatprep.subr.bf16.mxu0 0
        %666 = vmatpush1.bf16.msra.mxu0 %v645
        %667 = vmatprep.subr.bf16.mxu0 0
        %668 = vmatpush1.bf16.msra.mxu0 %v646
        %669 = vmatprep.subr.bf16.mxu0 0
        %670 = vmatpush1.bf16.msra.mxu0 %v647
        %671 = vmatprep.subr.bf16.mxu0 0
        %672 = vmatpush1.bf16.msra.mxu0 %v648
        %673 = vmatprep.subr.bf16.mxu0 0
        %674 = vmatpush1.bf16.msra.mxu0 0
        %675 = vmatprep.subr.bf16.mxu0 0
        %676 = vmatpush1.bf16.msra.mxu0 0
        %677 = vmatprep.subr.bf16.mxu0 0
        %678 = vmatpush1.bf16.msra.mxu0 0
        %679 = vmatprep.subr.bf16.mxu0 0
        %680 = vmatpush1.bf16.msra.mxu0 0
        %681 = vmatprep.subr.bf16.mxu0 0
        %682 = vmatpush1.bf16.msra.mxu0 0
        %683 = vmatprep.subr.bf16.mxu0 0
        %684 = vmatpush1.bf16.msra.mxu0 0
        %685 = vmatprep.subr.bf16.mxu0 0
        %686 = vmatpush1.bf16.msra.mxu0 0
        %687 = vmatprep.subr.bf16.mxu0 0
        %688 = vmatpush1.bf16.msra.mxu0 0
        %689 = vmatprep.mubr.bf16.mxu0 0
        %690 = vmatmul.mubr.bf16.gmra.mrb[0].mxu0 %v591
        %v691 = vpop.f32.mrb[0].mxu0
        %v692 = vadd.f32 0.0, %v691
        %v693 = vpop.f32.mrb[0].mxu0
        %v694 = vpop.f32.mrb[0].mxu0
        %v695 = vadd.f32 0.0, %v694
        %v696 = vpop.f32.mrb[0].mxu0
        %697 = vdwg.mxu0
        %v698 = vadd.f32 %v583, %v692
        %v699 = vadd.f32 %v586, %v695
        %v700 = vld [vmem:[%s4] sm:$0x1]
        %v702 = vlaneseq
        %v703 = vshrl.u32 %v702, 7
        %v704 = vsub.s32 0, %v703
        %v705 = vrot.slane %v700, %v704
        %v707 = vadd.f32 %v698, %v705
        %v708 = vadd.f32 %v699, %v705
        %v709 = vld [vmem:[%s339] sm:$0xff]
        %v710 = vld [vmem:[%s339 + $0x8] sm:$0xff]
        %v711 = vadd.f32 %v707, %v709
        %v712 = vadd.f32 %v708, %v710
        %713 = vst [vmem:[%s344] sm:$0xff] %v711
        %714 = vst [vmem:[%s344 + $0x8] sm:$0xff] %v712
        %v715 = vadd.f32 %v711, %v712
        %v716 = vrot.slane %v715, 4
        %v717 = vadd.f32 %v715, %v716
        %v718 = vrot.slane %v717, 2
        %v719 = vadd.f32 %v717, %v718
        %v720 = vrot.slane %v719, 1
        %v721 = vadd.f32 %v719, %v720
        %722 = vst [vmem:[%s323] sm:$0x1] %v721
        %v723 = vmul.f32 %v711, %v711
        %v724 = vmul.f32 %v712, %v712
        %v725 = vadd.f32 %v723, %v724
        %v726 = vrot.slane %v725, 4
        %v727 = vadd.f32 %v725, %v726
        %v728 = vrot.slane %v727, 2
        %v729 = vadd.f32 %v727, %v728
        %v730 = vrot.slane %v729, 1
        %v731 = vadd.f32 %v729, %v730
        %732 = vst [vmem:[%s329] sm:$0x1] %v731
        %p733 = scmp.lt.s32.totalorder %s26, 1
        %s734 = scalar_select %p733, %s26, 1
        %s735 = smul.addr %s734, 2
        %s736 = smul.addr %s735, 8
        %s737 = scalar_lea.vmem %s6, %s736
        %s738 = sand.u32 %s196, 1
        %s739 = scalar_lea.sflag [#allocation4], %s738
        %s740 = sand.u32 %s196, 1
        %s741 = scalar_lea.vmem [#allocation3], %s740
        %s742 = sand.u32 %s222, 1
        %s743 = scalar_lea.sflag [#allocation6], %s742
        %s744 = sand.u32 %s222, 1
        %s745 = scalar_lea.vmem [#allocation5], %s744
        // Predicated region
        $region45: #{de_conv_forward.9} parent=43 // pred_check
          %p746 = pneg %p180
        $region46: #{de_conv_forward.9} parent=43 // pred_check_branch
          %748 = sbr.rel (%p746) target = $region48
        $region47: #{de_conv_forward.9} parent=43 // pred_region
          _
        $region48: #{de_conv_forward.9} parent=43 // pred_fallthru
          _
        // Predicated region
        $region49: #{de_conv_forward.9} parent=43 // pred_check
          %p749 = pneg %p206
        $region50: #{de_conv_forward.9} parent=43 // pred_check_branch
          %751 = sbr.rel (%p749) target = $region52
        $region51: #{de_conv_forward.9} parent=43 // pred_region
          %s753 = ssub.s32 16, 16
          %754 = vsyncadd %s739, %s753
          %s755 = smul.addr %s26, 16
          %s756 = scalar_lea.hbm %s7, %s755
          %s758 = sshll.u32 %s741, 4
          %s759 = int_to_ptr.vmem [resolvable:$true] %s758
          %761 = dma.vmem_to_hbm [thread:$0]  %s759, 16, %s756, %s739
        $region52: #{de_conv_forward.9} parent=43 // pred_fallthru
          _
        // Predicated region
        $region53: #{de_conv_forward.9} parent=43 // pred_check
          %p762 = pneg %p232
        $region54: #{de_conv_forward.9} parent=43 // pred_check_branch
          %764 = sbr.rel (%p762) target = $region56
        $region55: #{de_conv_forward.9} parent=43 // pred_region
          %s766 = ssub.s32 16, 16
          %767 = vsyncadd %s743, %s766
          %s768 = smul.addr %s26, 16
          %s769 = scalar_lea.hbm %s8, %s768
          %s771 = sshll.u32 %s745, 4
          %s772 = int_to_ptr.vmem [resolvable:$true] %s771
          %774 = dma.vmem_to_hbm [thread:$0]  %s772, 16, %s769, %s743
        $region56: #{de_conv_forward.9} parent=43 // pred_fallthru
          _
      $region44: #{de_conv_forward.9} parent=5 // pred_fallthru
        _
      %p775 = scmp.le.s32.totalorder 2, %s21
      // Predicated region
      $region57: #{de_conv_forward.9} parent=5 // pred_check
        %p776 = pneg %p775
      $region58: #{de_conv_forward.9} parent=5 // pred_check_branch
        %778 = sbr.rel (%p776) target = $region60
      $region59: #{de_conv_forward.9} parent=5 // pred_region
        %s779 = ssub.s32 %s21, 2
        // Predicated region
        $region61: #{de_conv_forward.9} parent=59 // pred_check
          %p780 = pneg %p186
        $region62: #{de_conv_forward.9} parent=59 // pred_check_branch
          %782 = sbr.rel (%p780) target = $region64
        $region63: #{de_conv_forward.9} parent=59 // pred_region
          %p783 = scmp.lt.s32.totalorder %s27, 1
          %s784 = scalar_select %p783, %s27, 1
          %s785 = smul.addr %s784, 2
          %s786 = smul.addr %s785, 8
          %s787 = scalar_lea.vmem %s6, %s786
        $region64: #{de_conv_forward.9} parent=59 // pred_fallthru
          _
        // Predicated region
        $region65: #{de_conv_forward.9} parent=59 // pred_check
          %p788 = pneg %p212
        $region66: #{de_conv_forward.9} parent=59 // pred_check_branch
          %790 = sbr.rel (%p788) target = $region68
        $region67: #{de_conv_forward.9} parent=59 // pred_region
          %s791 = sand.u32 %s197, 1
          %s792 = scalar_lea.sflag [#allocation4], %s791
          %s793 = sand.u32 %s197, 1
          %s794 = scalar_lea.vmem [#allocation3], %s793
          %795 = dma.done %s792, 16
        $region68: #{de_conv_forward.9} parent=59 // pred_fallthru
          _
        // Predicated region
        $region69: #{de_conv_forward.9} parent=59 // pred_check
          %p796 = pneg %p238
        $region70: #{de_conv_forward.9} parent=59 // pred_check_branch
          %798 = sbr.rel (%p796) target = $region72
        $region71: #{de_conv_forward.9} parent=59 // pred_region
          %s799 = sand.u32 %s223, 1
          %s800 = scalar_lea.sflag [#allocation6], %s799
          %s801 = sand.u32 %s223, 1
          %s802 = scalar_lea.vmem [#allocation5], %s801
          %803 = dma.done %s800, 16
        $region72: #{de_conv_forward.9} parent=59 // pred_fallthru
          _
      $region60: #{de_conv_forward.9} parent=5 // pred_fallthru
        _
    $region6: #{de_conv_forward.9} parent=1 // loop_footer
      %s25 = sadd.s32 1, %s21
    $region7: #{de_conv_forward.9} parent=1 // loop_footer_branch
      %20 = sbr.rel target = $region3
    $region8: #{de_conv_forward.9} parent=1 // loop_exit
      _
    %804 = vsyncpa [#allocation4], 1
    %s805 = scalar_lea.sflag [#allocation4], 1
    %806 = vsyncpa %s805, 1
    %807 = vsyncpa [#allocation6], 1
    %s808 = scalar_lea.sflag [#allocation6], 1
    %809 = vsyncpa %s808, 1

</llo_original>
